<compile_context>
chip_gen: v6e
topology: v6e:2x2x1
jax: 0.10.0
libtpu: 0.0.40
codegen_flags: <defaults>
</compile_context>

<pallas_src>
import jax
import jax.numpy as jnp
from jax.experimental import pallas as pl
from jax.experimental.pallas import tpu as pltpu


def _round_up(x, m):
    return (x + m - 1) // m * m


# ----------------------------------------------------------------------------
# Fused kernel
# ----------------------------------------------------------------------------
def _fused_lstm_kernel(x_ref, wih0_ref, whh0_ref, b0_ref,
                       wih1_ref, whh1_ref, b1_ref,
                       wout_ref, bout_ref,
                       out_ref,
                       g_ref, y_ref):
    """Fused 2-layer LSTM + linear head for one batch tile.

    x_ref   : (T*Bt, Dp)    time-major input rows, Bt batch rows per timestep
    wih{l}  : (Din_l, 4Hp)  bf16, gate k occupies lanes [k*Hp, k*Hp + H)
    whh{l}  : (Hp, 4Hp)     bf16
    b{l}    : (1, 4Hp)      f32, b_ih + b_hh (pad lanes zero)
    wout    : (Hp, O)       f32
    bout    : (1, O)        f32
    out_ref : (Bt, O)       f32 — linear head on layer-1's last hidden state
    g_ref   : (T*Bt, 4Hp)   f32 VMEM scratch: hoisted gate pre-activations
    y_ref   : (T*Bt, Hp)    f32 VMEM scratch: layer-0 output sequence
    """
    bt = out_ref.shape[0]
    hp = whh0_ref.shape[0]
    t_len = x_ref.shape[0] // bt
    f32, bf16 = jnp.float32, jnp.bfloat16
    unroll = True if t_len <= 16 else 4

    def recur(whh_ref, write_seq):
        whh = whh_ref[...]                                    # (Hp, 4Hp) bf16

        def step(t, carry):
            h, c = carry
            row = t * bt                                      # 8-sublane aligned
            gates = g_ref[pl.ds(row, bt), :] + jnp.dot(
                h.astype(bf16), whh, preferred_element_type=f32)
            # 128-lane aligned gate slices (PyTorch order i, f, g, o).
            i = jax.nn.sigmoid(gates[:, 0 * hp:1 * hp])
            f = jax.nn.sigmoid(gates[:, 1 * hp:2 * hp])
            g = jnp.tanh(gates[:, 2 * hp:3 * hp])
            o = jax.nn.sigmoid(gates[:, 3 * hp:4 * hp])
            c = f * c + i * g
            h = o * jnp.tanh(c)
            if write_seq:
                y_ref[pl.ds(row, bt), :] = h
            return (h, c)

        zeros = jnp.zeros((bt, hp), f32)                      # hidden=None init
        h_last, _ = jax.lax.fori_loop(0, t_len, step, (zeros, zeros),
                                      unroll=unroll)
        return h_last

    # Layer 0: hoisted input projection (one matmul for all timesteps).
    g_ref[...] = jnp.dot(x_ref[...].astype(bf16), wih0_ref[...],
                         preferred_element_type=f32) + b0_ref[...]
    recur(whh0_ref, write_seq=True)

    # Layer 1: hoisted input projection over the layer-0 output sequence.
    g_ref[...] = jnp.dot(y_ref[...].astype(bf16), wih1_ref[...],
                         preferred_element_type=f32) + b1_ref[...]
    h_last = recur(whh1_ref, write_seq=False)

    # Linear head on the final hidden state (fused — the standalone O=1 linear
    # kernel was launch-overhead dominated).
    out_ref[...] = jnp.dot(h_last, wout_ref[...],
                           preferred_element_type=f32) + bout_ref[...]


# ----------------------------------------------------------------------------
# Wrapper
# ----------------------------------------------------------------------------
@jax.jit
def lstm_forward(inp, kp):
    """Mirror of LSTM.forward: inp (B, T, cov_dim + 1) -> out (B * output_dim,)."""
    B, T, D = inp.shape
    dp = kp["wih0"].shape[0]
    hp = kp["whh0"].shape[0]
    gdim = 4 * hp
    odim = kp["w_out"].shape[1]

    bt = _round_up(min(max(B, 8), 128), 8)        # batch-tile rows (>=8, <=128)
    nb = pl.cdiv(B, bt)
    bpad = nb * bt

    # Relayout to (NB, T*Bt, Dp): time-major rows, Bt batch rows per timestep.
    # TODO(synk): for large inputs fold this relayout/transpose into the
    # kernel's hoisted input projection instead of a separate XLA pass.
    x = jnp.transpose(inp.astype(jnp.float32), (1, 0, 2))        # (T, B, D)
    x = jnp.pad(x, ((0, 0), (0, bpad - B), (0, dp - D)))          # (T, Bpad, Dp)
    x = x.reshape(T, nb, bt, dp).transpose(1, 0, 2, 3).reshape(nb, T * bt, dp)

    out_tiles = pl.pallas_call(
        _fused_lstm_kernel,
        out_shape=jax.ShapeDtypeStruct((nb, bt, odim), jnp.float32),
        grid=(nb,),
        in_specs=[
            pl.BlockSpec((None, T * bt, dp), lambda b: (b, 0, 0)),
            pl.BlockSpec((dp, gdim), lambda b: (0, 0)),
            pl.BlockSpec((hp, gdim), lambda b: (0, 0)),
            pl.BlockSpec((1, gdim), lambda b: (0, 0)),
            pl.BlockSpec((hp, gdim), lambda b: (0, 0)),
            pl.BlockSpec((hp, gdim), lambda b: (0, 0)),
            pl.BlockSpec((1, gdim), lambda b: (0, 0)),
            pl.BlockSpec((hp, odim), lambda b: (0, 0)),
            pl.BlockSpec((1, odim), lambda b: (0, 0)),
        ],
        out_specs=pl.BlockSpec((None, bt, odim), lambda b: (b, 0, 0)),
        scratch_shapes=[
            pltpu.VMEM((T * bt, gdim), jnp.float32),   # hoisted gate pre-acts
            pltpu.VMEM((T * bt, hp), jnp.float32),     # layer-0 output sequence
        ],
        compiler_params=pltpu.CompilerParams(
            # Only the batch-tile axis is a grid axis; the time recurrence is
            # entirely inside the kernel, so "parallel" is safe (and lets v7x
            # split batch tiles across its two TensorCores).
            # NOTE(synk): for large H, raise vmem_limit_bytes and single-buffer
            # the time-invariant weights (pipeline_mode=pl.Buffered(1)).
            dimension_semantics=("parallel",),
        ),
    )(x, kp["wih0"], kp["whh0"], kp["b0"],
      kp["wih1"], kp["whh1"], kp["b1"],
      kp["w_out"], kp["b_out"])

    return out_tiles.reshape(nb * bt, odim)[:B].reshape(-1)       # .view(-1)


# ----------------------------------------------------------------------------
# Parameter init (PyTorch layout) and packing into kernel layout
# ----------------------------------------------------------------------------
def init_params(key, cov_dim, hidden_dim, num_layers=2, output_dim=1):
    """Raw params in PyTorch nn.LSTM / nn.Linear layout with U(-1/sqrt(H), ...) init."""
    H = hidden_dim
    bound = 1.0 / float(H) ** 0.5
    layers = []
    for l in range(num_layers):
        in_dim = (cov_dim + 1) if l == 0 else H
        key, k1, k2, k3, k4 = jax.random.split(key, 5)
        layers.append({
            "w_ih": jax.random.uniform(k1, (4 * H, in_dim), jnp.float32, -bound, bound),
            "w_hh": jax.random.uniform(k2, (4 * H, H), jnp.float32, -bound, bound),
            "b_ih": jax.random.uniform(k3, (4 * H,), jnp.float32, -bound, bound),
            "b_hh": jax.random.uniform(k4, (4 * H,), jnp.float32, -bound, bound),
        })
    key, k5, k6 = jax.random.split(key, 3)
    return {
        "layers": layers,
        "w_out": jax.random.uniform(k5, (output_dim, H), jnp.float32, -bound, bound),
        "b_out": jax.random.uniform(k6, (output_dim,), jnp.float32, -bound, bound),
    }


def pack_params(raw, hidden_dim):
    """Pad/transpose raw params into the layouts the fused kernel consumes.
    Gate k occupies lanes [k*Hp, k*Hp + H); pad lanes / pad rows are zero."""
    layers = raw["layers"]
    assert len(layers) == 2, "kernel is specialized to module default num_layers=2"
    H = hidden_dim
    Hp = _round_up(H, 128)                  # lane-align each gate's column block

    def pack_gate_w(w, rows_p):
        four_h, din = w.shape
        assert four_h == 4 * H
        w4 = jnp.pad(w.reshape(4, H, din), ((0, 0), (0, Hp - H), (0, 0)))
        wt = jnp.transpose(w4, (2, 0, 1)).reshape(din, 4 * Hp)   # (Din, 4Hp)
        wt = jnp.pad(wt, ((0, rows_p - din), (0, 0)))
        return wt.astype(jnp.bfloat16)      # native MXU dtype (v6e/v7x/v5e)

    def pack_bias(b_ih, b_hh):
        b = jnp.pad((b_ih + b_hh).reshape(4, H), ((0, 0), (0, Hp - H)))
        return b.reshape(1, 4 * Hp).astype(jnp.float32)

    l0, l1 = layers
    d0 = l0["w_ih"].shape[1]
    d0p = _round_up(d0, 8)                  # sublane-align the input feature dim
    out_dim = raw["w_out"].shape[0]
    return {
        "wih0": pack_gate_w(l0["w_ih"], d0p),
        "whh0": pack_gate_w(l0["w_hh"], Hp),
        "b0": pack_bias(l0["b_ih"], l0["b_hh"]),
        "wih1": pack_gate_w(l1["w_ih"], Hp),
        "whh1": pack_gate_w(l1["w_hh"], Hp),
        "b1": pack_bias(l1["b_ih"], l1["b_hh"]),
        "w_out": jnp.pad(raw["w_out"].T, ((0, Hp - H), (0, 0))).astype(jnp.float32),
        "b_out": raw["b_out"].reshape(1, out_dim).astype(jnp.float32),
    }


# ----------------------------------------------------------------------------
# Pure-JAX reference mirroring the kernel's numerics (bf16 MXU operands,
# f32 accumulation, f32 gate math)
# ----------------------------------------------------------------------------
def lstm_forward_ref(inp, raw):
    bf16, f32 = jnp.bfloat16, jnp.float32
    x = jnp.transpose(inp, (1, 0, 2)).astype(f32)          # (T, B, D)
    B = x.shape[1]
    for layer in raw["layers"]:
        H = layer["w_hh"].shape[1]
        wih = layer["w_ih"].T.astype(bf16)                 # (Din, 4H)
        whh = layer["w_hh"].T.astype(bf16)                 # (H, 4H)
        bias = (layer["b_ih"] + layer["b_hh"]).astype(f32)
        gx = jnp.einsum("tbd,dg->tbg", x.astype(bf16), wih,
                        preferred_element_type=f32) + bias

        def step(carry, g_t, whh=whh):
            h, c = carry
            gates = g_t + jnp.dot(h.astype(bf16), whh, preferred_element_type=f32)
            i, f, g, o = jnp.split(gates, 4, axis=-1)
            c = jax.nn.sigmoid(f) * c + jax.nn.sigmoid(i) * jnp.tanh(g)
            h = jax.nn.sigmoid(o) * jnp.tanh(c)
            return (h, c), h

        init = (jnp.zeros((B, H), f32), jnp.zeros((B, H), f32))
        _, x = jax.lax.scan(step, init, gx)
    out = (jnp.dot(x[-1], raw["w_out"].T,
                   precision=jax.lax.Precision.HIGHEST) + raw["b_out"])
    return out.reshape(-1)


if __name__ == "__main__":
    # Shapes consistent with the module: batch=2, seq=8, cov_dim=4,
    # hidden_dim=32, num_layers=2, output_dim=1.
    B, T, COV, H = 2, 8, 4, 32
    key = jax.random.PRNGKey(0)
    k_in, k_p = jax.random.split(key)
    inp = jax.random.normal(k_in, (B, T, COV + 1), jnp.float32)

    raw = init_params(k_p, COV, H, num_layers=2, output_dim=1)
    kp = pack_params(raw, H)

    out = lstm_forward(inp, kp)
    out = jax.block_until_ready(out)

    ref = lstm_forward_ref(inp, raw)
    assert out.shape == (B,), out.shape
    # bf16 MXU operands mean kernel vs. (identically quantized) reference can
    # differ by a few bf16 ulps propagated through the recurrence.
    assert jnp.allclose(out, ref, atol=5e-3, rtol=5e-3), (out, ref)
    print("KERNEL_OK")
</pallas_src>

<mosaic_0001>
module attributes {stable_mosaic.version = 11 : i64} {
  func.func @_fused_lstm_kernel(%arg0: i32, %arg1: memref<1x64x8xf32, #tpu.memory_space<vmem>>, %arg2: memref<8x512xbf16, #tpu.memory_space<vmem>>, %arg3: memref<128x512xbf16, #tpu.memory_space<vmem>>, %arg4: memref<1x512xf32, #tpu.memory_space<vmem>>, %arg5: memref<128x512xbf16, #tpu.memory_space<vmem>>, %arg6: memref<128x512xbf16, #tpu.memory_space<vmem>>, %arg7: memref<1x512xf32, #tpu.memory_space<vmem>>, %arg8: memref<128x1xf32, #tpu.memory_space<vmem>>, %arg9: memref<1x1xf32, #tpu.memory_space<vmem>>, %arg10: memref<1x8x1xf32, #tpu.memory_space<vmem>>, %arg11: memref<64x512xf32, #tpu.memory_space<vmem>>, %arg12: memref<64x128xf32, #tpu.memory_space<vmem>>) attributes {dimension_semantics = [#tpu.dimension_semantics<parallel>], iteration_bounds = array<i64: 1>, scalar_prefetch = 0 : i64, scratch_operands = 2 : i64, tpu.core_type = #tpu.core_type<tc>, window_params = [{transform_indices = @transform_0, window_bounds = array<i64: 1, 64, 8>}, {pipeline_mode = #tpu.pipeline_mode<synchronous>, transform_indices = @transform_1, window_bounds = array<i64: 8, 512>}, {pipeline_mode = #tpu.pipeline_mode<synchronous>, transform_indices = @transform_2, window_bounds = array<i64: 128, 512>}, {pipeline_mode = #tpu.pipeline_mode<synchronous>, transform_indices = @transform_3, window_bounds = array<i64: 1, 512>}, {pipeline_mode = #tpu.pipeline_mode<synchronous>, transform_indices = @transform_4, window_bounds = array<i64: 128, 512>}, {pipeline_mode = #tpu.pipeline_mode<synchronous>, transform_indices = @transform_5, window_bounds = array<i64: 128, 512>}, {pipeline_mode = #tpu.pipeline_mode<synchronous>, transform_indices = @transform_6, window_bounds = array<i64: 1, 512>}, {pipeline_mode = #tpu.pipeline_mode<synchronous>, transform_indices = @transform_7, window_bounds = array<i64: 128, 1>}, {pipeline_mode = #tpu.pipeline_mode<synchronous>, transform_indices = @transform_8, window_bounds = array<i64: 1, 1>}, {transform_indices = @transform_9, window_bounds = array<i64: 1, 8, 1>}]} {
    %c0 = arith.constant 0 : index
    %c0_0 = arith.constant 0 : index
    %c0_1 = arith.constant 0 : index
    %0 = vector.load %arg1[%c0, %c0_0, %c0_1] : memref<1x64x8xf32, #tpu.memory_space<vmem>>, vector<1x64x8xf32>
    %1 = vector.shape_cast %0 : vector<1x64x8xf32> to vector<64x8xf32>
    %2 = arith.truncf %1 : vector<64x8xf32> to vector<64x8xbf16>
    %c0_2 = arith.constant 0 : index
    %c0_3 = arith.constant 0 : index
    %3 = vector.load %arg2[%c0_2, %c0_3] : memref<8x512xbf16, #tpu.memory_space<vmem>>, vector<8x512xbf16>
    %cst = arith.constant dense<0.000000e+00> : vector<64x512xf32>
    %4 = tpu.matmul %2, %3, %cst {dimension_numbers = #tpu.dot_dimension_numbers<[1], [0], [0], [1], [0, 0, 1, 1], [], []>} : vector<64x8xbf16>, vector<8x512xbf16>, vector<64x512xf32> -> vector<64x512xf32>
    %c0_4 = arith.constant 0 : index
    %c0_5 = arith.constant 0 : index
    %5 = vector.load %arg4[%c0_4, %c0_5] : memref<1x512xf32, #tpu.memory_space<vmem>>, vector<1x512xf32>
    %6 = vector.broadcast %5 : vector<1x512xf32> to vector<64x512xf32>
    %7 = arith.addf %4, %6 : vector<64x512xf32>
    %c0_6 = arith.constant 0 : index
    %c0_7 = arith.constant 0 : index
    %8 = vector.load %arg11[%c0_6, %c0_7] : memref<64x512xf32, #tpu.memory_space<vmem>>, vector<64x512xf32>
    tpu.vector_store %arg11[%c0_6, %c0_7], %7 {strides = array<i32>} : memref<64x512xf32, #tpu.memory_space<vmem>>, vector<64x512xf32>,
    %c0_8 = arith.constant 0 : index
    %c0_9 = arith.constant 0 : index
    %9 = vector.load %arg3[%c0_8, %c0_9] : memref<128x512xbf16, #tpu.memory_space<vmem>>, vector<128x512xbf16>
    %cst_10 = arith.constant 0.000000e+00 : f32
    %10 = vector.broadcast %cst_10 : f32 to vector<8x128xf32>
    %c0_i32 = arith.constant 0 : i32
    %c8_i32 = arith.constant 8 : i32
    %11 = arith.muli %c0_i32, %c8_i32 : i32
    %12 = arith.index_cast %11 : i32 to index
    %c0_11 = arith.constant 0 : index
    %13 = vector.load %arg11[%12, %c0_11] : memref<64x512xf32, #tpu.memory_space<vmem>>, vector<8x512xf32>
    %14 = arith.truncf %10 : vector<8x128xf32> to vector<8x128xbf16>
    %cst_12 = arith.constant dense<0.000000e+00> : vector<8x512xf32>
    %15 = tpu.matmul %14, %9, %cst_12 {dimension_numbers = #tpu.dot_dimension_numbers<[1], [0], [0], [1], [0, 0, 1, 1], [], []>} : vector<8x128xbf16>, vector<128x512xbf16>, vector<8x512xf32> -> vector<8x512xf32>
    %16 = arith.addf %13, %15 : vector<8x512xf32>
    %17 = vector.extract_strided_slice %16 {offsets = [0, 0], sizes = [8, 128], strides = [1, 1]} : vector<8x512xf32> to vector<8x128xf32>
    %18 = arith.negf %17 : vector<8x128xf32>
    %19 = math.exp %18 : vector<8x128xf32>
    %cst_13 = arith.constant 1.000000e+00 : f32
    %20 = vector.broadcast %cst_13 : f32 to vector<8x128xf32>
    %21 = arith.addf %20, %19 : vector<8x128xf32>
    %22 = arith.divf %20, %21 : vector<8x128xf32>
    %23 = vector.extract_strided_slice %16 {offsets = [0, 128], sizes = [8, 128], strides = [1, 1]} : vector<8x512xf32> to vector<8x128xf32>
    %24 = arith.negf %23 : vector<8x128xf32>
    %25 = math.exp %24 : vector<8x128xf32>
    %cst_14 = arith.constant 1.000000e+00 : f32
    %26 = vector.broadcast %cst_14 : f32 to vector<8x128xf32>
    %27 = arith.addf %26, %25 : vector<8x128xf32>
    %28 = arith.divf %26, %27 : vector<8x128xf32>
    %29 = vector.extract_strided_slice %16 {offsets = [0, 256], sizes = [8, 128], strides = [1, 1]} : vector<8x512xf32> to vector<8x128xf32>
    %30 = math.tanh %29 : vector<8x128xf32>
    %31 = vector.extract_strided_slice %16 {offsets = [0, 384], sizes = [8, 128], strides = [1, 1]} : vector<8x512xf32> to vector<8x128xf32>
    %32 = arith.negf %31 : vector<8x128xf32>
    %33 = math.exp %32 : vector<8x128xf32>
    %cst_15 = arith.constant 1.000000e+00 : f32
    %34 = vector.broadcast %cst_15 : f32 to vector<8x128xf32>
    %35 = arith.addf %34, %33 : vector<8x128xf32>
    %36 = arith.divf %34, %35 : vector<8x128xf32>
    %37 = arith.mulf %28, %10 : vector<8x128xf32>
    %38 = arith.mulf %22, %30 : vector<8x128xf32>
    %39 = arith.addf %37, %38 : vector<8x128xf32>
    %40 = math.tanh %39 : vector<8x128xf32>
    %41 = arith.mulf %36, %40 : vector<8x128xf32>
    %42 = arith.index_cast %11 : i32 to index
    %c0_16 = arith.constant 0 : index
    %43 = vector.load %arg12[%42, %c0_16] : memref<64x128xf32, #tpu.memory_space<vmem>>, vector<8x128xf32>
    tpu.vector_store %arg12[%42, %c0_16], %41 {strides = array<i32>} : memref<64x128xf32, #tpu.memory_space<vmem>>, vector<8x128xf32>,
    %c1_i32 = arith.constant 1 : i32
    %c8_i32_17 = arith.constant 8 : i32
    %44 = arith.muli %c1_i32, %c8_i32_17 : i32
    %45 = arith.index_cast %44 : i32 to index
    %c0_18 = arith.constant 0 : index
    %46 = vector.load %arg11[%45, %c0_18] : memref<64x512xf32, #tpu.memory_space<vmem>>, vector<8x512xf32>
    %47 = arith.truncf %41 : vector<8x128xf32> to vector<8x128xbf16>
    %cst_19 = arith.constant dense<0.000000e+00> : vector<8x512xf32>
    %48 = tpu.matmul %47, %9, %cst_19 {dimension_numbers = #tpu.dot_dimension_numbers<[1], [0], [0], [1], [0, 0, 1, 1], [], []>} : vector<8x128xbf16>, vector<128x512xbf16>, vector<8x512xf32> -> vector<8x512xf32>
    %49 = arith.addf %46, %48 : vector<8x512xf32>
    %50 = vector.extract_strided_slice %49 {offsets = [0, 0], sizes = [8, 128], strides = [1, 1]} : vector<8x512xf32> to vector<8x128xf32>
    %51 = arith.negf %50 : vector<8x128xf32>
    %52 = math.exp %51 : vector<8x128xf32>
    %cst_20 = arith.constant 1.000000e+00 : f32
    %53 = vector.broadcast %cst_20 : f32 to vector<8x128xf32>
    %54 = arith.addf %53, %52 : vector<8x128xf32>
    %55 = arith.divf %53, %54 : vector<8x128xf32>
    %56 = vector.extract_strided_slice %49 {offsets = [0, 128], sizes = [8, 128], strides = [1, 1]} : vector<8x512xf32> to vector<8x128xf32>
    %57 = arith.negf %56 : vector<8x128xf32>
    %58 = math.exp %57 : vector<8x128xf32>
    %cst_21 = arith.constant 1.000000e+00 : f32
    %59 = vector.broadcast %cst_21 : f32 to vector<8x128xf32>
    %60 = arith.addf %59, %58 : vector<8x128xf32>
    %61 = arith.divf %59, %60 : vector<8x128xf32>
    %62 = vector.extract_strided_slice %49 {offsets = [0, 256], sizes = [8, 128], strides = [1, 1]} : vector<8x512xf32> to vector<8x128xf32>
    %63 = math.tanh %62 : vector<8x128xf32>
    %64 = vector.extract_strided_slice %49 {offsets = [0, 384], sizes = [8, 128], strides = [1, 1]} : vector<8x512xf32> to vector<8x128xf32>
    %65 = arith.negf %64 : vector<8x128xf32>
    %66 = math.exp %65 : vector<8x128xf32>
    %cst_22 = arith.constant 1.000000e+00 : f32
    %67 = vector.broadcast %cst_22 : f32 to vector<8x128xf32>
    %68 = arith.addf %67, %66 : vector<8x128xf32>
    %69 = arith.divf %67, %68 : vector<8x128xf32>
    %70 = arith.mulf %61, %39 : vector<8x128xf32>
    %71 = arith.mulf %55, %63 : vector<8x128xf32>
    %72 = arith.addf %70, %71 : vector<8x128xf32>
    %73 = math.tanh %72 : vector<8x128xf32>
    %74 = arith.mulf %69, %73 : vector<8x128xf32>
    %75 = arith.index_cast %44 : i32 to index
    %c0_23 = arith.constant 0 : index
    %76 = vector.load %arg12[%75, %c0_23] : memref<64x128xf32, #tpu.memory_space<vmem>>, vector<8x128xf32>
    tpu.vector_store %arg12[%75, %c0_23], %74 {strides = array<i32>} : memref<64x128xf32, #tpu.memory_space<vmem>>, vector<8x128xf32>,
    %c2_i32 = arith.constant 2 : i32
    %c8_i32_24 = arith.constant 8 : i32
    %77 = arith.muli %c2_i32, %c8_i32_24 : i32
    %78 = arith.index_cast %77 : i32 to index
    %c0_25 = arith.constant 0 : index
    %79 = vector.load %arg11[%78, %c0_25] : memref<64x512xf32, #tpu.memory_space<vmem>>, vector<8x512xf32>
    %80 = arith.truncf %74 : vector<8x128xf32> to vector<8x128xbf16>
    %cst_26 = arith.constant dense<0.000000e+00> : vector<8x512xf32>
    %81 = tpu.matmul %80, %9, %cst_26 {dimension_numbers = #tpu.dot_dimension_numbers<[1], [0], [0], [1], [0, 0, 1, 1], [], []>} : vector<8x128xbf16>, vector<128x512xbf16>, vector<8x512xf32> -> vector<8x512xf32>
    %82 = arith.addf %79, %81 : vector<8x512xf32>
    %83 = vector.extract_strided_slice %82 {offsets = [0, 0], sizes = [8, 128], strides = [1, 1]} : vector<8x512xf32> to vector<8x128xf32>
    %84 = arith.negf %83 : vector<8x128xf32>
    %85 = math.exp %84 : vector<8x128xf32>
    %cst_27 = arith.constant 1.000000e+00 : f32
    %86 = vector.broadcast %cst_27 : f32 to vector<8x128xf32>
    %87 = arith.addf %86, %85 : vector<8x128xf32>
    %88 = arith.divf %86, %87 : vector<8x128xf32>
    %89 = vector.extract_strided_slice %82 {offsets = [0, 128], sizes = [8, 128], strides = [1, 1]} : vector<8x512xf32> to vector<8x128xf32>
    %90 = arith.negf %89 : vector<8x128xf32>
    %91 = math.exp %90 : vector<8x128xf32>
    %cst_28 = arith.constant 1.000000e+00 : f32
    %92 = vector.broadcast %cst_28 : f32 to vector<8x128xf32>
    %93 = arith.addf %92, %91 : vector<8x128xf32>
    %94 = arith.divf %92, %93 : vector<8x128xf32>
    %95 = vector.extract_strided_slice %82 {offsets = [0, 256], sizes = [8, 128], strides = [1, 1]} : vector<8x512xf32> to vector<8x128xf32>
    %96 = math.tanh %95 : vector<8x128xf32>
    %97 = vector.extract_strided_slice %82 {offsets = [0, 384], sizes = [8, 128], strides = [1, 1]} : vector<8x512xf32> to vector<8x128xf32>
    %98 = arith.negf %97 : vector<8x128xf32>
    %99 = math.exp %98 : vector<8x128xf32>
    %cst_29 = arith.constant 1.000000e+00 : f32
    %100 = vector.broadcast %cst_29 : f32 to vector<8x128xf32>
    %101 = arith.addf %100, %99 : vector<8x128xf32>
    %102 = arith.divf %100, %101 : vector<8x128xf32>
    %103 = arith.mulf %94, %72 : vector<8x128xf32>
    %104 = arith.mulf %88, %96 : vector<8x128xf32>
    %105 = arith.addf %103, %104 : vector<8x128xf32>
    %106 = math.tanh %105 : vector<8x128xf32>
    %107 = arith.mulf %102, %106 : vector<8x128xf32>
    %108 = arith.index_cast %77 : i32 to index
    %c0_30 = arith.constant 0 : index
    %109 = vector.load %arg12[%108, %c0_30] : memref<64x128xf32, #tpu.memory_space<vmem>>, vector<8x128xf32>
    tpu.vector_store %arg12[%108, %c0_30], %107 {strides = array<i32>} : memref<64x128xf32, #tpu.memory_space<vmem>>, vector<8x128xf32>,
    %c3_i32 = arith.constant 3 : i32
    %c8_i32_31 = arith.constant 8 : i32
    %110 = arith.muli %c3_i32, %c8_i32_31 : i32
    %111 = arith.index_cast %110 : i32 to index
    %c0_32 = arith.constant 0 : index
    %112 = vector.load %arg11[%111, %c0_32] : memref<64x512xf32, #tpu.memory_space<vmem>>, vector<8x512xf32>
    %113 = arith.truncf %107 : vector<8x128xf32> to vector<8x128xbf16>
    %cst_33 = arith.constant dense<0.000000e+00> : vector<8x512xf32>
    %114 = tpu.matmul %113, %9, %cst_33 {dimension_numbers = #tpu.dot_dimension_numbers<[1], [0], [0], [1], [0, 0, 1, 1], [], []>} : vector<8x128xbf16>, vector<128x512xbf16>, vector<8x512xf32> -> vector<8x512xf32>
    %115 = arith.addf %112, %114 : vector<8x512xf32>
    %116 = vector.extract_strided_slice %115 {offsets = [0, 0], sizes = [8, 128], strides = [1, 1]} : vector<8x512xf32> to vector<8x128xf32>
    %117 = arith.negf %116 : vector<8x128xf32>
    %118 = math.exp %117 : vector<8x128xf32>
    %cst_34 = arith.constant 1.000000e+00 : f32
    %119 = vector.broadcast %cst_34 : f32 to vector<8x128xf32>
    %120 = arith.addf %119, %118 : vector<8x128xf32>
    %121 = arith.divf %119, %120 : vector<8x128xf32>
    %122 = vector.extract_strided_slice %115 {offsets = [0, 128], sizes = [8, 128], strides = [1, 1]} : vector<8x512xf32> to vector<8x128xf32>
    %123 = arith.negf %122 : vector<8x128xf32>
    %124 = math.exp %123 : vector<8x128xf32>
    %cst_35 = arith.constant 1.000000e+00 : f32
    %125 = vector.broadcast %cst_35 : f32 to vector<8x128xf32>
    %126 = arith.addf %125, %124 : vector<8x128xf32>
    %127 = arith.divf %125, %126 : vector<8x128xf32>
    %128 = vector.extract_strided_slice %115 {offsets = [0, 256], sizes = [8, 128], strides = [1, 1]} : vector<8x512xf32> to vector<8x128xf32>
    %129 = math.tanh %128 : vector<8x128xf32>
    %130 = vector.extract_strided_slice %115 {offsets = [0, 384], sizes = [8, 128], strides = [1, 1]} : vector<8x512xf32> to vector<8x128xf32>
    %131 = arith.negf %130 : vector<8x128xf32>
    %132 = math.exp %131 : vector<8x128xf32>
    %cst_36 = arith.constant 1.000000e+00 : f32
    %133 = vector.broadcast %cst_36 : f32 to vector<8x128xf32>
    %134 = arith.addf %133, %132 : vector<8x128xf32>
    %135 = arith.divf %133, %134 : vector<8x128xf32>
    %136 = arith.mulf %127, %105 : vector<8x128xf32>
    %137 = arith.mulf %121, %129 : vector<8x128xf32>
    %138 = arith.addf %136, %137 : vector<8x128xf32>
    %139 = math.tanh %138 : vector<8x128xf32>
    %140 = arith.mulf %135, %139 : vector<8x128xf32>
    %141 = arith.index_cast %110 : i32 to index
    %c0_37 = arith.constant 0 : index
    %142 = vector.load %arg12[%141, %c0_37] : memref<64x128xf32, #tpu.memory_space<vmem>>, vector<8x128xf32>
    tpu.vector_store %arg12[%141, %c0_37], %140 {strides = array<i32>} : memref<64x128xf32, #tpu.memory_space<vmem>>, vector<8x128xf32>,
    %c4_i32 = arith.constant 4 : i32
    %c8_i32_38 = arith.constant 8 : i32
    %143 = arith.muli %c4_i32, %c8_i32_38 : i32
    %144 = arith.index_cast %143 : i32 to index
    %c0_39 = arith.constant 0 : index
    %145 = vector.load %arg11[%144, %c0_39] : memref<64x512xf32, #tpu.memory_space<vmem>>, vector<8x512xf32>
    %146 = arith.truncf %140 : vector<8x128xf32> to vector<8x128xbf16>
    %cst_40 = arith.constant dense<0.000000e+00> : vector<8x512xf32>
    %147 = tpu.matmul %146, %9, %cst_40 {dimension_numbers = #tpu.dot_dimension_numbers<[1], [0], [0], [1], [0, 0, 1, 1], [], []>} : vector<8x128xbf16>, vector<128x512xbf16>, vector<8x512xf32> -> vector<8x512xf32>
    %148 = arith.addf %145, %147 : vector<8x512xf32>
    %149 = vector.extract_strided_slice %148 {offsets = [0, 0], sizes = [8, 128], strides = [1, 1]} : vector<8x512xf32> to vector<8x128xf32>
    %150 = arith.negf %149 : vector<8x128xf32>
    %151 = math.exp %150 : vector<8x128xf32>
    %cst_41 = arith.constant 1.000000e+00 : f32
    %152 = vector.broadcast %cst_41 : f32 to vector<8x128xf32>
    %153 = arith.addf %152, %151 : vector<8x128xf32>
    %154 = arith.divf %152, %153 : vector<8x128xf32>
    %155 = vector.extract_strided_slice %148 {offsets = [0, 128], sizes = [8, 128], strides = [1, 1]} : vector<8x512xf32> to vector<8x128xf32>
    %156 = arith.negf %155 : vector<8x128xf32>
    %157 = math.exp %156 : vector<8x128xf32>
    %cst_42 = arith.constant 1.000000e+00 : f32
    %158 = vector.broadcast %cst_42 : f32 to vector<8x128xf32>
    %159 = arith.addf %158, %157 : vector<8x128xf32>
    %160 = arith.divf %158, %159 : vector<8x128xf32>
    %161 = vector.extract_strided_slice %148 {offsets = [0, 256], sizes = [8, 128], strides = [1, 1]} : vector<8x512xf32> to vector<8x128xf32>
    %162 = math.tanh %161 : vector<8x128xf32>
    %163 = vector.extract_strided_slice %148 {offsets = [0, 384], sizes = [8, 128], strides = [1, 1]} : vector<8x512xf32> to vector<8x128xf32>
    %164 = arith.negf %163 : vector<8x128xf32>
    %165 = math.exp %164 : vector<8x128xf32>
    %cst_43 = arith.constant 1.000000e+00 : f32
    %166 = vector.broadcast %cst_43 : f32 to vector<8x128xf32>
    %167 = arith.addf %166, %165 : vector<8x128xf32>
    %168 = arith.divf %166, %167 : vector<8x128xf32>
    %169 = arith.mulf %160, %138 : vector<8x128xf32>
    %170 = arith.mulf %154, %162 : vector<8x128xf32>
    %171 = arith.addf %169, %170 : vector<8x128xf32>
    %172 = math.tanh %171 : vector<8x128xf32>
    %173 = arith.mulf %168, %172 : vector<8x128xf32>
    %174 = arith.index_cast %143 : i32 to index
    %c0_44 = arith.constant 0 : index
    %175 = vector.load %arg12[%174, %c0_44] : memref<64x128xf32, #tpu.memory_space<vmem>>, vector<8x128xf32>
    tpu.vector_store %arg12[%174, %c0_44], %173 {strides = array<i32>} : memref<64x128xf32, #tpu.memory_space<vmem>>, vector<8x128xf32>,
    %c5_i32 = arith.constant 5 : i32
    %c8_i32_45 = arith.constant 8 : i32
    %176 = arith.muli %c5_i32, %c8_i32_45 : i32
    %177 = arith.index_cast %176 : i32 to index
    %c0_46 = arith.constant 0 : index
    %178 = vector.load %arg11[%177, %c0_46] : memref<64x512xf32, #tpu.memory_space<vmem>>, vector<8x512xf32>
    %179 = arith.truncf %173 : vector<8x128xf32> to vector<8x128xbf16>
    %cst_47 = arith.constant dense<0.000000e+00> : vector<8x512xf32>
    %180 = tpu.matmul %179, %9, %cst_47 {dimension_numbers = #tpu.dot_dimension_numbers<[1], [0], [0], [1], [0, 0, 1, 1], [], []>} : vector<8x128xbf16>, vector<128x512xbf16>, vector<8x512xf32> -> vector<8x512xf32>
    %181 = arith.addf %178, %180 : vector<8x512xf32>
    %182 = vector.extract_strided_slice %181 {offsets = [0, 0], sizes = [8, 128], strides = [1, 1]} : vector<8x512xf32> to vector<8x128xf32>
    %183 = arith.negf %182 : vector<8x128xf32>
    %184 = math.exp %183 : vector<8x128xf32>
    %cst_48 = arith.constant 1.000000e+00 : f32
    %185 = vector.broadcast %cst_48 : f32 to vector<8x128xf32>
    %186 = arith.addf %185, %184 : vector<8x128xf32>
    %187 = arith.divf %185, %186 : vector<8x128xf32>
    %188 = vector.extract_strided_slice %181 {offsets = [0, 128], sizes = [8, 128], strides = [1, 1]} : vector<8x512xf32> to vector<8x128xf32>
    %189 = arith.negf %188 : vector<8x128xf32>
    %190 = math.exp %189 : vector<8x128xf32>
    %cst_49 = arith.constant 1.000000e+00 : f32
    %191 = vector.broadcast %cst_49 : f32 to vector<8x128xf32>
    %192 = arith.addf %191, %190 : vector<8x128xf32>
    %193 = arith.divf %191, %192 : vector<8x128xf32>
    %194 = vector.extract_strided_slice %181 {offsets = [0, 256], sizes = [8, 128], strides = [1, 1]} : vector<8x512xf32> to vector<8x128xf32>
    %195 = math.tanh %194 : vector<8x128xf32>
    %196 = vector.extract_strided_slice %181 {offsets = [0, 384], sizes = [8, 128], strides = [1, 1]} : vector<8x512xf32> to vector<8x128xf32>
    %197 = arith.negf %196 : vector<8x128xf32>
    %198 = math.exp %197 : vector<8x128xf32>
    %cst_50 = arith.constant 1.000000e+00 : f32
    %199 = vector.broadcast %cst_50 : f32 to vector<8x128xf32>
    %200 = arith.addf %199, %198 : vector<8x128xf32>
    %201 = arith.divf %199, %200 : vector<8x128xf32>
    %202 = arith.mulf %193, %171 : vector<8x128xf32>
    %203 = arith.mulf %187, %195 : vector<8x128xf32>
    %204 = arith.addf %202, %203 : vector<8x128xf32>
    %205 = math.tanh %204 : vector<8x128xf32>
    %206 = arith.mulf %201, %205 : vector<8x128xf32>
    %207 = arith.index_cast %176 : i32 to index
    %c0_51 = arith.constant 0 : index
    %208 = vector.load %arg12[%207, %c0_51] : memref<64x128xf32, #tpu.memory_space<vmem>>, vector<8x128xf32>
    tpu.vector_store %arg12[%207, %c0_51], %206 {strides = array<i32>} : memref<64x128xf32, #tpu.memory_space<vmem>>, vector<8x128xf32>,
    %c6_i32 = arith.constant 6 : i32
    %c8_i32_52 = arith.constant 8 : i32
    %209 = arith.muli %c6_i32, %c8_i32_52 : i32
    %210 = arith.index_cast %209 : i32 to index
    %c0_53 = arith.constant 0 : index
    %211 = vector.load %arg11[%210, %c0_53] : memref<64x512xf32, #tpu.memory_space<vmem>>, vector<8x512xf32>
    %212 = arith.truncf %206 : vector<8x128xf32> to vector<8x128xbf16>
    %cst_54 = arith.constant dense<0.000000e+00> : vector<8x512xf32>
    %213 = tpu.matmul %212, %9, %cst_54 {dimension_numbers = #tpu.dot_dimension_numbers<[1], [0], [0], [1], [0, 0, 1, 1], [], []>} : vector<8x128xbf16>, vector<128x512xbf16>, vector<8x512xf32> -> vector<8x512xf32>
    %214 = arith.addf %211, %213 : vector<8x512xf32>
    %215 = vector.extract_strided_slice %214 {offsets = [0, 0], sizes = [8, 128], strides = [1, 1]} : vector<8x512xf32> to vector<8x128xf32>
    %216 = arith.negf %215 : vector<8x128xf32>
    %217 = math.exp %216 : vector<8x128xf32>
    %cst_55 = arith.constant 1.000000e+00 : f32
    %218 = vector.broadcast %cst_55 : f32 to vector<8x128xf32>
    %219 = arith.addf %218, %217 : vector<8x128xf32>
    %220 = arith.divf %218, %219 : vector<8x128xf32>
    %221 = vector.extract_strided_slice %214 {offsets = [0, 128], sizes = [8, 128], strides = [1, 1]} : vector<8x512xf32> to vector<8x128xf32>
    %222 = arith.negf %221 : vector<8x128xf32>
    %223 = math.exp %222 : vector<8x128xf32>
    %cst_56 = arith.constant 1.000000e+00 : f32
    %224 = vector.broadcast %cst_56 : f32 to vector<8x128xf32>
    %225 = arith.addf %224, %223 : vector<8x128xf32>
    %226 = arith.divf %224, %225 : vector<8x128xf32>
    %227 = vector.extract_strided_slice %214 {offsets = [0, 256], sizes = [8, 128], strides = [1, 1]} : vector<8x512xf32> to vector<8x128xf32>
    %228 = math.tanh %227 : vector<8x128xf32>
    %229 = vector.extract_strided_slice %214 {offsets = [0, 384], sizes = [8, 128], strides = [1, 1]} : vector<8x512xf32> to vector<8x128xf32>
    %230 = arith.negf %229 : vector<8x128xf32>
    %231 = math.exp %230 : vector<8x128xf32>
    %cst_57 = arith.constant 1.000000e+00 : f32
    %232 = vector.broadcast %cst_57 : f32 to vector<8x128xf32>
    %233 = arith.addf %232, %231 : vector<8x128xf32>
    %234 = arith.divf %232, %233 : vector<8x128xf32>
    %235 = arith.mulf %226, %204 : vector<8x128xf32>
    %236 = arith.mulf %220, %228 : vector<8x128xf32>
    %237 = arith.addf %235, %236 : vector<8x128xf32>
    %238 = math.tanh %237 : vector<8x128xf32>
    %239 = arith.mulf %234, %238 : vector<8x128xf32>
    %240 = arith.index_cast %209 : i32 to index
    %c0_58 = arith.constant 0 : index
    %241 = vector.load %arg12[%240, %c0_58] : memref<64x128xf32, #tpu.memory_space<vmem>>, vector<8x128xf32>
    tpu.vector_store %arg12[%240, %c0_58], %239 {strides = array<i32>} : memref<64x128xf32, #tpu.memory_space<vmem>>, vector<8x128xf32>,
    %c7_i32 = arith.constant 7 : i32
    %c8_i32_59 = arith.constant 8 : i32
    %242 = arith.muli %c7_i32, %c8_i32_59 : i32
    %243 = arith.index_cast %242 : i32 to index
    %c0_60 = arith.constant 0 : index
    %244 = vector.load %arg11[%243, %c0_60] : memref<64x512xf32, #tpu.memory_space<vmem>>, vector<8x512xf32>
    %245 = arith.truncf %239 : vector<8x128xf32> to vector<8x128xbf16>
    %cst_61 = arith.constant dense<0.000000e+00> : vector<8x512xf32>
    %246 = tpu.matmul %245, %9, %cst_61 {dimension_numbers = #tpu.dot_dimension_numbers<[1], [0], [0], [1], [0, 0, 1, 1], [], []>} : vector<8x128xbf16>, vector<128x512xbf16>, vector<8x512xf32> -> vector<8x512xf32>
    %247 = arith.addf %244, %246 : vector<8x512xf32>
    %248 = vector.extract_strided_slice %247 {offsets = [0, 0], sizes = [8, 128], strides = [1, 1]} : vector<8x512xf32> to vector<8x128xf32>
    %249 = arith.negf %248 : vector<8x128xf32>
    %250 = math.exp %249 : vector<8x128xf32>
    %cst_62 = arith.constant 1.000000e+00 : f32
    %251 = vector.broadcast %cst_62 : f32 to vector<8x128xf32>
    %252 = arith.addf %251, %250 : vector<8x128xf32>
    %253 = arith.divf %251, %252 : vector<8x128xf32>
    %254 = vector.extract_strided_slice %247 {offsets = [0, 128], sizes = [8, 128], strides = [1, 1]} : vector<8x512xf32> to vector<8x128xf32>
    %255 = arith.negf %254 : vector<8x128xf32>
    %256 = math.exp %255 : vector<8x128xf32>
    %cst_63 = arith.constant 1.000000e+00 : f32
    %257 = vector.broadcast %cst_63 : f32 to vector<8x128xf32>
    %258 = arith.addf %257, %256 : vector<8x128xf32>
    %259 = arith.divf %257, %258 : vector<8x128xf32>
    %260 = vector.extract_strided_slice %247 {offsets = [0, 256], sizes = [8, 128], strides = [1, 1]} : vector<8x512xf32> to vector<8x128xf32>
    %261 = math.tanh %260 : vector<8x128xf32>
    %262 = vector.extract_strided_slice %247 {offsets = [0, 384], sizes = [8, 128], strides = [1, 1]} : vector<8x512xf32> to vector<8x128xf32>
    %263 = arith.negf %262 : vector<8x128xf32>
    %264 = math.exp %263 : vector<8x128xf32>
    %cst_64 = arith.constant 1.000000e+00 : f32
    %265 = vector.broadcast %cst_64 : f32 to vector<8x128xf32>
    %266 = arith.addf %265, %264 : vector<8x128xf32>
    %267 = arith.divf %265, %266 : vector<8x128xf32>
    %268 = arith.mulf %259, %237 : vector<8x128xf32>
    %269 = arith.mulf %253, %261 : vector<8x128xf32>
    %270 = arith.addf %268, %269 : vector<8x128xf32>
    %271 = math.tanh %270 : vector<8x128xf32>
    %272 = arith.mulf %267, %271 : vector<8x128xf32>
    %273 = arith.index_cast %242 : i32 to index
    %c0_65 = arith.constant 0 : index
    %274 = vector.load %arg12[%273, %c0_65] : memref<64x128xf32, #tpu.memory_space<vmem>>, vector<8x128xf32>
    tpu.vector_store %arg12[%273, %c0_65], %272 {strides = array<i32>} : memref<64x128xf32, #tpu.memory_space<vmem>>, vector<8x128xf32>,
    %c8_i32_66 = arith.constant 8 : i32
    %c0_67 = arith.constant 0 : index
    %c0_68 = arith.constant 0 : index
    %275 = vector.load %arg12[%c0_67, %c0_68] : memref<64x128xf32, #tpu.memory_space<vmem>>, vector<64x128xf32>
    %276 = arith.truncf %275 : vector<64x128xf32> to vector<64x128xbf16>
    %c0_69 = arith.constant 0 : index
    %c0_70 = arith.constant 0 : index
    %277 = vector.load %arg5[%c0_69, %c0_70] : memref<128x512xbf16, #tpu.memory_space<vmem>>, vector<128x512xbf16>
    %cst_71 = arith.constant dense<0.000000e+00> : vector<64x512xf32>
    %278 = tpu.matmul %276, %277, %cst_71 {dimension_numbers = #tpu.dot_dimension_numbers<[1], [0], [0], [1], [0, 0, 1, 1], [], []>} : vector<64x128xbf16>, vector<128x512xbf16>, vector<64x512xf32> -> vector<64x512xf32>
    %c0_72 = arith.constant 0 : index
    %c0_73 = arith.constant 0 : index
    %279 = vector.load %arg7[%c0_72, %c0_73] : memref<1x512xf32, #tpu.memory_space<vmem>>, vector<1x512xf32>
    %280 = vector.broadcast %279 : vector<1x512xf32> to vector<64x512xf32>
    %281 = arith.addf %278, %280 : vector<64x512xf32>
    %c0_74 = arith.constant 0 : index
    %c0_75 = arith.constant 0 : index
    %282 = vector.load %arg11[%c0_74, %c0_75] : memref<64x512xf32, #tpu.memory_space<vmem>>, vector<64x512xf32>
    tpu.vector_store %arg11[%c0_74, %c0_75], %281 {strides = array<i32>} : memref<64x512xf32, #tpu.memory_space<vmem>>, vector<64x512xf32>,
    %c0_76 = arith.constant 0 : index
    %c0_77 = arith.constant 0 : index
    %283 = vector.load %arg6[%c0_76, %c0_77] : memref<128x512xbf16, #tpu.memory_space<vmem>>, vector<128x512xbf16>
    %cst_78 = arith.constant 0.000000e+00 : f32
    %284 = vector.broadcast %cst_78 : f32 to vector<8x128xf32>
    %c0_i32_79 = arith.constant 0 : i32
    %c8_i32_80 = arith.constant 8 : i32
    %285 = arith.muli %c0_i32_79, %c8_i32_80 : i32
    %286 = arith.index_cast %285 : i32 to index
    %c0_81 = arith.constant 0 : index
    %287 = vector.load %arg11[%286, %c0_81] : memref<64x512xf32, #tpu.memory_space<vmem>>, vector<8x512xf32>
    %288 = arith.truncf %284 : vector<8x128xf32> to vector<8x128xbf16>
    %cst_82 = arith.constant dense<0.000000e+00> : vector<8x512xf32>
    %289 = tpu.matmul %288, %283, %cst_82 {dimension_numbers = #tpu.dot_dimension_numbers<[1], [0], [0], [1], [0, 0, 1, 1], [], []>} : vector<8x128xbf16>, vector<128x512xbf16>, vector<8x512xf32> -> vector<8x512xf32>
    %290 = arith.addf %287, %289 : vector<8x512xf32>
    %291 = vector.extract_strided_slice %290 {offsets = [0, 0], sizes = [8, 128], strides = [1, 1]} : vector<8x512xf32> to vector<8x128xf32>
    %292 = arith.negf %291 : vector<8x128xf32>
    %293 = math.exp %292 : vector<8x128xf32>
    %cst_83 = arith.constant 1.000000e+00 : f32
    %294 = vector.broadcast %cst_83 : f32 to vector<8x128xf32>
    %295 = arith.addf %294, %293 : vector<8x128xf32>
    %296 = arith.divf %294, %295 : vector<8x128xf32>
    %297 = vector.extract_strided_slice %290 {offsets = [0, 128], sizes = [8, 128], strides = [1, 1]} : vector<8x512xf32> to vector<8x128xf32>
    %298 = arith.negf %297 : vector<8x128xf32>
    %299 = math.exp %298 : vector<8x128xf32>
    %cst_84 = arith.constant 1.000000e+00 : f32
    %300 = vector.broadcast %cst_84 : f32 to vector<8x128xf32>
    %301 = arith.addf %300, %299 : vector<8x128xf32>
    %302 = arith.divf %300, %301 : vector<8x128xf32>
    %303 = vector.extract_strided_slice %290 {offsets = [0, 256], sizes = [8, 128], strides = [1, 1]} : vector<8x512xf32> to vector<8x128xf32>
    %304 = math.tanh %303 : vector<8x128xf32>
    %305 = vector.extract_strided_slice %290 {offsets = [0, 384], sizes = [8, 128], strides = [1, 1]} : vector<8x512xf32> to vector<8x128xf32>
    %306 = arith.negf %305 : vector<8x128xf32>
    %307 = math.exp %306 : vector<8x128xf32>
    %cst_85 = arith.constant 1.000000e+00 : f32
    %308 = vector.broadcast %cst_85 : f32 to vector<8x128xf32>
    %309 = arith.addf %308, %307 : vector<8x128xf32>
    %310 = arith.divf %308, %309 : vector<8x128xf32>
    %311 = arith.mulf %302, %284 : vector<8x128xf32>
    %312 = arith.mulf %296, %304 : vector<8x128xf32>
    %313 = arith.addf %311, %312 : vector<8x128xf32>
    %314 = math.tanh %313 : vector<8x128xf32>
    %315 = arith.mulf %310, %314 : vector<8x128xf32>
    %c1_i32_86 = arith.constant 1 : i32
    %c8_i32_87 = arith.constant 8 : i32
    %316 = arith.muli %c1_i32_86, %c8_i32_87 : i32
    %317 = arith.index_cast %316 : i32 to index
    %c0_88 = arith.constant 0 : index
    %318 = vector.load %arg11[%317, %c0_88] : memref<64x512xf32, #tpu.memory_space<vmem>>, vector<8x512xf32>
    %319 = arith.truncf %315 : vector<8x128xf32> to vector<8x128xbf16>
    %cst_89 = arith.constant dense<0.000000e+00> : vector<8x512xf32>
    %320 = tpu.matmul %319, %283, %cst_89 {dimension_numbers = #tpu.dot_dimension_numbers<[1], [0], [0], [1], [0, 0, 1, 1], [], []>} : vector<8x128xbf16>, vector<128x512xbf16>, vector<8x512xf32> -> vector<8x512xf32>
    %321 = arith.addf %318, %320 : vector<8x512xf32>
    %322 = vector.extract_strided_slice %321 {offsets = [0, 0], sizes = [8, 128], strides = [1, 1]} : vector<8x512xf32> to vector<8x128xf32>
    %323 = arith.negf %322 : vector<8x128xf32>
    %324 = math.exp %323 : vector<8x128xf32>
    %cst_90 = arith.constant 1.000000e+00 : f32
    %325 = vector.broadcast %cst_90 : f32 to vector<8x128xf32>
    %326 = arith.addf %325, %324 : vector<8x128xf32>
    %327 = arith.divf %325, %326 : vector<8x128xf32>
    %328 = vector.extract_strided_slice %321 {offsets = [0, 128], sizes = [8, 128], strides = [1, 1]} : vector<8x512xf32> to vector<8x128xf32>
    %329 = arith.negf %328 : vector<8x128xf32>
    %330 = math.exp %329 : vector<8x128xf32>
    %cst_91 = arith.constant 1.000000e+00 : f32
    %331 = vector.broadcast %cst_91 : f32 to vector<8x128xf32>
    %332 = arith.addf %331, %330 : vector<8x128xf32>
    %333 = arith.divf %331, %332 : vector<8x128xf32>
    %334 = vector.extract_strided_slice %321 {offsets = [0, 256], sizes = [8, 128], strides = [1, 1]} : vector<8x512xf32> to vector<8x128xf32>
    %335 = math.tanh %334 : vector<8x128xf32>
    %336 = vector.extract_strided_slice %321 {offsets = [0, 384], sizes = [8, 128], strides = [1, 1]} : vector<8x512xf32> to vector<8x128xf32>
    %337 = arith.negf %336 : vector<8x128xf32>
    %338 = math.exp %337 : vector<8x128xf32>
    %cst_92 = arith.constant 1.000000e+00 : f32
    %339 = vector.broadcast %cst_92 : f32 to vector<8x128xf32>
    %340 = arith.addf %339, %338 : vector<8x128xf32>
    %341 = arith.divf %339, %340 : vector<8x128xf32>
    %342 = arith.mulf %333, %313 : vector<8x128xf32>
    %343 = arith.mulf %327, %335 : vector<8x128xf32>
    %344 = arith.addf %342, %343 : vector<8x128xf32>
    %345 = math.tanh %344 : vector<8x128xf32>
    %346 = arith.mulf %341, %345 : vector<8x128xf32>
    %c2_i32_93 = arith.constant 2 : i32
    %c8_i32_94 = arith.constant 8 : i32
    %347 = arith.muli %c2_i32_93, %c8_i32_94 : i32
    %348 = arith.index_cast %347 : i32 to index
    %c0_95 = arith.constant 0 : index
    %349 = vector.load %arg11[%348, %c0_95] : memref<64x512xf32, #tpu.memory_space<vmem>>, vector<8x512xf32>
    %350 = arith.truncf %346 : vector<8x128xf32> to vector<8x128xbf16>
    %cst_96 = arith.constant dense<0.000000e+00> : vector<8x512xf32>
    %351 = tpu.matmul %350, %283, %cst_96 {dimension_numbers = #tpu.dot_dimension_numbers<[1], [0], [0], [1], [0, 0, 1, 1], [], []>} : vector<8x128xbf16>, vector<128x512xbf16>, vector<8x512xf32> -> vector<8x512xf32>
    %352 = arith.addf %349, %351 : vector<8x512xf32>
    %353 = vector.extract_strided_slice %352 {offsets = [0, 0], sizes = [8, 128], strides = [1, 1]} : vector<8x512xf32> to vector<8x128xf32>
    %354 = arith.negf %353 : vector<8x128xf32>
    %355 = math.exp %354 : vector<8x128xf32>
    %cst_97 = arith.constant 1.000000e+00 : f32
    %356 = vector.broadcast %cst_97 : f32 to vector<8x128xf32>
    %357 = arith.addf %356, %355 : vector<8x128xf32>
    %358 = arith.divf %356, %357 : vector<8x128xf32>
    %359 = vector.extract_strided_slice %352 {offsets = [0, 128], sizes = [8, 128], strides = [1, 1]} : vector<8x512xf32> to vector<8x128xf32>
    %360 = arith.negf %359 : vector<8x128xf32>
    %361 = math.exp %360 : vector<8x128xf32>
    %cst_98 = arith.constant 1.000000e+00 : f32
    %362 = vector.broadcast %cst_98 : f32 to vector<8x128xf32>
    %363 = arith.addf %362, %361 : vector<8x128xf32>
    %364 = arith.divf %362, %363 : vector<8x128xf32>
    %365 = vector.extract_strided_slice %352 {offsets = [0, 256], sizes = [8, 128], strides = [1, 1]} : vector<8x512xf32> to vector<8x128xf32>
    %366 = math.tanh %365 : vector<8x128xf32>
    %367 = vector.extract_strided_slice %352 {offsets = [0, 384], sizes = [8, 128], strides = [1, 1]} : vector<8x512xf32> to vector<8x128xf32>
    %368 = arith.negf %367 : vector<8x128xf32>
    %369 = math.exp %368 : vector<8x128xf32>
    %cst_99 = arith.constant 1.000000e+00 : f32
    %370 = vector.broadcast %cst_99 : f32 to vector<8x128xf32>
    %371 = arith.addf %370, %369 : vector<8x128xf32>
    %372 = arith.divf %370, %371 : vector<8x128xf32>
    %373 = arith.mulf %364, %344 : vector<8x128xf32>
    %374 = arith.mulf %358, %366 : vector<8x128xf32>
    %375 = arith.addf %373, %374 : vector<8x128xf32>
    %376 = math.tanh %375 : vector<8x128xf32>
    %377 = arith.mulf %372, %376 : vector<8x128xf32>
    %c3_i32_100 = arith.constant 3 : i32
    %c8_i32_101 = arith.constant 8 : i32
    %378 = arith.muli %c3_i32_100, %c8_i32_101 : i32
    %379 = arith.index_cast %378 : i32 to index
    %c0_102 = arith.constant 0 : index
    %380 = vector.load %arg11[%379, %c0_102] : memref<64x512xf32, #tpu.memory_space<vmem>>, vector<8x512xf32>
    %381 = arith.truncf %377 : vector<8x128xf32> to vector<8x128xbf16>
    %cst_103 = arith.constant dense<0.000000e+00> : vector<8x512xf32>
    %382 = tpu.matmul %381, %283, %cst_103 {dimension_numbers = #tpu.dot_dimension_numbers<[1], [0], [0], [1], [0, 0, 1, 1], [], []>} : vector<8x128xbf16>, vector<128x512xbf16>, vector<8x512xf32> -> vector<8x512xf32>
    %383 = arith.addf %380, %382 : vector<8x512xf32>
    %384 = vector.extract_strided_slice %383 {offsets = [0, 0], sizes = [8, 128], strides = [1, 1]} : vector<8x512xf32> to vector<8x128xf32>
    %385 = arith.negf %384 : vector<8x128xf32>
    %386 = math.exp %385 : vector<8x128xf32>
    %cst_104 = arith.constant 1.000000e+00 : f32
    %387 = vector.broadcast %cst_104 : f32 to vector<8x128xf32>
    %388 = arith.addf %387, %386 : vector<8x128xf32>
    %389 = arith.divf %387, %388 : vector<8x128xf32>
    %390 = vector.extract_strided_slice %383 {offsets = [0, 128], sizes = [8, 128], strides = [1, 1]} : vector<8x512xf32> to vector<8x128xf32>
    %391 = arith.negf %390 : vector<8x128xf32>
    %392 = math.exp %391 : vector<8x128xf32>
    %cst_105 = arith.constant 1.000000e+00 : f32
    %393 = vector.broadcast %cst_105 : f32 to vector<8x128xf32>
    %394 = arith.addf %393, %392 : vector<8x128xf32>
    %395 = arith.divf %393, %394 : vector<8x128xf32>
    %396 = vector.extract_strided_slice %383 {offsets = [0, 256], sizes = [8, 128], strides = [1, 1]} : vector<8x512xf32> to vector<8x128xf32>
    %397 = math.tanh %396 : vector<8x128xf32>
    %398 = vector.extract_strided_slice %383 {offsets = [0, 384], sizes = [8, 128], strides = [1, 1]} : vector<8x512xf32> to vector<8x128xf32>
    %399 = arith.negf %398 : vector<8x128xf32>
    %400 = math.exp %399 : vector<8x128xf32>
    %cst_106 = arith.constant 1.000000e+00 : f32
    %401 = vector.broadcast %cst_106 : f32 to vector<8x128xf32>
    %402 = arith.addf %401, %400 : vector<8x128xf32>
    %403 = arith.divf %401, %402 : vector<8x128xf32>
    %404 = arith.mulf %395, %375 : vector<8x128xf32>
    %405 = arith.mulf %389, %397 : vector<8x128xf32>
    %406 = arith.addf %404, %405 : vector<8x128xf32>
    %407 = math.tanh %406 : vector<8x128xf32>
    %408 = arith.mulf %403, %407 : vector<8x128xf32>
    %c4_i32_107 = arith.constant 4 : i32
    %c8_i32_108 = arith.constant 8 : i32
    %409 = arith.muli %c4_i32_107, %c8_i32_108 : i32
    %410 = arith.index_cast %409 : i32 to index
    %c0_109 = arith.constant 0 : index
    %411 = vector.load %arg11[%410, %c0_109] : memref<64x512xf32, #tpu.memory_space<vmem>>, vector<8x512xf32>
    %412 = arith.truncf %408 : vector<8x128xf32> to vector<8x128xbf16>
    %cst_110 = arith.constant dense<0.000000e+00> : vector<8x512xf32>
    %413 = tpu.matmul %412, %283, %cst_110 {dimension_numbers = #tpu.dot_dimension_numbers<[1], [0], [0], [1], [0, 0, 1, 1], [], []>} : vector<8x128xbf16>, vector<128x512xbf16>, vector<8x512xf32> -> vector<8x512xf32>
    %414 = arith.addf %411, %413 : vector<8x512xf32>
    %415 = vector.extract_strided_slice %414 {offsets = [0, 0], sizes = [8, 128], strides = [1, 1]} : vector<8x512xf32> to vector<8x128xf32>
    %416 = arith.negf %415 : vector<8x128xf32>
    %417 = math.exp %416 : vector<8x128xf32>
    %cst_111 = arith.constant 1.000000e+00 : f32
    %418 = vector.broadcast %cst_111 : f32 to vector<8x128xf32>
    %419 = arith.addf %418, %417 : vector<8x128xf32>
    %420 = arith.divf %418, %419 : vector<8x128xf32>
    %421 = vector.extract_strided_slice %414 {offsets = [0, 128], sizes = [8, 128], strides = [1, 1]} : vector<8x512xf32> to vector<8x128xf32>
    %422 = arith.negf %421 : vector<8x128xf32>
    %423 = math.exp %422 : vector<8x128xf32>
    %cst_112 = arith.constant 1.000000e+00 : f32
    %424 = vector.broadcast %cst_112 : f32 to vector<8x128xf32>
    %425 = arith.addf %424, %423 : vector<8x128xf32>
    %426 = arith.divf %424, %425 : vector<8x128xf32>
    %427 = vector.extract_strided_slice %414 {offsets = [0, 256], sizes = [8, 128], strides = [1, 1]} : vector<8x512xf32> to vector<8x128xf32>
    %428 = math.tanh %427 : vector<8x128xf32>
    %429 = vector.extract_strided_slice %414 {offsets = [0, 384], sizes = [8, 128], strides = [1, 1]} : vector<8x512xf32> to vector<8x128xf32>
    %430 = arith.negf %429 : vector<8x128xf32>
    %431 = math.exp %430 : vector<8x128xf32>
    %cst_113 = arith.constant 1.000000e+00 : f32
    %432 = vector.broadcast %cst_113 : f32 to vector<8x128xf32>
    %433 = arith.addf %432, %431 : vector<8x128xf32>
    %434 = arith.divf %432, %433 : vector<8x128xf32>
    %435 = arith.mulf %426, %406 : vector<8x128xf32>
    %436 = arith.mulf %420, %428 : vector<8x128xf32>
    %437 = arith.addf %435, %436 : vector<8x128xf32>
    %438 = math.tanh %437 : vector<8x128xf32>
    %439 = arith.mulf %434, %438 : vector<8x128xf32>
    %c5_i32_114 = arith.constant 5 : i32
    %c8_i32_115 = arith.constant 8 : i32
    %440 = arith.muli %c5_i32_114, %c8_i32_115 : i32
    %441 = arith.index_cast %440 : i32 to index
    %c0_116 = arith.constant 0 : index
    %442 = vector.load %arg11[%441, %c0_116] : memref<64x512xf32, #tpu.memory_space<vmem>>, vector<8x512xf32>
    %443 = arith.truncf %439 : vector<8x128xf32> to vector<8x128xbf16>
    %cst_117 = arith.constant dense<0.000000e+00> : vector<8x512xf32>
    %444 = tpu.matmul %443, %283, %cst_117 {dimension_numbers = #tpu.dot_dimension_numbers<[1], [0], [0], [1], [0, 0, 1, 1], [], []>} : vector<8x128xbf16>, vector<128x512xbf16>, vector<8x512xf32> -> vector<8x512xf32>
    %445 = arith.addf %442, %444 : vector<8x512xf32>
    %446 = vector.extract_strided_slice %445 {offsets = [0, 0], sizes = [8, 128], strides = [1, 1]} : vector<8x512xf32> to vector<8x128xf32>
    %447 = arith.negf %446 : vector<8x128xf32>
    %448 = math.exp %447 : vector<8x128xf32>
    %cst_118 = arith.constant 1.000000e+00 : f32
    %449 = vector.broadcast %cst_118 : f32 to vector<8x128xf32>
    %450 = arith.addf %449, %448 : vector<8x128xf32>
    %451 = arith.divf %449, %450 : vector<8x128xf32>
    %452 = vector.extract_strided_slice %445 {offsets = [0, 128], sizes = [8, 128], strides = [1, 1]} : vector<8x512xf32> to vector<8x128xf32>
    %453 = arith.negf %452 : vector<8x128xf32>
    %454 = math.exp %453 : vector<8x128xf32>
    %cst_119 = arith.constant 1.000000e+00 : f32
    %455 = vector.broadcast %cst_119 : f32 to vector<8x128xf32>
    %456 = arith.addf %455, %454 : vector<8x128xf32>
    %457 = arith.divf %455, %456 : vector<8x128xf32>
    %458 = vector.extract_strided_slice %445 {offsets = [0, 256], sizes = [8, 128], strides = [1, 1]} : vector<8x512xf32> to vector<8x128xf32>
    %459 = math.tanh %458 : vector<8x128xf32>
    %460 = vector.extract_strided_slice %445 {offsets = [0, 384], sizes = [8, 128], strides = [1, 1]} : vector<8x512xf32> to vector<8x128xf32>
    %461 = arith.negf %460 : vector<8x128xf32>
    %462 = math.exp %461 : vector<8x128xf32>
    %cst_120 = arith.constant 1.000000e+00 : f32
    %463 = vector.broadcast %cst_120 : f32 to vector<8x128xf32>
    %464 = arith.addf %463, %462 : vector<8x128xf32>
    %465 = arith.divf %463, %464 : vector<8x128xf32>
    %466 = arith.mulf %457, %437 : vector<8x128xf32>
    %467 = arith.mulf %451, %459 : vector<8x128xf32>
    %468 = arith.addf %466, %467 : vector<8x128xf32>
    %469 = math.tanh %468 : vector<8x128xf32>
    %470 = arith.mulf %465, %469 : vector<8x128xf32>
    %c6_i32_121 = arith.constant 6 : i32
    %c8_i32_122 = arith.constant 8 : i32
    %471 = arith.muli %c6_i32_121, %c8_i32_122 : i32
    %472 = arith.index_cast %471 : i32 to index
    %c0_123 = arith.constant 0 : index
    %473 = vector.load %arg11[%472, %c0_123] : memref<64x512xf32, #tpu.memory_space<vmem>>, vector<8x512xf32>
    %474 = arith.truncf %470 : vector<8x128xf32> to vector<8x128xbf16>
    %cst_124 = arith.constant dense<0.000000e+00> : vector<8x512xf32>
    %475 = tpu.matmul %474, %283, %cst_124 {dimension_numbers = #tpu.dot_dimension_numbers<[1], [0], [0], [1], [0, 0, 1, 1], [], []>} : vector<8x128xbf16>, vector<128x512xbf16>, vector<8x512xf32> -> vector<8x512xf32>
    %476 = arith.addf %473, %475 : vector<8x512xf32>
    %477 = vector.extract_strided_slice %476 {offsets = [0, 0], sizes = [8, 128], strides = [1, 1]} : vector<8x512xf32> to vector<8x128xf32>
    %478 = arith.negf %477 : vector<8x128xf32>
    %479 = math.exp %478 : vector<8x128xf32>
    %cst_125 = arith.constant 1.000000e+00 : f32
    %480 = vector.broadcast %cst_125 : f32 to vector<8x128xf32>
    %481 = arith.addf %480, %479 : vector<8x128xf32>
    %482 = arith.divf %480, %481 : vector<8x128xf32>
    %483 = vector.extract_strided_slice %476 {offsets = [0, 128], sizes = [8, 128], strides = [1, 1]} : vector<8x512xf32> to vector<8x128xf32>
    %484 = arith.negf %483 : vector<8x128xf32>
    %485 = math.exp %484 : vector<8x128xf32>
    %cst_126 = arith.constant 1.000000e+00 : f32
    %486 = vector.broadcast %cst_126 : f32 to vector<8x128xf32>
    %487 = arith.addf %486, %485 : vector<8x128xf32>
    %488 = arith.divf %486, %487 : vector<8x128xf32>
    %489 = vector.extract_strided_slice %476 {offsets = [0, 256], sizes = [8, 128], strides = [1, 1]} : vector<8x512xf32> to vector<8x128xf32>
    %490 = math.tanh %489 : vector<8x128xf32>
    %491 = vector.extract_strided_slice %476 {offsets = [0, 384], sizes = [8, 128], strides = [1, 1]} : vector<8x512xf32> to vector<8x128xf32>
    %492 = arith.negf %491 : vector<8x128xf32>
    %493 = math.exp %492 : vector<8x128xf32>
    %cst_127 = arith.constant 1.000000e+00 : f32
    %494 = vector.broadcast %cst_127 : f32 to vector<8x128xf32>
    %495 = arith.addf %494, %493 : vector<8x128xf32>
    %496 = arith.divf %494, %495 : vector<8x128xf32>
    %497 = arith.mulf %488, %468 : vector<8x128xf32>
    %498 = arith.mulf %482, %490 : vector<8x128xf32>
    %499 = arith.addf %497, %498 : vector<8x128xf32>
    %500 = math.tanh %499 : vector<8x128xf32>
    %501 = arith.mulf %496, %500 : vector<8x128xf32>
    %c7_i32_128 = arith.constant 7 : i32
    %c8_i32_129 = arith.constant 8 : i32
    %502 = arith.muli %c7_i32_128, %c8_i32_129 : i32
    %503 = arith.index_cast %502 : i32 to index
    %c0_130 = arith.constant 0 : index
    %504 = vector.load %arg11[%503, %c0_130] : memref<64x512xf32, #tpu.memory_space<vmem>>, vector<8x512xf32>
    %505 = arith.truncf %501 : vector<8x128xf32> to vector<8x128xbf16>
    %cst_131 = arith.constant dense<0.000000e+00> : vector<8x512xf32>
    %506 = tpu.matmul %505, %283, %cst_131 {dimension_numbers = #tpu.dot_dimension_numbers<[1], [0], [0], [1], [0, 0, 1, 1], [], []>} : vector<8x128xbf16>, vector<128x512xbf16>, vector<8x512xf32> -> vector<8x512xf32>
    %507 = arith.addf %504, %506 : vector<8x512xf32>
    %508 = vector.extract_strided_slice %507 {offsets = [0, 0], sizes = [8, 128], strides = [1, 1]} : vector<8x512xf32> to vector<8x128xf32>
    %509 = arith.negf %508 : vector<8x128xf32>
    %510 = math.exp %509 : vector<8x128xf32>
    %cst_132 = arith.constant 1.000000e+00 : f32
    %511 = vector.broadcast %cst_132 : f32 to vector<8x128xf32>
    %512 = arith.addf %511, %510 : vector<8x128xf32>
    %513 = arith.divf %511, %512 : vector<8x128xf32>
    %514 = vector.extract_strided_slice %507 {offsets = [0, 128], sizes = [8, 128], strides = [1, 1]} : vector<8x512xf32> to vector<8x128xf32>
    %515 = arith.negf %514 : vector<8x128xf32>
    %516 = math.exp %515 : vector<8x128xf32>
    %cst_133 = arith.constant 1.000000e+00 : f32
    %517 = vector.broadcast %cst_133 : f32 to vector<8x128xf32>
    %518 = arith.addf %517, %516 : vector<8x128xf32>
    %519 = arith.divf %517, %518 : vector<8x128xf32>
    %520 = vector.extract_strided_slice %507 {offsets = [0, 256], sizes = [8, 128], strides = [1, 1]} : vector<8x512xf32> to vector<8x128xf32>
    %521 = math.tanh %520 : vector<8x128xf32>
    %522 = vector.extract_strided_slice %507 {offsets = [0, 384], sizes = [8, 128], strides = [1, 1]} : vector<8x512xf32> to vector<8x128xf32>
    %523 = arith.negf %522 : vector<8x128xf32>
    %524 = math.exp %523 : vector<8x128xf32>
    %cst_134 = arith.constant 1.000000e+00 : f32
    %525 = vector.broadcast %cst_134 : f32 to vector<8x128xf32>
    %526 = arith.addf %525, %524 : vector<8x128xf32>
    %527 = arith.divf %525, %526 : vector<8x128xf32>
    %528 = arith.mulf %519, %499 : vector<8x128xf32>
    %529 = arith.mulf %513, %521 : vector<8x128xf32>
    %530 = arith.addf %528, %529 : vector<8x128xf32>
    %531 = math.tanh %530 : vector<8x128xf32>
    %532 = arith.mulf %527, %531 : vector<8x128xf32>
    %c8_i32_135 = arith.constant 8 : i32
    %c0_136 = arith.constant 0 : index
    %c0_137 = arith.constant 0 : index
    %533 = vector.load %arg8[%c0_136, %c0_137] : memref<128x1xf32, #tpu.memory_space<vmem>>, vector<128x1xf32>
    %cst_138 = arith.constant dense<0.000000e+00> : vector<8x1xf32>
    %534 = tpu.matmul %532, %533, %cst_138 {dimension_numbers = #tpu.dot_dimension_numbers<[1], [0], [0], [1], [0, 0, 1, 1], [], []>} : vector<8x128xf32>, vector<128x1xf32>, vector<8x1xf32> -> vector<8x1xf32>
    %c0_139 = arith.constant 0 : index
    %c0_140 = arith.constant 0 : index
    %535 = vector.load %arg9[%c0_139, %c0_140] : memref<1x1xf32, #tpu.memory_space<vmem>>, vector<1x1xf32>
    %536 = vector.broadcast %535 : vector<1x1xf32> to vector<8x1xf32>
    %537 = arith.addf %534, %536 : vector<8x1xf32>
    %c0_141 = arith.constant 0 : index
    %c0_142 = arith.constant 0 : index
    %c0_143 = arith.constant 0 : index
    %538 = vector.load %arg10[%c0_141, %c0_142, %c0_143] : memref<1x8x1xf32, #tpu.memory_space<vmem>>, vector<1x8x1xf32>
    %539 = vector.shape_cast %538 : vector<1x8x1xf32> to vector<8x1xf32>
    %540 = vector.shape_cast %537 : vector<8x1xf32> to vector<1x8x1xf32>
    tpu.vector_store %arg10[%c0_141, %c0_142, %c0_143], %540 {strides = array<i32>} : memref<1x8x1xf32, #tpu.memory_space<vmem>>, vector<1x8x1xf32>,
    return
  }
  func.func @transform_0(%arg0: i32) -> (i32, i32, i32) {
    %c0_i32 = arith.constant 0 : i32
    %c0_i32_0 = arith.constant 0 : i32
    %c0_i32_1 = arith.constant 0 : i32
    return %arg0, %c0_i32, %c0_i32_0 : i32, i32, i32
  }
  func.func @transform_1(%arg0: i32) -> (i32, i32) {
    %c0_i32 = arith.constant 0 : i32
    %c0_i32_0 = arith.constant 0 : i32
    %c0_i32_1 = arith.constant 0 : i32
    return %c0_i32, %c0_i32_0 : i32, i32
  }
  func.func @transform_2(%arg0: i32) -> (i32, i32) {
    %c0_i32 = arith.constant 0 : i32
    %c0_i32_0 = arith.constant 0 : i32
    %c0_i32_1 = arith.constant 0 : i32
    return %c0_i32, %c0_i32_0 : i32, i32
  }
  func.func @transform_3(%arg0: i32) -> (i32, i32) {
    %c0_i32 = arith.constant 0 : i32
    %c0_i32_0 = arith.constant 0 : i32
    %c0_i32_1 = arith.constant 0 : i32
    return %c0_i32, %c0_i32_0 : i32, i32
  }
  func.func @transform_4(%arg0: i32) -> (i32, i32) {
    %c0_i32 = arith.constant 0 : i32
    %c0_i32_0 = arith.constant 0 : i32
    %c0_i32_1 = arith.constant 0 : i32
    return %c0_i32, %c0_i32_0 : i32, i32
  }
  func.func @transform_5(%arg0: i32) -> (i32, i32) {
    %c0_i32 = arith.constant 0 : i32
    %c0_i32_0 = arith.constant 0 : i32
    %c0_i32_1 = arith.constant 0 : i32
    return %c0_i32, %c0_i32_0 : i32, i32
  }
  func.func @transform_6(%arg0: i32) -> (i32, i32) {
    %c0_i32 = arith.constant 0 : i32
    %c0_i32_0 = arith.constant 0 : i32
    %c0_i32_1 = arith.constant 0 : i32
    return %c0_i32, %c0_i32_0 : i32, i32
  }
  func.func @transform_7(%arg0: i32) -> (i32, i32) {
    %c0_i32 = arith.constant 0 : i32
    %c0_i32_0 = arith.constant 0 : i32
    %c0_i32_1 = arith.constant 0 : i32
    return %c0_i32, %c0_i32_0 : i32, i32
  }
  func.func @transform_8(%arg0: i32) -> (i32, i32) {
    %c0_i32 = arith.constant 0 : i32
    %c0_i32_0 = arith.constant 0 : i32
    %c0_i32_1 = arith.constant 0 : i32
    return %c0_i32, %c0_i32_0 : i32, i32
  }
  func.func @transform_9(%arg0: i32) -> (i32, i32, i32) {
    %c0_i32 = arith.constant 0 : i32
    %c0_i32_0 = arith.constant 0 : i32
    %c0_i32_1 = arith.constant 0 : i32
    return %arg0, %c0_i32, %c0_i32_0 : i32, i32, i32
  }
}

</mosaic_0001>

<llo_original>
// kernel: lstm_forward.1
$region0: #{lstm_forward.1}
  #allocation0 [shape = 'u32[]', space=smem, size = 0x4, offset = 0x4, fixed_abs, tag = 'smem constant byte address 0x4 - core index']
  #allocation1 [shape = 'u32[144,128]{1,0:T(1,128)}', space=vmem, size = 0x12000, scoped, tag = 'internal scratch']
  #allocation2 [shape = 'f32[64,512]{1,0:T(8,128)}', space=vmem, size = 0x20000, scoped, tag = 'scratch operand']
  #allocation3 [shape = 'f32[64,128]{1,0:T(8,128)}', space=vmem, size = 0x8000, scoped, tag = 'scratch operand']
  #allocation4 [shape = 'f32[1,1]{1,0:T(1,128)S(1)}', space=vmem, size = 0x200, scoped, tag = 'scoped memory for lstm_forward.1']
  %s0 = inlined_call_operand.vmem [shape: f32[1,64,8], index: 0, kind: input, shape index: {}]
  %s1 = inlined_call_operand.vmem [shape: bf16[8,512], index: 1, kind: input, shape index: {}]
  %s2 = inlined_call_operand.hbm [shape: bf16[128,512], index: 2, kind: input, shape index: {}]
  %s3 = inlined_call_operand.vmem [shape: f32[1,512], index: 3, kind: input, shape index: {}]
  %s4 = inlined_call_operand.hbm [shape: bf16[128,512], index: 4, kind: input, shape index: {}]
  %s5 = inlined_call_operand.hbm [shape: bf16[128,512], index: 5, kind: input, shape index: {}]
  %s6 = inlined_call_operand.vmem [shape: f32[1,512], index: 6, kind: input, shape index: {}]
  %s7 = inlined_call_operand.vmem [shape: f32[128,1], index: 7, kind: input, shape index: {}]
  %s8 = inlined_call_operand.<no memory space> [shape: f32[1,1], index: 8, kind: input, shape index: {}]
  %s9 = inlined_call_operand.vmem [shape: f32[1,8,1], index: 9, kind: output, shape index: {}]
  %s10 = sld [smem:[#allocation0]]
  $region58: #{lstm_forward.1} parent=0
    _
  %s12 = ssub.s32 1, %s10
  %s13 = scalar_select 0, %s12, %s10
  %v14 = vstv %s8
  %15 = vst [vmem:[#allocation4] sm:$0x1] %v14
  $region1: #{lstm_forward.1} parent=0
    #allocation5 [shape = 'u8[131072]{0}', space=vmem, size = 0x20000, scoped, tag = 'input window, operand 2, single buffered']
    #allocation6 [shape = 's32[1]{0}', space=sflag, size = 0x4, scoped, tag = 'scoped memory for lstm_forward.1']
    #allocation7 [shape = 'u8[131072]{0}', space=vmem, size = 0x20000, scoped, tag = 'input window, operand 4, single buffered']
    #allocation8 [shape = 's32[1]{0}', space=sflag, size = 0x4, scoped, tag = 'scoped memory for lstm_forward.1']
    #allocation9 [shape = 'u8[131072]{0}', space=vmem, size = 0x20000, scoped, tag = 'input window, operand 5, single buffered']
    %16 = vsyncpa [#allocation6], 0
    %17 = vsyncpa [#allocation8], 0
    // Predicated region
    $region2: #{lstm_forward.1} parent=1 // pred_check
      _
    $region3: #{lstm_forward.1} parent=1 // pred_check_branch
      %19 = sbr.rel (0) target = $region5
    $region4: #{lstm_forward.1} parent=1 // pred_region
      _
    $region5: #{lstm_forward.1} parent=1 // pred_fallthru
      _
    // Predicated region
    $region6: #{lstm_forward.1} parent=1 // pred_check
      _
    $region7: #{lstm_forward.1} parent=1 // pred_check_branch
      %21 = sbr.rel (0) target = $region9
    $region8: #{lstm_forward.1} parent=1 // pred_region
      _
    $region9: #{lstm_forward.1} parent=1 // pred_fallthru
      _
    // Predicated region
    $region10: #{lstm_forward.1} parent=1 // pred_check
      _
    $region11: #{lstm_forward.1} parent=1 // pred_check_branch
      %23 = sbr.rel (0) target = $region13
    $region12: #{lstm_forward.1} parent=1 // pred_region
      %s25 = ssub.s32 4096, 4096
      %26 = vsyncadd [#allocation6], %s25
      %s27 = sshll.u32 [#allocation5], 4
      %s28 = int_to_ptr.vmem [resolvable:$true] %s27
      %33 = dma.hbm_to_vmem [thread:$0]  %s2, 4096, %s28, [#allocation6], 256, 256, 16
    $region13: #{lstm_forward.1} parent=1 // pred_fallthru
      _
    // Predicated region
    $region14: #{lstm_forward.1} parent=1 // pred_check
      _
    $region15: #{lstm_forward.1} parent=1 // pred_check_branch
      %35 = sbr.rel (0) target = $region17
    $region16: #{lstm_forward.1} parent=1 // pred_region
      _
    $region17: #{lstm_forward.1} parent=1 // pred_fallthru
      _
    // Predicated region
    $region18: #{lstm_forward.1} parent=1 // pred_check
      _
    $region19: #{lstm_forward.1} parent=1 // pred_check_branch
      %37 = sbr.rel (0) target = $region21
    $region20: #{lstm_forward.1} parent=1 // pred_region
      %s39 = ssub.s32 4096, 4096
      %40 = vsyncadd [#allocation8], %s39
      %s41 = sshll.u32 [#allocation7], 4
      %s42 = int_to_ptr.vmem [resolvable:$true] %s41
      %47 = dma.hbm_to_vmem [thread:$0]  %s4, 4096, %s42, [#allocation8], 256, 256, 16
    $region21: #{lstm_forward.1} parent=1 // pred_fallthru
      _
    // Predicated region
    $region22: #{lstm_forward.1} parent=1 // pred_check
      _
    $region23: #{lstm_forward.1} parent=1 // pred_check_branch
      %49 = sbr.rel (0) target = $region25
    $region24: #{lstm_forward.1} parent=1 // pred_region
      %s51 = ssub.s32 4096, 4096
      %52 = vsyncadd [#allocation8], %s51
      %s53 = sshll.u32 [#allocation9], 4
      %s54 = int_to_ptr.vmem [resolvable:$true] %s53
      %59 = dma.hbm_to_vmem [thread:$0]  %s5, 4096, %s54, [#allocation8], 256, 256, 16
    $region25: #{lstm_forward.1} parent=1 // pred_fallthru
      _
    // Predicated region
    $region26: #{lstm_forward.1} parent=1 // pred_check
      _
    $region27: #{lstm_forward.1} parent=1 // pred_check_branch
      %61 = sbr.rel (0) target = $region29
    $region28: #{lstm_forward.1} parent=1 // pred_region
      _
    $region29: #{lstm_forward.1} parent=1 // pred_fallthru
      _
    // Predicated region
    $region30: #{lstm_forward.1} parent=1 // pred_check
      _
    $region31: #{lstm_forward.1} parent=1 // pred_check_branch
      %63 = sbr.rel (0) target = $region33
    $region32: #{lstm_forward.1} parent=1 // pred_region
      _
    $region33: #{lstm_forward.1} parent=1 // pred_fallthru
      _
    // Predicated region
    $region34: #{lstm_forward.1} parent=1 // pred_check
      _
    $region35: #{lstm_forward.1} parent=1 // pred_check_branch
      %65 = sbr.rel (0) target = $region37
    $region36: #{lstm_forward.1} parent=1 // pred_region
      _
    $region37: #{lstm_forward.1} parent=1 // pred_fallthru
      _
    // Predicated region
    $region38: #{lstm_forward.1} parent=1 // pred_check
      _
    $region39: #{lstm_forward.1} parent=1 // pred_check_branch
      %67 = sbr.rel (0) target = $region41
    $region40: #{lstm_forward.1} parent=1 // pred_region
      %68 = dma.done [#allocation6], 4096
    $region41: #{lstm_forward.1} parent=1 // pred_fallthru
      _
    // Predicated region
    $region42: #{lstm_forward.1} parent=1 // pred_check
      _
    $region43: #{lstm_forward.1} parent=1 // pred_check_branch
      %70 = sbr.rel (0) target = $region45
    $region44: #{lstm_forward.1} parent=1 // pred_region
      %71 = dma.done [#allocation8], 4096
    $region45: #{lstm_forward.1} parent=1 // pred_fallthru
      _
    // Predicated region
    $region46: #{lstm_forward.1} parent=1 // pred_check
      _
    $region47: #{lstm_forward.1} parent=1 // pred_check_branch
      %73 = sbr.rel (0) target = $region49
    $region48: #{lstm_forward.1} parent=1 // pred_region
      %74 = dma.done [#allocation8], 4096
    $region49: #{lstm_forward.1} parent=1 // pred_fallthru
      _
    %v76 = vld [vmem:[%s0] sm:$0xff]
    %v77 = vld [vmem:[%s0 + $0x8] sm:$0xff]
    %v78 = vld [vmem:[%s0 + $0x10] sm:$0xff]
    %v79 = vld [vmem:[%s0 + $0x18] sm:$0xff]
    %v80 = vld [vmem:[%s0 + $0x20] sm:$0xff]
    %v81 = vld [vmem:[%s0 + $0x28] sm:$0xff]
    %v82 = vld [vmem:[%s0 + $0x30] sm:$0xff]
    %v83 = vld [vmem:[%s0 + $0x38] sm:$0xff]
    %v84 = vpack.c.bf16 %v77, %v76
    %v85 = vpack.c.bf16 %v79, %v78
    %v86 = vpack.c.bf16 %v81, %v80
    %v87 = vpack.c.bf16 %v83, %v82
    %v88 = vld [vmem:[%s1] sm:$0xff]
    %v89 = vld [vmem:[%s1 + $0x8] sm:$0xff]
    %v90 = vld [vmem:[%s3] sm:$0xf]
    %v92 = vlaneseq
    %v93 = vshrl.u32 %v92, 7
    %v94 = vsub.s32 0, %v93
    %v95 = vrot.slane %v90, %v94
    %v96 = vlaneseq
    %v97 = vshrl.u32 %v96, 7
    %v98 = vsub.s32 1, %v97
    %v99 = vrot.slane %v90, %v98
    %v100 = vlaneseq
    %v101 = vshrl.u32 %v100, 7
    %v102 = vsub.s32 2, %v101
    %v103 = vrot.slane %v90, %v102
    %v104 = vlaneseq
    %v105 = vshrl.u32 %v104, 7
    %v106 = vsub.s32 3, %v105
    %v107 = vrot.slane %v90, %v106
    %v114 = vunpack.c.l.b16 %v88
    %v115 = vunpack.c.h.b16 %v88
    %v116 = vunpack.c.l.b16 %v89
    %v117 = vunpack.c.h.b16 %v89
    %v118 = vpack.c.b16 %v114, %v114
    %v119 = vpack.c.b16 %v115, %v115
    %v120 = vpack.c.b16 %v116, %v116
    %v121 = vpack.c.b16 %v117, %v117
    %vm122 = vcmask 64512
    %v124 = vsel %vm122, %v84, 0
    %v127 = vsel %vm122, %v85, 0
    %v130 = vsel %vm122, %v86, 0
    %v133 = vsel %vm122, %v87, 0
    %vm135 = vcmask 1043456
    %v137 = vsel %vm135, %v118, 0
    %v140 = vsel %vm135, %v119, 0
    %v143 = vsel %vm135, %v120, 0
    %v146 = vsel %vm135, %v121, 0
    %148 = vmatprep.subr.bf16.mxu0 0
    %149 = vmatpush1.bf16.msra.mxu0 0
    %150 = vmatprep.subr.bf16.mxu0 0
    %151 = vmatpush1.bf16.msra.mxu0 0
    %152 = vmatprep.subr.bf16.mxu0 0
    %153 = vmatpush1.bf16.msra.mxu0 0
    %154 = vmatprep.subr.bf16.mxu0 0
    %155 = vmatpush1.bf16.msra.mxu0 0
    %156 = vmatprep.subr.bf16.mxu0 0
    %157 = vmatpush1.bf16.msra.mxu0 0
    %158 = vmatprep.subr.bf16.mxu0 0
    %159 = vmatpush1.bf16.msra.mxu0 0
    %160 = vmatprep.subr.bf16.mxu0 0
    %161 = vmatpush1.bf16.msra.mxu0 0
    %162 = vmatprep.subr.bf16.mxu0 %v140
    %163 = vmatpush1.bf16.msra.mxu0 %v137
    %164 = vmatprep.subr.bf16.mxu0 0
    %165 = vmatpush2.bf16.msra.mxu0 0
    %166 = vmatprep.subr.bf16.mxu0 0
    %167 = vmatpush2.bf16.msra.mxu0 0
    %168 = vmatprep.subr.bf16.mxu0 0
    %169 = vmatpush2.bf16.msra.mxu0 0
    %170 = vmatprep.subr.bf16.mxu0 0
    %171 = vmatpush2.bf16.msra.mxu0 0
    %172 = vmatprep.subr.bf16.mxu0 0
    %173 = vmatpush2.bf16.msra.mxu0 0
    %174 = vmatprep.subr.bf16.mxu0 0
    %175 = vmatpush2.bf16.msra.mxu0 0
    %176 = vmatprep.subr.bf16.mxu0 0
    %177 = vmatpush2.bf16.msra.mxu0 0
    %178 = vmatprep.subr.bf16.mxu0 0
    %179 = vmatpush2.bf16.msra.mxu0 0
    %180 = vmatprep.mubr.bf16.mxu0 0
    %181 = vmatmul.mubr.bf16.gmra.mxu0 %v124
    %v182 = vpop.f32.mrf.mxu0
    %v183 = vadd.f32 %v95, %v182
    %v184 = vpop.f32.mrf.mxu0
    %v185 = vadd.f32 %v99, %v184
    %v186 = vpop.f32.mrf.mxu0
    %v187 = vadd.f32 %v95, %v186
    %v188 = vpop.f32.mrf.mxu0
    %v189 = vadd.f32 %v99, %v188
    %190 = vmatprep.mubr.bf16.mxu0 0
    %191 = vmatmul.mubr.bf16.gmra.mxu0 %v127
    %v192 = vpop.f32.mrf.mxu0
    %v193 = vadd.f32 %v95, %v192
    %v194 = vpop.f32.mrf.mxu0
    %v195 = vadd.f32 %v99, %v194
    %v196 = vpop.f32.mrf.mxu0
    %v197 = vadd.f32 %v95, %v196
    %v198 = vpop.f32.mrf.mxu0
    %v199 = vadd.f32 %v99, %v198
    %200 = vmatprep.mubr.bf16.mxu0 0
    %201 = vmatmul.mubr.bf16.gmra.mxu0 %v130
    %v202 = vpop.f32.mrf.mxu0
    %v203 = vadd.f32 %v95, %v202
    %v204 = vpop.f32.mrf.mxu0
    %v205 = vadd.f32 %v99, %v204
    %v206 = vpop.f32.mrf.mxu0
    %v207 = vadd.f32 %v95, %v206
    %v208 = vpop.f32.mrf.mxu0
    %v209 = vadd.f32 %v99, %v208
    %210 = vmatprep.mubr.bf16.mxu0 0
    %211 = vmatmul.mubr.bf16.gmra.mxu0 %v133
    %v212 = vpop.f32.mrf.mxu0
    %v213 = vadd.f32 %v95, %v212
    %v214 = vpop.f32.mrf.mxu0
    %v215 = vadd.f32 %v99, %v214
    %v216 = vpop.f32.mrf.mxu0
    %v217 = vadd.f32 %v95, %v216
    %v218 = vpop.f32.mrf.mxu0
    %v219 = vadd.f32 %v99, %v218
    %220 = vdwg.mxu0
    %221 = vmatprep.subr.bf16.mxu0 0
    %222 = vmatpush1.bf16.msra.mxu0 0
    %223 = vmatprep.subr.bf16.mxu0 0
    %224 = vmatpush1.bf16.msra.mxu0 0
    %225 = vmatprep.subr.bf16.mxu0 0
    %226 = vmatpush1.bf16.msra.mxu0 0
    %227 = vmatprep.subr.bf16.mxu0 0
    %228 = vmatpush1.bf16.msra.mxu0 0
    %229 = vmatprep.subr.bf16.mxu0 0
    %230 = vmatpush1.bf16.msra.mxu0 0
    %231 = vmatprep.subr.bf16.mxu0 0
    %232 = vmatpush1.bf16.msra.mxu0 0
    %233 = vmatprep.subr.bf16.mxu0 0
    %234 = vmatpush1.bf16.msra.mxu0 0
    %235 = vmatprep.subr.bf16.mxu0 %v146
    %236 = vmatpush1.bf16.msra.mxu0 %v143
    %237 = vmatprep.subr.bf16.mxu0 0
    %238 = vmatpush2.bf16.msra.mxu0 0
    %239 = vmatprep.subr.bf16.mxu0 0
    %240 = vmatpush2.bf16.msra.mxu0 0
    %241 = vmatprep.subr.bf16.mxu0 0
    %242 = vmatpush2.bf16.msra.mxu0 0
    %243 = vmatprep.subr.bf16.mxu0 0
    %244 = vmatpush2.bf16.msra.mxu0 0
    %245 = vmatprep.subr.bf16.mxu0 0
    %246 = vmatpush2.bf16.msra.mxu0 0
    %247 = vmatprep.subr.bf16.mxu0 0
    %248 = vmatpush2.bf16.msra.mxu0 0
    %249 = vmatprep.subr.bf16.mxu0 0
    %250 = vmatpush2.bf16.msra.mxu0 0
    %251 = vmatprep.subr.bf16.mxu0 0
    %252 = vmatpush2.bf16.msra.mxu0 0
    %253 = vmatprep.mubr.bf16.mxu0 0
    %254 = vmatmul.mubr.bf16.gmra.mxu0 %v124
    %v255 = vpop.f32.mrf.mxu0
    %v256 = vadd.f32 %v103, %v255
    %v257 = vpop.f32.mrf.mxu0
    %v258 = vadd.f32 %v107, %v257
    %v259 = vpop.f32.mrf.mxu0
    %v260 = vadd.f32 %v103, %v259
    %v261 = vpop.f32.mrf.mxu0
    %v262 = vadd.f32 %v107, %v261
    %263 = vmatprep.mubr.bf16.mxu0 0
    %264 = vmatmul.mubr.bf16.gmra.mxu0 %v127
    %v265 = vpop.f32.mrf.mxu0
    %v266 = vadd.f32 %v103, %v265
    %v267 = vpop.f32.mrf.mxu0
    %v268 = vadd.f32 %v107, %v267
    %v269 = vpop.f32.mrf.mxu0
    %v270 = vadd.f32 %v103, %v269
    %v271 = vpop.f32.mrf.mxu0
    %v272 = vadd.f32 %v107, %v271
    %273 = vmatprep.mubr.bf16.mxu0 0
    %274 = vmatmul.mubr.bf16.gmra.mxu0 %v130
    %v275 = vpop.f32.mrf.mxu0
    %v276 = vadd.f32 %v103, %v275
    %v277 = vpop.f32.mrf.mxu0
    %v278 = vadd.f32 %v107, %v277
    %v279 = vpop.f32.mrf.mxu0
    %v280 = vadd.f32 %v103, %v279
    %v281 = vpop.f32.mrf.mxu0
    %v282 = vadd.f32 %v107, %v281
    %283 = vmatprep.mubr.bf16.mxu0 0
    %284 = vmatmul.mubr.bf16.gmra.mxu0 %v133
    %v285 = vpop.f32.mrf.mxu0
    %v286 = vadd.f32 %v103, %v285
    %v287 = vpop.f32.mrf.mxu0
    %v288 = vadd.f32 %v107, %v287
    %v289 = vpop.f32.mrf.mxu0
    %v290 = vadd.f32 %v103, %v289
    %v291 = vpop.f32.mrf.mxu0
    %v292 = vadd.f32 %v107, %v291
    %293 = vdwg.mxu0
    %294 = vst [vmem:[#allocation2] sm:$0xff] %v183
    %295 = vst [vmem:[#allocation2 + $0x8] sm:$0xff] %v185
    %296 = vst [vmem:[#allocation2 + $0x10] sm:$0xff] %v256
    %297 = vst [vmem:[#allocation2 + $0x18] sm:$0xff] %v258
    %298 = vst [vmem:[#allocation2 + $0x20] sm:$0xff] %v187
    %299 = vst [vmem:[#allocation2 + $0x28] sm:$0xff] %v189
    %300 = vst [vmem:[#allocation2 + $0x30] sm:$0xff] %v260
    %301 = vst [vmem:[#allocation2 + $0x38] sm:$0xff] %v262
    %302 = vst [vmem:[#allocation2 + $0x40] sm:$0xff] %v193
    %303 = vst [vmem:[#allocation2 + $0x48] sm:$0xff] %v195
    %304 = vst [vmem:[#allocation2 + $0x50] sm:$0xff] %v266
    %305 = vst [vmem:[#allocation2 + $0x58] sm:$0xff] %v268
    %306 = vst [vmem:[#allocation2 + $0x60] sm:$0xff] %v197
    %307 = vst [vmem:[#allocation2 + $0x68] sm:$0xff] %v199
    %308 = vst [vmem:[#allocation2 + $0x70] sm:$0xff] %v270
    %309 = vst [vmem:[#allocation2 + $0x78] sm:$0xff] %v272
    %310 = vst [vmem:[#allocation2 + $0x80] sm:$0xff] %v203
    %311 = vst [vmem:[#allocation2 + $0x88] sm:$0xff] %v205
    %312 = vst [vmem:[#allocation2 + $0x90] sm:$0xff] %v276
    %313 = vst [vmem:[#allocation2 + $0x98] sm:$0xff] %v278
    %314 = vst [vmem:[#allocation2 + $0xa0] sm:$0xff] %v207
    %315 = vst [vmem:[#allocation2 + $0xa8] sm:$0xff] %v209
    %316 = vst [vmem:[#allocation2 + $0xb0] sm:$0xff] %v280
    %317 = vst [vmem:[#allocation2 + $0xb8] sm:$0xff] %v282
    %318 = vst [vmem:[#allocation2 + $0xc0] sm:$0xff] %v213
    %319 = vst [vmem:[#allocation2 + $0xc8] sm:$0xff] %v215
    %320 = vst [vmem:[#allocation2 + $0xd0] sm:$0xff] %v286
    %321 = vst [vmem:[#allocation2 + $0xd8] sm:$0xff] %v288
    %322 = vst [vmem:[#allocation2 + $0xe0] sm:$0xff] %v217
    %323 = vst [vmem:[#allocation2 + $0xe8] sm:$0xff] %v219
    %324 = vst [vmem:[#allocation2 + $0xf0] sm:$0xff] %v290
    %325 = vst [vmem:[#allocation2 + $0xf8] sm:$0xff] %v292
    %v326 = vld [vmem:[#allocation5] sm:$0xff]
    %v327 = vld [vmem:[#allocation5 + $0x8] sm:$0xff]
    %v328 = vld [vmem:[#allocation5 + $0x10] sm:$0xff]
    %v329 = vld [vmem:[#allocation5 + $0x18] sm:$0xff]
    %v330 = vld [vmem:[#allocation5 + $0x20] sm:$0xff]
    %v331 = vld [vmem:[#allocation5 + $0x28] sm:$0xff]
    %v332 = vld [vmem:[#allocation5 + $0x30] sm:$0xff]
    %v333 = vld [vmem:[#allocation5 + $0x38] sm:$0xff]
    %v334 = vld [vmem:[#allocation5 + $0x40] sm:$0xff]
    %v335 = vld [vmem:[#allocation5 + $0x48] sm:$0xff]
    %v336 = vld [vmem:[#allocation5 + $0x50] sm:$0xff]
    %v337 = vld [vmem:[#allocation5 + $0x58] sm:$0xff]
    %v338 = vld [vmem:[#allocation5 + $0x60] sm:$0xff]
    %v339 = vld [vmem:[#allocation5 + $0x68] sm:$0xff]
    %v340 = vld [vmem:[#allocation5 + $0x70] sm:$0xff]
    %v341 = vld [vmem:[#allocation5 + $0x78] sm:$0xff]
    %v342 = vld [vmem:[#allocation5 + $0x80] sm:$0xff]
    %v343 = vld [vmem:[#allocation5 + $0x88] sm:$0xff]
    %v344 = vld [vmem:[#allocation5 + $0x90] sm:$0xff]
    %v345 = vld [vmem:[#allocation5 + $0x98] sm:$0xff]
    %v346 = vld [vmem:[#allocation5 + $0xa0] sm:$0xff]
    %v347 = vld [vmem:[#allocation5 + $0xa8] sm:$0xff]
    %v348 = vld [vmem:[#allocation5 + $0xb0] sm:$0xff]
    %v349 = vld [vmem:[#allocation5 + $0xb8] sm:$0xff]
    %v350 = vld [vmem:[#allocation5 + $0xc0] sm:$0xff]
    %v351 = vld [vmem:[#allocation5 + $0xc8] sm:$0xff]
    %v352 = vld [vmem:[#allocation5 + $0xd0] sm:$0xff]
    %v353 = vld [vmem:[#allocation5 + $0xd8] sm:$0xff]
    %v354 = vld [vmem:[#allocation5 + $0xe0] sm:$0xff]
    %v355 = vld [vmem:[#allocation5 + $0xe8] sm:$0xff]
    %v356 = vld [vmem:[#allocation5 + $0xf0] sm:$0xff]
    %v357 = vld [vmem:[#allocation5 + $0xf8] sm:$0xff]
    %v358 = vld [vmem:[#allocation2] sm:$0xff]
    %v359 = vld [vmem:[#allocation2 + $0x8] sm:$0xff]
    %v360 = vld [vmem:[#allocation2 + $0x10] sm:$0xff]
    %v361 = vld [vmem:[#allocation2 + $0x18] sm:$0xff]
    %v394 = vunpack.c.l.b16 %v326
    %v395 = vunpack.c.h.b16 %v326
    %v396 = vunpack.c.l.b16 %v327
    %v397 = vunpack.c.h.b16 %v327
    %v398 = vunpack.c.l.b16 %v328
    %v399 = vunpack.c.h.b16 %v328
    %v400 = vunpack.c.l.b16 %v329
    %v401 = vunpack.c.h.b16 %v329
    %v402 = vunpack.c.l.b16 %v330
    %v403 = vunpack.c.h.b16 %v330
    %v404 = vunpack.c.l.b16 %v331
    %v405 = vunpack.c.h.b16 %v331
    %v406 = vunpack.c.l.b16 %v332
    %v407 = vunpack.c.h.b16 %v332
    %v408 = vunpack.c.l.b16 %v333
    %v409 = vunpack.c.h.b16 %v333
    %v410 = vunpack.c.l.b16 %v334
    %v411 = vunpack.c.h.b16 %v334
    %v412 = vunpack.c.l.b16 %v335
    %v413 = vunpack.c.h.b16 %v335
    %v414 = vunpack.c.l.b16 %v336
    %v415 = vunpack.c.h.b16 %v336
    %v416 = vunpack.c.l.b16 %v337
    %v417 = vunpack.c.h.b16 %v337
    %v418 = vunpack.c.l.b16 %v338
    %v419 = vunpack.c.h.b16 %v338
    %v420 = vunpack.c.l.b16 %v339
    %v421 = vunpack.c.h.b16 %v339
    %v422 = vunpack.c.l.b16 %v340
    %v423 = vunpack.c.h.b16 %v340
    %v424 = vunpack.c.l.b16 %v341
    %v425 = vunpack.c.h.b16 %v341
    %v426 = vunpack.c.l.b16 %v342
    %v427 = vunpack.c.h.b16 %v342
    %v428 = vunpack.c.l.b16 %v343
    %v429 = vunpack.c.h.b16 %v343
    %v430 = vunpack.c.l.b16 %v344
    %v431 = vunpack.c.h.b16 %v344
    %v432 = vunpack.c.l.b16 %v345
    %v433 = vunpack.c.h.b16 %v345
    %v434 = vunpack.c.l.b16 %v346
    %v435 = vunpack.c.h.b16 %v346
    %v436 = vunpack.c.l.b16 %v347
    %v437 = vunpack.c.h.b16 %v347
    %v438 = vunpack.c.l.b16 %v348
    %v439 = vunpack.c.h.b16 %v348
    %v440 = vunpack.c.l.b16 %v349
    %v441 = vunpack.c.h.b16 %v349
    %v442 = vunpack.c.l.b16 %v350
    %v443 = vunpack.c.h.b16 %v350
    %v444 = vunpack.c.l.b16 %v351
    %v445 = vunpack.c.h.b16 %v351
    %v446 = vunpack.c.l.b16 %v352
    %v447 = vunpack.c.h.b16 %v352
    %v448 = vunpack.c.l.b16 %v353
    %v449 = vunpack.c.h.b16 %v353
    %v450 = vunpack.c.l.b16 %v354
    %v451 = vunpack.c.h.b16 %v354
    %v452 = vunpack.c.l.b16 %v355
    %v453 = vunpack.c.h.b16 %v355
    %v454 = vunpack.c.l.b16 %v356
    %v455 = vunpack.c.h.b16 %v356
    %v456 = vunpack.c.l.b16 %v357
    %v457 = vunpack.c.h.b16 %v357
    %v458 = vpack.c.b16 %v398, %v394
    %v459 = vpack.c.b16 %v399, %v395
    %v460 = vpack.c.b16 %v400, %v396
    %v461 = vpack.c.b16 %v401, %v397
    %v462 = vpack.c.b16 %v406, %v402
    %v463 = vpack.c.b16 %v407, %v403
    %v464 = vpack.c.b16 %v408, %v404
    %v465 = vpack.c.b16 %v409, %v405
    %v466 = vpack.c.b16 %v414, %v410
    %v467 = vpack.c.b16 %v415, %v411
    %v468 = vpack.c.b16 %v416, %v412
    %v469 = vpack.c.b16 %v417, %v413
    %v470 = vpack.c.b16 %v422, %v418
    %v471 = vpack.c.b16 %v423, %v419
    %v472 = vpack.c.b16 %v424, %v420
    %v473 = vpack.c.b16 %v425, %v421
    %v474 = vpack.c.b16 %v430, %v426
    %v475 = vpack.c.b16 %v431, %v427
    %v476 = vpack.c.b16 %v432, %v428
    %v477 = vpack.c.b16 %v433, %v429
    %v478 = vpack.c.b16 %v438, %v434
    %v479 = vpack.c.b16 %v439, %v435
    %v480 = vpack.c.b16 %v440, %v436
    %v481 = vpack.c.b16 %v441, %v437
    %v482 = vpack.c.b16 %v446, %v442
    %v483 = vpack.c.b16 %v447, %v443
    %v484 = vpack.c.b16 %v448, %v444
    %v485 = vpack.c.b16 %v449, %v445
    %v486 = vpack.c.b16 %v454, %v450
    %v487 = vpack.c.b16 %v455, %v451
    %v488 = vpack.c.b16 %v456, %v452
    %v489 = vpack.c.b16 %v457, %v453
    %522 = vmatprep.subr.bf16.mxu0 %v487
    %523 = vmatpush1.bf16.msra.mxu0 %v486
    %524 = vmatprep.subr.bf16.mxu0 %v483
    %525 = vmatpush1.bf16.msra.mxu0 %v482
    %526 = vmatprep.subr.bf16.mxu0 %v479
    %527 = vmatpush1.bf16.msra.mxu0 %v478
    %528 = vmatprep.subr.bf16.mxu0 %v475
    %529 = vmatpush1.bf16.msra.mxu0 %v474
    %530 = vmatprep.subr.bf16.mxu0 %v471
    %531 = vmatpush1.bf16.msra.mxu0 %v470
    %532 = vmatprep.subr.bf16.mxu0 %v467
    %533 = vmatpush1.bf16.msra.mxu0 %v466
    %534 = vmatprep.subr.bf16.mxu0 %v463
    %535 = vmatpush1.bf16.msra.mxu0 %v462
    %536 = vmatprep.subr.bf16.mxu0 %v459
    %537 = vmatpush1.bf16.msra.mxu0 %v458
    %538 = vmatprep.subr.bf16.mxu0 0
    %539 = vmatpush2.bf16.msra.mxu0 0
    %540 = vmatprep.subr.bf16.mxu0 0
    %541 = vmatpush2.bf16.msra.mxu0 0
    %542 = vmatprep.subr.bf16.mxu0 0
    %543 = vmatpush2.bf16.msra.mxu0 0
    %544 = vmatprep.subr.bf16.mxu0 0
    %545 = vmatpush2.bf16.msra.mxu0 0
    %546 = vmatprep.subr.bf16.mxu0 0
    %547 = vmatpush2.bf16.msra.mxu0 0
    %548 = vmatprep.subr.bf16.mxu0 0
    %549 = vmatpush2.bf16.msra.mxu0 0
    %550 = vmatprep.subr.bf16.mxu0 0
    %551 = vmatpush2.bf16.msra.mxu0 0
    %552 = vmatprep.subr.bf16.mxu0 0
    %553 = vmatpush2.bf16.msra.mxu0 0
    %554 = vmatprep.mubr.bf16.mxu0 0
    %555 = vmatmul.mubr.bf16.gmra.mxu0 0
    %v556 = vpop.f32.mrf.mxu0
    %v557 = vadd.f32 0.0, %v556
    %v558 = vpop.f32.mrf.mxu0
    %v559 = vadd.f32 0.0, %v558
    %v560 = vpop.f32.mrf.mxu0
    %v561 = vpop.f32.mrf.mxu0
    %562 = vdwg.mxu0
    %563 = vmatprep.subr.bf16.mxu0 %v489
    %564 = vmatpush1.bf16.msra.mxu0 %v488
    %565 = vmatprep.subr.bf16.mxu0 %v485
    %566 = vmatpush1.bf16.msra.mxu0 %v484
    %567 = vmatprep.subr.bf16.mxu0 %v481
    %568 = vmatpush1.bf16.msra.mxu0 %v480
    %569 = vmatprep.subr.bf16.mxu0 %v477
    %570 = vmatpush1.bf16.msra.mxu0 %v476
    %571 = vmatprep.subr.bf16.mxu0 %v473
    %572 = vmatpush1.bf16.msra.mxu0 %v472
    %573 = vmatprep.subr.bf16.mxu0 %v469
    %574 = vmatpush1.bf16.msra.mxu0 %v468
    %575 = vmatprep.subr.bf16.mxu0 %v465
    %576 = vmatpush1.bf16.msra.mxu0 %v464
    %577 = vmatprep.subr.bf16.mxu0 %v461
    %578 = vmatpush1.bf16.msra.mxu0 %v460
    %579 = vmatprep.subr.bf16.mxu0 0
    %580 = vmatpush2.bf16.msra.mxu0 0
    %581 = vmatprep.subr.bf16.mxu0 0
    %582 = vmatpush2.bf16.msra.mxu0 0
    %583 = vmatprep.subr.bf16.mxu0 0
    %584 = vmatpush2.bf16.msra.mxu0 0
    %585 = vmatprep.subr.bf16.mxu0 0
    %586 = vmatpush2.bf16.msra.mxu0 0
    %587 = vmatprep.subr.bf16.mxu0 0
    %588 = vmatpush2.bf16.msra.mxu0 0
    %589 = vmatprep.subr.bf16.mxu0 0
    %590 = vmatpush2.bf16.msra.mxu0 0
    %591 = vmatprep.subr.bf16.mxu0 0
    %592 = vmatpush2.bf16.msra.mxu0 0
    %593 = vmatprep.subr.bf16.mxu0 0
    %594 = vmatpush2.bf16.msra.mxu0 0
    %595 = vmatprep.mubr.bf16.mxu0 0
    %596 = vmatmul.mubr.bf16.gmra.mxu0 0
    %v597 = vpop.f32.mrf.mxu0
    %v598 = vadd.f32 0.0, %v597
    %v599 = vpop.f32.mrf.mxu0
    %v600 = vadd.f32 0.0, %v599
    %v601 = vpop.f32.mrf.mxu0
    %v602 = vpop.f32.mrf.mxu0
    %603 = vdwg.mxu0
    %v604 = vadd.f32 %v358, %v557
    %v605 = vadd.f32 %v359, %v559
    %v606 = vadd.f32 %v360, %v598
    %v607 = vadd.f32 %v361, %v600
    %v608 = vxor.u32 %v604, 2147483648
    %v609 = vmul.f32 %v608, 1.442695
    %v610 = vpow.pop %v609
    %v611 = vadd.f32 %v610, 1.0
    %v612 = vrcp.pop %v611
    %v613 = vmul.f32 1.0, %v612
    %v614 = vxor.u32 %v605, 2147483648
    %v615 = vmul.f32 %v614, 1.442695
    %v616 = vpow.pop %v615
    %v617 = vadd.f32 %v616, 1.0
    %v618 = vrcp.pop %v617
    %v619 = vmul.f32 1.0, %v618
    %v620 = vtanh.pop %v606
    %v621 = vxor.u32 %v607, 2147483648
    %v622 = vmul.f32 %v621, 1.442695
    %v623 = vpow.pop %v622
    %v624 = vadd.f32 %v623, 1.0
    %v625 = vrcp.pop %v624
    %v626 = vmul.f32 1.0, %v625
    %v627 = vmul.f32 %v619, 0.0
    %v628 = vmul.f32 %v613, %v620
    %v629 = vadd.f32 %v627, %v628
    %v630 = vtanh.pop %v629
    %v631 = vmul.f32 %v626, %v630
    %632 = vst [vmem:[#allocation3] sm:$0xff] %v631
    %v633 = vld [vmem:[#allocation2 + $0x20] sm:$0xff]
    %v634 = vld [vmem:[#allocation2 + $0x28] sm:$0xff]
    %v635 = vld [vmem:[#allocation2 + $0x30] sm:$0xff]
    %v636 = vld [vmem:[#allocation2 + $0x38] sm:$0xff]
    %v637 = vpack.c.bf16 %v631, %v631
    %638 = vmatprep.subr.bf16.mxu0 %v487
    %639 = vmatpush1.bf16.msra.mxu0 %v486
    %640 = vmatprep.subr.bf16.mxu0 %v483
    %641 = vmatpush1.bf16.msra.mxu0 %v482
    %642 = vmatprep.subr.bf16.mxu0 %v479
    %643 = vmatpush1.bf16.msra.mxu0 %v478
    %644 = vmatprep.subr.bf16.mxu0 %v475
    %645 = vmatpush1.bf16.msra.mxu0 %v474
    %646 = vmatprep.subr.bf16.mxu0 %v471
    %647 = vmatpush1.bf16.msra.mxu0 %v470
    %648 = vmatprep.subr.bf16.mxu0 %v467
    %649 = vmatpush1.bf16.msra.mxu0 %v466
    %650 = vmatprep.subr.bf16.mxu0 %v463
    %651 = vmatpush1.bf16.msra.mxu0 %v462
    %652 = vmatprep.subr.bf16.mxu0 %v459
    %653 = vmatpush1.bf16.msra.mxu0 %v458
    %654 = vmatprep.subr.bf16.mxu0 0
    %655 = vmatpush2.bf16.msra.mxu0 0
    %656 = vmatprep.subr.bf16.mxu0 0
    %657 = vmatpush2.bf16.msra.mxu0 0
    %658 = vmatprep.subr.bf16.mxu0 0
    %659 = vmatpush2.bf16.msra.mxu0 0
    %660 = vmatprep.subr.bf16.mxu0 0
    %661 = vmatpush2.bf16.msra.mxu0 0
    %662 = vmatprep.subr.bf16.mxu0 0
    %663 = vmatpush2.bf16.msra.mxu0 0
    %664 = vmatprep.subr.bf16.mxu0 0
    %665 = vmatpush2.bf16.msra.mxu0 0
    %666 = vmatprep.subr.bf16.mxu0 0
    %667 = vmatpush2.bf16.msra.mxu0 0
    %668 = vmatprep.subr.bf16.mxu0 0
    %669 = vmatpush2.bf16.msra.mxu0 0
    %670 = vmatprep.mubr.bf16.mxu0 0
    %671 = vmatmul.mubr.bf16.gmra.mxu0 %v637
    %v672 = vpop.f32.mrf.mxu0
    %v673 = vadd.f32 0.0, %v672
    %v674 = vpop.f32.mrf.mxu0
    %v675 = vadd.f32 0.0, %v674
    %v676 = vpop.f32.mrf.mxu0
    %v677 = vpop.f32.mrf.mxu0
    %678 = vdwg.mxu0
    %679 = vmatprep.subr.bf16.mxu0 %v489
    %680 = vmatpush1.bf16.msra.mxu0 %v488
    %681 = vmatprep.subr.bf16.mxu0 %v485
    %682 = vmatpush1.bf16.msra.mxu0 %v484
    %683 = vmatprep.subr.bf16.mxu0 %v481
    %684 = vmatpush1.bf16.msra.mxu0 %v480
    %685 = vmatprep.subr.bf16.mxu0 %v477
    %686 = vmatpush1.bf16.msra.mxu0 %v476
    %687 = vmatprep.subr.bf16.mxu0 %v473
    %688 = vmatpush1.bf16.msra.mxu0 %v472
    %689 = vmatprep.subr.bf16.mxu0 %v469
    %690 = vmatpush1.bf16.msra.mxu0 %v468
    %691 = vmatprep.subr.bf16.mxu0 %v465
    %692 = vmatpush1.bf16.msra.mxu0 %v464
    %693 = vmatprep.subr.bf16.mxu0 %v461
    %694 = vmatpush1.bf16.msra.mxu0 %v460
    %695 = vmatprep.subr.bf16.mxu0 0
    %696 = vmatpush2.bf16.msra.mxu0 0
    %697 = vmatprep.subr.bf16.mxu0 0
    %698 = vmatpush2.bf16.msra.mxu0 0
    %699 = vmatprep.subr.bf16.mxu0 0
    %700 = vmatpush2.bf16.msra.mxu0 0
    %701 = vmatprep.subr.bf16.mxu0 0
    %702 = vmatpush2.bf16.msra.mxu0 0
    %703 = vmatprep.subr.bf16.mxu0 0
    %704 = vmatpush2.bf16.msra.mxu0 0
    %705 = vmatprep.subr.bf16.mxu0 0
    %706 = vmatpush2.bf16.msra.mxu0 0
    %707 = vmatprep.subr.bf16.mxu0 0
    %708 = vmatpush2.bf16.msra.mxu0 0
    %709 = vmatprep.subr.bf16.mxu0 0
    %710 = vmatpush2.bf16.msra.mxu0 0
    %711 = vmatprep.mubr.bf16.mxu0 0
    %712 = vmatmul.mubr.bf16.gmra.mxu0 %v637
    %v713 = vpop.f32.mrf.mxu0
    %v714 = vadd.f32 0.0, %v713
    %v715 = vpop.f32.mrf.mxu0
    %v716 = vadd.f32 0.0, %v715
    %v717 = vpop.f32.mrf.mxu0
    %v718 = vpop.f32.mrf.mxu0
    %719 = vdwg.mxu0
    %v720 = vadd.f32 %v633, %v673
    %v721 = vadd.f32 %v634, %v675
    %v722 = vadd.f32 %v635, %v714
    %v723 = vadd.f32 %v636, %v716
    %v724 = vxor.u32 %v720, 2147483648
    %v725 = vmul.f32 %v724, 1.442695
    %v726 = vpow.pop %v725
    %v727 = vadd.f32 %v726, 1.0
    %v728 = vrcp.pop %v727
    %v729 = vmul.f32 1.0, %v728
    %v730 = vxor.u32 %v721, 2147483648
    %v731 = vmul.f32 %v730, 1.442695
    %v732 = vpow.pop %v731
    %v733 = vadd.f32 %v732, 1.0
    %v734 = vrcp.pop %v733
    %v735 = vmul.f32 1.0, %v734
    %v736 = vtanh.pop %v722
    %v737 = vxor.u32 %v723, 2147483648
    %v738 = vmul.f32 %v737, 1.442695
    %v739 = vpow.pop %v738
    %v740 = vadd.f32 %v739, 1.0
    %v741 = vrcp.pop %v740
    %v742 = vmul.f32 1.0, %v741
    %v743 = vmul.f32 %v735, %v629
    %v744 = vmul.f32 %v729, %v736
    %v745 = vadd.f32 %v743, %v744
    %v746 = vtanh.pop %v745
    %v747 = vmul.f32 %v742, %v746
    %748 = vst [vmem:[#allocation3 + $0x8] sm:$0xff] %v747
    %v749 = vld [vmem:[#allocation2 + $0x40] sm:$0xff]
    %v750 = vld [vmem:[#allocation2 + $0x48] sm:$0xff]
    %v751 = vld [vmem:[#allocation2 + $0x50] sm:$0xff]
    %v752 = vld [vmem:[#allocation2 + $0x58] sm:$0xff]
    %v753 = vpack.c.bf16 %v747, %v747
    %754 = vmatprep.subr.bf16.mxu0 %v487
    %755 = vmatpush1.bf16.msra.mxu0 %v486
    %756 = vmatprep.subr.bf16.mxu0 %v483
    %757 = vmatpush1.bf16.msra.mxu0 %v482
    %758 = vmatprep.subr.bf16.mxu0 %v479
    %759 = vmatpush1.bf16.msra.mxu0 %v478
    %760 = vmatprep.subr.bf16.mxu0 %v475
    %761 = vmatpush1.bf16.msra.mxu0 %v474
    %762 = vmatprep.subr.bf16.mxu0 %v471
    %763 = vmatpush1.bf16.msra.mxu0 %v470
    %764 = vmatprep.subr.bf16.mxu0 %v467
    %765 = vmatpush1.bf16.msra.mxu0 %v466
    %766 = vmatprep.subr.bf16.mxu0 %v463
    %767 = vmatpush1.bf16.msra.mxu0 %v462
    %768 = vmatprep.subr.bf16.mxu0 %v459
    %769 = vmatpush1.bf16.msra.mxu0 %v458
    %770 = vmatprep.subr.bf16.mxu0 0
    %771 = vmatpush2.bf16.msra.mxu0 0
    %772 = vmatprep.subr.bf16.mxu0 0
    %773 = vmatpush2.bf16.msra.mxu0 0
    %774 = vmatprep.subr.bf16.mxu0 0
    %775 = vmatpush2.bf16.msra.mxu0 0
    %776 = vmatprep.subr.bf16.mxu0 0
    %777 = vmatpush2.bf16.msra.mxu0 0
    %778 = vmatprep.subr.bf16.mxu0 0
    %779 = vmatpush2.bf16.msra.mxu0 0
    %780 = vmatprep.subr.bf16.mxu0 0
    %781 = vmatpush2.bf16.msra.mxu0 0
    %782 = vmatprep.subr.bf16.mxu0 0
    %783 = vmatpush2.bf16.msra.mxu0 0
    %784 = vmatprep.subr.bf16.mxu0 0
    %785 = vmatpush2.bf16.msra.mxu0 0
    %786 = vmatprep.mubr.bf16.mxu0 0
    %787 = vmatmul.mubr.bf16.gmra.mxu0 %v753
    %v788 = vpop.f32.mrf.mxu0
    %v789 = vadd.f32 0.0, %v788
    %v790 = vpop.f32.mrf.mxu0
    %v791 = vadd.f32 0.0, %v790
    %v792 = vpop.f32.mrf.mxu0
    %v793 = vpop.f32.mrf.mxu0
    %794 = vdwg.mxu0
    %795 = vmatprep.subr.bf16.mxu0 %v489
    %796 = vmatpush1.bf16.msra.mxu0 %v488
    %797 = vmatprep.subr.bf16.mxu0 %v485
    %798 = vmatpush1.bf16.msra.mxu0 %v484
    %799 = vmatprep.subr.bf16.mxu0 %v481
    %800 = vmatpush1.bf16.msra.mxu0 %v480
    %801 = vmatprep.subr.bf16.mxu0 %v477
    %802 = vmatpush1.bf16.msra.mxu0 %v476
    %803 = vmatprep.subr.bf16.mxu0 %v473
    %804 = vmatpush1.bf16.msra.mxu0 %v472
    %805 = vmatprep.subr.bf16.mxu0 %v469
    %806 = vmatpush1.bf16.msra.mxu0 %v468
    %807 = vmatprep.subr.bf16.mxu0 %v465
    %808 = vmatpush1.bf16.msra.mxu0 %v464
    %809 = vmatprep.subr.bf16.mxu0 %v461
    %810 = vmatpush1.bf16.msra.mxu0 %v460
    %811 = vmatprep.subr.bf16.mxu0 0
    %812 = vmatpush2.bf16.msra.mxu0 0
    %813 = vmatprep.subr.bf16.mxu0 0
    %814 = vmatpush2.bf16.msra.mxu0 0
    %815 = vmatprep.subr.bf16.mxu0 0
    %816 = vmatpush2.bf16.msra.mxu0 0
    %817 = vmatprep.subr.bf16.mxu0 0
    %818 = vmatpush2.bf16.msra.mxu0 0
    %819 = vmatprep.subr.bf16.mxu0 0
    %820 = vmatpush2.bf16.msra.mxu0 0
    %821 = vmatprep.subr.bf16.mxu0 0
    %822 = vmatpush2.bf16.msra.mxu0 0
    %823 = vmatprep.subr.bf16.mxu0 0
    %824 = vmatpush2.bf16.msra.mxu0 0
    %825 = vmatprep.subr.bf16.mxu0 0
    %826 = vmatpush2.bf16.msra.mxu0 0
    %827 = vmatprep.mubr.bf16.mxu0 0
    %828 = vmatmul.mubr.bf16.gmra.mxu0 %v753
    %v829 = vpop.f32.mrf.mxu0
    %v830 = vadd.f32 0.0, %v829
    %v831 = vpop.f32.mrf.mxu0
    %v832 = vadd.f32 0.0, %v831
    %v833 = vpop.f32.mrf.mxu0
    %v834 = vpop.f32.mrf.mxu0
    %835 = vdwg.mxu0
    %v836 = vadd.f32 %v749, %v789
    %v837 = vadd.f32 %v750, %v791
    %v838 = vadd.f32 %v751, %v830
    %v839 = vadd.f32 %v752, %v832
    %v840 = vxor.u32 %v836, 2147483648
    %v841 = vmul.f32 %v840, 1.442695
    %v842 = vpow.pop %v841
    %v843 = vadd.f32 %v842, 1.0
    %v844 = vrcp.pop %v843
    %v845 = vmul.f32 1.0, %v844
    %v846 = vxor.u32 %v837, 2147483648
    %v847 = vmul.f32 %v846, 1.442695
    %v848 = vpow.pop %v847
    %v849 = vadd.f32 %v848, 1.0
    %v850 = vrcp.pop %v849
    %v851 = vmul.f32 1.0, %v850
    %v852 = vtanh.pop %v838
    %v853 = vxor.u32 %v839, 2147483648
    %v854 = vmul.f32 %v853, 1.442695
    %v855 = vpow.pop %v854
    %v856 = vadd.f32 %v855, 1.0
    %v857 = vrcp.pop %v856
    %v858 = vmul.f32 1.0, %v857
    %v859 = vmul.f32 %v851, %v745
    %v860 = vmul.f32 %v845, %v852
    %v861 = vadd.f32 %v859, %v860
    %v862 = vtanh.pop %v861
    %v863 = vmul.f32 %v858, %v862
    %864 = vst [vmem:[#allocation3 + $0x10] sm:$0xff] %v863
    %v865 = vld [vmem:[#allocation2 + $0x60] sm:$0xff]
    %v866 = vld [vmem:[#allocation2 + $0x68] sm:$0xff]
    %v867 = vld [vmem:[#allocation2 + $0x70] sm:$0xff]
    %v868 = vld [vmem:[#allocation2 + $0x78] sm:$0xff]
    %v869 = vpack.c.bf16 %v863, %v863
    %870 = vmatprep.subr.bf16.mxu0 %v487
    %871 = vmatpush1.bf16.msra.mxu0 %v486
    %872 = vmatprep.subr.bf16.mxu0 %v483
    %873 = vmatpush1.bf16.msra.mxu0 %v482
    %874 = vmatprep.subr.bf16.mxu0 %v479
    %875 = vmatpush1.bf16.msra.mxu0 %v478
    %876 = vmatprep.subr.bf16.mxu0 %v475
    %877 = vmatpush1.bf16.msra.mxu0 %v474
    %878 = vmatprep.subr.bf16.mxu0 %v471
    %879 = vmatpush1.bf16.msra.mxu0 %v470
    %880 = vmatprep.subr.bf16.mxu0 %v467
    %881 = vmatpush1.bf16.msra.mxu0 %v466
    %882 = vmatprep.subr.bf16.mxu0 %v463
    %883 = vmatpush1.bf16.msra.mxu0 %v462
    %884 = vmatprep.subr.bf16.mxu0 %v459
    %885 = vmatpush1.bf16.msra.mxu0 %v458
    %886 = vmatprep.subr.bf16.mxu0 0
    %887 = vmatpush2.bf16.msra.mxu0 0
    %888 = vmatprep.subr.bf16.mxu0 0
    %889 = vmatpush2.bf16.msra.mxu0 0
    %890 = vmatprep.subr.bf16.mxu0 0
    %891 = vmatpush2.bf16.msra.mxu0 0
    %892 = vmatprep.subr.bf16.mxu0 0
    %893 = vmatpush2.bf16.msra.mxu0 0
    %894 = vmatprep.subr.bf16.mxu0 0
    %895 = vmatpush2.bf16.msra.mxu0 0
    %896 = vmatprep.subr.bf16.mxu0 0
    %897 = vmatpush2.bf16.msra.mxu0 0
    %898 = vmatprep.subr.bf16.mxu0 0
    %899 = vmatpush2.bf16.msra.mxu0 0
    %900 = vmatprep.subr.bf16.mxu0 0
    %901 = vmatpush2.bf16.msra.mxu0 0
    %902 = vmatprep.mubr.bf16.mxu0 0
    %903 = vmatmul.mubr.bf16.gmra.mxu0 %v869
    %v904 = vpop.f32.mrf.mxu0
    %v905 = vadd.f32 0.0, %v904
    %v906 = vpop.f32.mrf.mxu0
    %v907 = vadd.f32 0.0, %v906
    %v908 = vpop.f32.mrf.mxu0
    %v909 = vpop.f32.mrf.mxu0
    %910 = vdwg.mxu0
    %911 = vmatprep.subr.bf16.mxu0 %v489
    %912 = vmatpush1.bf16.msra.mxu0 %v488
    %913 = vmatprep.subr.bf16.mxu0 %v485
    %914 = vmatpush1.bf16.msra.mxu0 %v484
    %915 = vmatprep.subr.bf16.mxu0 %v481
    %916 = vmatpush1.bf16.msra.mxu0 %v480
    %917 = vmatprep.subr.bf16.mxu0 %v477
    %918 = vmatpush1.bf16.msra.mxu0 %v476
    %919 = vmatprep.subr.bf16.mxu0 %v473
    %920 = vmatpush1.bf16.msra.mxu0 %v472
    %921 = vmatprep.subr.bf16.mxu0 %v469
    %922 = vmatpush1.bf16.msra.mxu0 %v468
    %923 = vmatprep.subr.bf16.mxu0 %v465
    %924 = vmatpush1.bf16.msra.mxu0 %v464
    %925 = vmatprep.subr.bf16.mxu0 %v461
    %926 = vmatpush1.bf16.msra.mxu0 %v460
    %927 = vmatprep.subr.bf16.mxu0 0
    %928 = vmatpush2.bf16.msra.mxu0 0
    %929 = vmatprep.subr.bf16.mxu0 0
    %930 = vmatpush2.bf16.msra.mxu0 0
    %931 = vmatprep.subr.bf16.mxu0 0
    %932 = vmatpush2.bf16.msra.mxu0 0
    %933 = vmatprep.subr.bf16.mxu0 0
    %934 = vmatpush2.bf16.msra.mxu0 0
    %935 = vmatprep.subr.bf16.mxu0 0
    %936 = vmatpush2.bf16.msra.mxu0 0
    %937 = vmatprep.subr.bf16.mxu0 0
    %938 = vmatpush2.bf16.msra.mxu0 0
    %939 = vmatprep.subr.bf16.mxu0 0
    %940 = vmatpush2.bf16.msra.mxu0 0
    %941 = vmatprep.subr.bf16.mxu0 0
    %942 = vmatpush2.bf16.msra.mxu0 0
    %943 = vmatprep.mubr.bf16.mxu0 0
    %944 = vmatmul.mubr.bf16.gmra.mxu0 %v869
    %v945 = vpop.f32.mrf.mxu0
    %v946 = vadd.f32 0.0, %v945
    %v947 = vpop.f32.mrf.mxu0
    %v948 = vadd.f32 0.0, %v947
    %v949 = vpop.f32.mrf.mxu0
    %v950 = vpop.f32.mrf.mxu0
    %951 = vdwg.mxu0
    %v952 = vadd.f32 %v865, %v905
    %v953 = vadd.f32 %v866, %v907
    %v954 = vadd.f32 %v867, %v946
    %v955 = vadd.f32 %v868, %v948
    %v956 = vxor.u32 %v952, 2147483648
    %v957 = vmul.f32 %v956, 1.442695
    %v958 = vpow.pop %v957
    %v959 = vadd.f32 %v958, 1.0
    %v960 = vrcp.pop %v959
    %v961 = vmul.f32 1.0, %v960
    %v962 = vxor.u32 %v953, 2147483648
    %v963 = vmul.f32 %v962, 1.442695
    %v964 = vpow.pop %v963
    %v965 = vadd.f32 %v964, 1.0
    %v966 = vrcp.pop %v965
    %v967 = vmul.f32 1.0, %v966
    %v968 = vtanh.pop %v954
    %v969 = vxor.u32 %v955, 2147483648
    %v970 = vmul.f32 %v969, 1.442695
    %v971 = vpow.pop %v970
    %v972 = vadd.f32 %v971, 1.0
    %v973 = vrcp.pop %v972
    %v974 = vmul.f32 1.0, %v973
    %v975 = vmul.f32 %v967, %v861
    %v976 = vmul.f32 %v961, %v968
    %v977 = vadd.f32 %v975, %v976
    %v978 = vtanh.pop %v977
    %v979 = vmul.f32 %v974, %v978
    %980 = vst [vmem:[#allocation3 + $0x18] sm:$0xff] %v979
    %v981 = vld [vmem:[#allocation2 + $0x80] sm:$0xff]
    %v982 = vld [vmem:[#allocation2 + $0x88] sm:$0xff]
    %v983 = vld [vmem:[#allocation2 + $0x90] sm:$0xff]
    %v984 = vld [vmem:[#allocation2 + $0x98] sm:$0xff]
    %v985 = vpack.c.bf16 %v979, %v979
    %986 = vmatprep.subr.bf16.mxu0 %v487
    %987 = vmatpush1.bf16.msra.mxu0 %v486
    %988 = vmatprep.subr.bf16.mxu0 %v483
    %989 = vmatpush1.bf16.msra.mxu0 %v482
    %990 = vmatprep.subr.bf16.mxu0 %v479
    %991 = vmatpush1.bf16.msra.mxu0 %v478
    %992 = vmatprep.subr.bf16.mxu0 %v475
    %993 = vmatpush1.bf16.msra.mxu0 %v474
    %994 = vmatprep.subr.bf16.mxu0 %v471
    %995 = vmatpush1.bf16.msra.mxu0 %v470
    %996 = vmatprep.subr.bf16.mxu0 %v467
    %997 = vmatpush1.bf16.msra.mxu0 %v466
    %998 = vmatprep.subr.bf16.mxu0 %v463
    %999 = vmatpush1.bf16.msra.mxu0 %v462
    %1000 = vmatprep.subr.bf16.mxu0 %v459
    %1001 = vmatpush1.bf16.msra.mxu0 %v458
    %1002 = vmatprep.subr.bf16.mxu0 0
    %1003 = vmatpush2.bf16.msra.mxu0 0
    %1004 = vmatprep.subr.bf16.mxu0 0
    %1005 = vmatpush2.bf16.msra.mxu0 0
    %1006 = vmatprep.subr.bf16.mxu0 0
    %1007 = vmatpush2.bf16.msra.mxu0 0
    %1008 = vmatprep.subr.bf16.mxu0 0
    %1009 = vmatpush2.bf16.msra.mxu0 0
    %1010 = vmatprep.subr.bf16.mxu0 0
    %1011 = vmatpush2.bf16.msra.mxu0 0
    %1012 = vmatprep.subr.bf16.mxu0 0
    %1013 = vmatpush2.bf16.msra.mxu0 0
    %1014 = vmatprep.subr.bf16.mxu0 0
    %1015 = vmatpush2.bf16.msra.mxu0 0
    %1016 = vmatprep.subr.bf16.mxu0 0
    %1017 = vmatpush2.bf16.msra.mxu0 0
    %1018 = vmatprep.mubr.bf16.mxu0 0
    %1019 = vmatmul.mubr.bf16.gmra.mxu0 %v985
    %v1020 = vpop.f32.mrf.mxu0
    %v1021 = vadd.f32 0.0, %v1020
    %v1022 = vpop.f32.mrf.mxu0
    %v1023 = vadd.f32 0.0, %v1022
    %v1024 = vpop.f32.mrf.mxu0
    %v1025 = vpop.f32.mrf.mxu0
    %1026 = vdwg.mxu0
    %1027 = vmatprep.subr.bf16.mxu0 %v489
    %1028 = vmatpush1.bf16.msra.mxu0 %v488
    %1029 = vmatprep.subr.bf16.mxu0 %v485
    %1030 = vmatpush1.bf16.msra.mxu0 %v484
    %1031 = vmatprep.subr.bf16.mxu0 %v481
    %1032 = vmatpush1.bf16.msra.mxu0 %v480
    %1033 = vmatprep.subr.bf16.mxu0 %v477
    %1034 = vmatpush1.bf16.msra.mxu0 %v476
    %1035 = vmatprep.subr.bf16.mxu0 %v473
    %1036 = vmatpush1.bf16.msra.mxu0 %v472
    %1037 = vmatprep.subr.bf16.mxu0 %v469
    %1038 = vmatpush1.bf16.msra.mxu0 %v468
    %1039 = vmatprep.subr.bf16.mxu0 %v465
    %1040 = vmatpush1.bf16.msra.mxu0 %v464
    %1041 = vmatprep.subr.bf16.mxu0 %v461
    %1042 = vmatpush1.bf16.msra.mxu0 %v460
    %1043 = vmatprep.subr.bf16.mxu0 0
    %1044 = vmatpush2.bf16.msra.mxu0 0
    %1045 = vmatprep.subr.bf16.mxu0 0
    %1046 = vmatpush2.bf16.msra.mxu0 0
    %1047 = vmatprep.subr.bf16.mxu0 0
    %1048 = vmatpush2.bf16.msra.mxu0 0
    %1049 = vmatprep.subr.bf16.mxu0 0
    %1050 = vmatpush2.bf16.msra.mxu0 0
    %1051 = vmatprep.subr.bf16.mxu0 0
    %1052 = vmatpush2.bf16.msra.mxu0 0
    %1053 = vmatprep.subr.bf16.mxu0 0
    %1054 = vmatpush2.bf16.msra.mxu0 0
    %1055 = vmatprep.subr.bf16.mxu0 0
    %1056 = vmatpush2.bf16.msra.mxu0 0
    %1057 = vmatprep.subr.bf16.mxu0 0
    %1058 = vmatpush2.bf16.msra.mxu0 0
    %1059 = vmatprep.mubr.bf16.mxu0 0
    %1060 = vmatmul.mubr.bf16.gmra.mxu0 %v985
    %v1061 = vpop.f32.mrf.mxu0
    %v1062 = vadd.f32 0.0, %v1061
    %v1063 = vpop.f32.mrf.mxu0
    %v1064 = vadd.f32 0.0, %v1063
    %v1065 = vpop.f32.mrf.mxu0
    %v1066 = vpop.f32.mrf.mxu0
    %1067 = vdwg.mxu0
    %v1068 = vadd.f32 %v981, %v1021
    %v1069 = vadd.f32 %v982, %v1023
    %v1070 = vadd.f32 %v983, %v1062
    %v1071 = vadd.f32 %v984, %v1064
    %v1072 = vxor.u32 %v1068, 2147483648
    %v1073 = vmul.f32 %v1072, 1.442695
    %v1074 = vpow.pop %v1073
    %v1075 = vadd.f32 %v1074, 1.0
    %v1076 = vrcp.pop %v1075
    %v1077 = vmul.f32 1.0, %v1076
    %v1078 = vxor.u32 %v1069, 2147483648
    %v1079 = vmul.f32 %v1078, 1.442695
    %v1080 = vpow.pop %v1079
    %v1081 = vadd.f32 %v1080, 1.0
    %v1082 = vrcp.pop %v1081
    %v1083 = vmul.f32 1.0, %v1082
    %v1084 = vtanh.pop %v1070
    %v1085 = vxor.u32 %v1071, 2147483648
    %v1086 = vmul.f32 %v1085, 1.442695
    %v1087 = vpow.pop %v1086
    %v1088 = vadd.f32 %v1087, 1.0
    %v1089 = vrcp.pop %v1088
    %v1090 = vmul.f32 1.0, %v1089
    %v1091 = vmul.f32 %v1083, %v977
    %v1092 = vmul.f32 %v1077, %v1084
    %v1093 = vadd.f32 %v1091, %v1092
    %v1094 = vtanh.pop %v1093
    %v1095 = vmul.f32 %v1090, %v1094
    %1096 = vst [vmem:[#allocation3 + $0x20] sm:$0xff] %v1095
    %v1097 = vld [vmem:[#allocation2 + $0xa0] sm:$0xff]
    %v1098 = vld [vmem:[#allocation2 + $0xa8] sm:$0xff]
    %v1099 = vld [vmem:[#allocation2 + $0xb0] sm:$0xff]
    %v1100 = vld [vmem:[#allocation2 + $0xb8] sm:$0xff]
    %v1101 = vpack.c.bf16 %v1095, %v1095
    %1102 = vmatprep.subr.bf16.mxu0 %v487
    %1103 = vmatpush1.bf16.msra.mxu0 %v486
    %1104 = vmatprep.subr.bf16.mxu0 %v483
    %1105 = vmatpush1.bf16.msra.mxu0 %v482
    %1106 = vmatprep.subr.bf16.mxu0 %v479
    %1107 = vmatpush1.bf16.msra.mxu0 %v478
    %1108 = vmatprep.subr.bf16.mxu0 %v475
    %1109 = vmatpush1.bf16.msra.mxu0 %v474
    %1110 = vmatprep.subr.bf16.mxu0 %v471
    %1111 = vmatpush1.bf16.msra.mxu0 %v470
    %1112 = vmatprep.subr.bf16.mxu0 %v467
    %1113 = vmatpush1.bf16.msra.mxu0 %v466
    %1114 = vmatprep.subr.bf16.mxu0 %v463
    %1115 = vmatpush1.bf16.msra.mxu0 %v462
    %1116 = vmatprep.subr.bf16.mxu0 %v459
    %1117 = vmatpush1.bf16.msra.mxu0 %v458
    %1118 = vmatprep.subr.bf16.mxu0 0
    %1119 = vmatpush2.bf16.msra.mxu0 0
    %1120 = vmatprep.subr.bf16.mxu0 0
    %1121 = vmatpush2.bf16.msra.mxu0 0
    %1122 = vmatprep.subr.bf16.mxu0 0
    %1123 = vmatpush2.bf16.msra.mxu0 0
    %1124 = vmatprep.subr.bf16.mxu0 0
    %1125 = vmatpush2.bf16.msra.mxu0 0
    %1126 = vmatprep.subr.bf16.mxu0 0
    %1127 = vmatpush2.bf16.msra.mxu0 0
    %1128 = vmatprep.subr.bf16.mxu0 0
    %1129 = vmatpush2.bf16.msra.mxu0 0
    %1130 = vmatprep.subr.bf16.mxu0 0
    %1131 = vmatpush2.bf16.msra.mxu0 0
    %1132 = vmatprep.subr.bf16.mxu0 0
    %1133 = vmatpush2.bf16.msra.mxu0 0
    %1134 = vmatprep.mubr.bf16.mxu0 0
    %1135 = vmatmul.mubr.bf16.gmra.mxu0 %v1101
    %v1136 = vpop.f32.mrf.mxu0
    %v1137 = vadd.f32 0.0, %v1136
    %v1138 = vpop.f32.mrf.mxu0
    %v1139 = vadd.f32 0.0, %v1138
    %v1140 = vpop.f32.mrf.mxu0
    %v1141 = vpop.f32.mrf.mxu0
    %1142 = vdwg.mxu0
    %1143 = vmatprep.subr.bf16.mxu0 %v489
    %1144 = vmatpush1.bf16.msra.mxu0 %v488
    %1145 = vmatprep.subr.bf16.mxu0 %v485
    %1146 = vmatpush1.bf16.msra.mxu0 %v484
    %1147 = vmatprep.subr.bf16.mxu0 %v481
    %1148 = vmatpush1.bf16.msra.mxu0 %v480
    %1149 = vmatprep.subr.bf16.mxu0 %v477
    %1150 = vmatpush1.bf16.msra.mxu0 %v476
    %1151 = vmatprep.subr.bf16.mxu0 %v473
    %1152 = vmatpush1.bf16.msra.mxu0 %v472
    %1153 = vmatprep.subr.bf16.mxu0 %v469
    %1154 = vmatpush1.bf16.msra.mxu0 %v468
    %1155 = vmatprep.subr.bf16.mxu0 %v465
    %1156 = vmatpush1.bf16.msra.mxu0 %v464
    %1157 = vmatprep.subr.bf16.mxu0 %v461
    %1158 = vmatpush1.bf16.msra.mxu0 %v460
    %1159 = vmatprep.subr.bf16.mxu0 0
    %1160 = vmatpush2.bf16.msra.mxu0 0
    %1161 = vmatprep.subr.bf16.mxu0 0
    %1162 = vmatpush2.bf16.msra.mxu0 0
    %1163 = vmatprep.subr.bf16.mxu0 0
    %1164 = vmatpush2.bf16.msra.mxu0 0
    %1165 = vmatprep.subr.bf16.mxu0 0
    %1166 = vmatpush2.bf16.msra.mxu0 0
    %1167 = vmatprep.subr.bf16.mxu0 0
    %1168 = vmatpush2.bf16.msra.mxu0 0
    %1169 = vmatprep.subr.bf16.mxu0 0
    %1170 = vmatpush2.bf16.msra.mxu0 0
    %1171 = vmatprep.subr.bf16.mxu0 0
    %1172 = vmatpush2.bf16.msra.mxu0 0
    %1173 = vmatprep.subr.bf16.mxu0 0
    %1174 = vmatpush2.bf16.msra.mxu0 0
    %1175 = vmatprep.mubr.bf16.mxu0 0
    %1176 = vmatmul.mubr.bf16.gmra.mxu0 %v1101
    %v1177 = vpop.f32.mrf.mxu0
    %v1178 = vadd.f32 0.0, %v1177
    %v1179 = vpop.f32.mrf.mxu0
    %v1180 = vadd.f32 0.0, %v1179
    %v1181 = vpop.f32.mrf.mxu0
    %v1182 = vpop.f32.mrf.mxu0
    %1183 = vdwg.mxu0
    %v1184 = vadd.f32 %v1097, %v1137
    %v1185 = vadd.f32 %v1098, %v1139
    %v1186 = vadd.f32 %v1099, %v1178
    %v1187 = vadd.f32 %v1100, %v1180
    %v1188 = vxor.u32 %v1184, 2147483648
    %v1189 = vmul.f32 %v1188, 1.442695
    %v1190 = vpow.pop %v1189
    %v1191 = vadd.f32 %v1190, 1.0
    %v1192 = vrcp.pop %v1191
    %v1193 = vmul.f32 1.0, %v1192
    %v1194 = vxor.u32 %v1185, 2147483648
    %v1195 = vmul.f32 %v1194, 1.442695
    %v1196 = vpow.pop %v1195
    %v1197 = vadd.f32 %v1196, 1.0
    %v1198 = vrcp.pop %v1197
    %v1199 = vmul.f32 1.0, %v1198
    %v1200 = vtanh.pop %v1186
    %v1201 = vxor.u32 %v1187, 2147483648
    %v1202 = vmul.f32 %v1201, 1.442695
    %v1203 = vpow.pop %v1202
    %v1204 = vadd.f32 %v1203, 1.0
    %v1205 = vrcp.pop %v1204
    %v1206 = vmul.f32 1.0, %v1205
    %v1207 = vmul.f32 %v1199, %v1093
    %v1208 = vmul.f32 %v1193, %v1200
    %v1209 = vadd.f32 %v1207, %v1208
    %v1210 = vtanh.pop %v1209
    %v1211 = vmul.f32 %v1206, %v1210
    %1212 = vst [vmem:[#allocation3 + $0x28] sm:$0xff] %v1211
    %v1213 = vld [vmem:[#allocation2 + $0xc0] sm:$0xff]
    %v1214 = vld [vmem:[#allocation2 + $0xc8] sm:$0xff]
    %v1215 = vld [vmem:[#allocation2 + $0xd0] sm:$0xff]
    %v1216 = vld [vmem:[#allocation2 + $0xd8] sm:$0xff]
    %v1217 = vpack.c.bf16 %v1211, %v1211
    %1218 = vmatprep.subr.bf16.mxu0 %v487
    %1219 = vmatpush1.bf16.msra.mxu0 %v486
    %1220 = vmatprep.subr.bf16.mxu0 %v483
    %1221 = vmatpush1.bf16.msra.mxu0 %v482
    %1222 = vmatprep.subr.bf16.mxu0 %v479
    %1223 = vmatpush1.bf16.msra.mxu0 %v478
    %1224 = vmatprep.subr.bf16.mxu0 %v475
    %1225 = vmatpush1.bf16.msra.mxu0 %v474
    %1226 = vmatprep.subr.bf16.mxu0 %v471
    %1227 = vmatpush1.bf16.msra.mxu0 %v470
    %1228 = vmatprep.subr.bf16.mxu0 %v467
    %1229 = vmatpush1.bf16.msra.mxu0 %v466
    %1230 = vmatprep.subr.bf16.mxu0 %v463
    %1231 = vmatpush1.bf16.msra.mxu0 %v462
    %1232 = vmatprep.subr.bf16.mxu0 %v459
    %1233 = vmatpush1.bf16.msra.mxu0 %v458
    %1234 = vmatprep.subr.bf16.mxu0 0
    %1235 = vmatpush2.bf16.msra.mxu0 0
    %1236 = vmatprep.subr.bf16.mxu0 0
    %1237 = vmatpush2.bf16.msra.mxu0 0
    %1238 = vmatprep.subr.bf16.mxu0 0
    %1239 = vmatpush2.bf16.msra.mxu0 0
    %1240 = vmatprep.subr.bf16.mxu0 0
    %1241 = vmatpush2.bf16.msra.mxu0 0
    %1242 = vmatprep.subr.bf16.mxu0 0
    %1243 = vmatpush2.bf16.msra.mxu0 0
    %1244 = vmatprep.subr.bf16.mxu0 0
    %1245 = vmatpush2.bf16.msra.mxu0 0
    %1246 = vmatprep.subr.bf16.mxu0 0
    %1247 = vmatpush2.bf16.msra.mxu0 0
    %1248 = vmatprep.subr.bf16.mxu0 0
    %1249 = vmatpush2.bf16.msra.mxu0 0
    %1250 = vmatprep.mubr.bf16.mxu0 0
    %1251 = vmatmul.mubr.bf16.gmra.mxu0 %v1217
    %v1252 = vpop.f32.mrf.mxu0
    %v1253 = vadd.f32 0.0, %v1252
    %v1254 = vpop.f32.mrf.mxu0
    %v1255 = vadd.f32 0.0, %v1254
    %v1256 = vpop.f32.mrf.mxu0
    %v1257 = vpop.f32.mrf.mxu0
    %1258 = vdwg.mxu0
    %1259 = vmatprep.subr.bf16.mxu0 %v489
    %1260 = vmatpush1.bf16.msra.mxu0 %v488
    %1261 = vmatprep.subr.bf16.mxu0 %v485
    %1262 = vmatpush1.bf16.msra.mxu0 %v484
    %1263 = vmatprep.subr.bf16.mxu0 %v481
    %1264 = vmatpush1.bf16.msra.mxu0 %v480
    %1265 = vmatprep.subr.bf16.mxu0 %v477
    %1266 = vmatpush1.bf16.msra.mxu0 %v476
    %1267 = vmatprep.subr.bf16.mxu0 %v473
    %1268 = vmatpush1.bf16.msra.mxu0 %v472
    %1269 = vmatprep.subr.bf16.mxu0 %v469
    %1270 = vmatpush1.bf16.msra.mxu0 %v468
    %1271 = vmatprep.subr.bf16.mxu0 %v465
    %1272 = vmatpush1.bf16.msra.mxu0 %v464
    %1273 = vmatprep.subr.bf16.mxu0 %v461
    %1274 = vmatpush1.bf16.msra.mxu0 %v460
    %1275 = vmatprep.subr.bf16.mxu0 0
    %1276 = vmatpush2.bf16.msra.mxu0 0
    %1277 = vmatprep.subr.bf16.mxu0 0
    %1278 = vmatpush2.bf16.msra.mxu0 0
    %1279 = vmatprep.subr.bf16.mxu0 0
    %1280 = vmatpush2.bf16.msra.mxu0 0
    %1281 = vmatprep.subr.bf16.mxu0 0
    %1282 = vmatpush2.bf16.msra.mxu0 0
    %1283 = vmatprep.subr.bf16.mxu0 0
    %1284 = vmatpush2.bf16.msra.mxu0 0
    %1285 = vmatprep.subr.bf16.mxu0 0
    %1286 = vmatpush2.bf16.msra.mxu0 0
    %1287 = vmatprep.subr.bf16.mxu0 0
    %1288 = vmatpush2.bf16.msra.mxu0 0
    %1289 = vmatprep.subr.bf16.mxu0 0
    %1290 = vmatpush2.bf16.msra.mxu0 0
    %1291 = vmatprep.mubr.bf16.mxu0 0
    %1292 = vmatmul.mubr.bf16.gmra.mxu0 %v1217
    %v1293 = vpop.f32.mrf.mxu0
    %v1294 = vadd.f32 0.0, %v1293
    %v1295 = vpop.f32.mrf.mxu0
    %v1296 = vadd.f32 0.0, %v1295
    %v1297 = vpop.f32.mrf.mxu0
    %v1298 = vpop.f32.mrf.mxu0
    %1299 = vdwg.mxu0
    %v1300 = vadd.f32 %v1213, %v1253
    %v1301 = vadd.f32 %v1214, %v1255
    %v1302 = vadd.f32 %v1215, %v1294
    %v1303 = vadd.f32 %v1216, %v1296
    %v1304 = vxor.u32 %v1300, 2147483648
    %v1305 = vmul.f32 %v1304, 1.442695
    %v1306 = vpow.pop %v1305
    %v1307 = vadd.f32 %v1306, 1.0
    %v1308 = vrcp.pop %v1307
    %v1309 = vmul.f32 1.0, %v1308
    %v1310 = vxor.u32 %v1301, 2147483648
    %v1311 = vmul.f32 %v1310, 1.442695
    %v1312 = vpow.pop %v1311
    %v1313 = vadd.f32 %v1312, 1.0
    %v1314 = vrcp.pop %v1313
    %v1315 = vmul.f32 1.0, %v1314
    %v1316 = vtanh.pop %v1302
    %v1317 = vxor.u32 %v1303, 2147483648
    %v1318 = vmul.f32 %v1317, 1.442695
    %v1319 = vpow.pop %v1318
    %v1320 = vadd.f32 %v1319, 1.0
    %v1321 = vrcp.pop %v1320
    %v1322 = vmul.f32 1.0, %v1321
    %v1323 = vmul.f32 %v1315, %v1209
    %v1324 = vmul.f32 %v1309, %v1316
    %v1325 = vadd.f32 %v1323, %v1324
    %v1326 = vtanh.pop %v1325
    %v1327 = vmul.f32 %v1322, %v1326
    %1328 = vst [vmem:[#allocation3 + $0x30] sm:$0xff] %v1327
    %v1329 = vld [vmem:[#allocation2 + $0xe0] sm:$0xff]
    %v1330 = vld [vmem:[#allocation2 + $0xe8] sm:$0xff]
    %v1331 = vld [vmem:[#allocation2 + $0xf0] sm:$0xff]
    %v1332 = vld [vmem:[#allocation2 + $0xf8] sm:$0xff]
    %v1333 = vpack.c.bf16 %v1327, %v1327
    %1334 = vmatprep.subr.bf16.mxu0 %v487
    %1335 = vmatpush1.bf16.msra.mxu0 %v486
    %1336 = vmatprep.subr.bf16.mxu0 %v483
    %1337 = vmatpush1.bf16.msra.mxu0 %v482
    %1338 = vmatprep.subr.bf16.mxu0 %v479
    %1339 = vmatpush1.bf16.msra.mxu0 %v478
    %1340 = vmatprep.subr.bf16.mxu0 %v475
    %1341 = vmatpush1.bf16.msra.mxu0 %v474
    %1342 = vmatprep.subr.bf16.mxu0 %v471
    %1343 = vmatpush1.bf16.msra.mxu0 %v470
    %1344 = vmatprep.subr.bf16.mxu0 %v467
    %1345 = vmatpush1.bf16.msra.mxu0 %v466
    %1346 = vmatprep.subr.bf16.mxu0 %v463
    %1347 = vmatpush1.bf16.msra.mxu0 %v462
    %1348 = vmatprep.subr.bf16.mxu0 %v459
    %1349 = vmatpush1.bf16.msra.mxu0 %v458
    %1350 = vmatprep.subr.bf16.mxu0 0
    %1351 = vmatpush2.bf16.msra.mxu0 0
    %1352 = vmatprep.subr.bf16.mxu0 0
    %1353 = vmatpush2.bf16.msra.mxu0 0
    %1354 = vmatprep.subr.bf16.mxu0 0
    %1355 = vmatpush2.bf16.msra.mxu0 0
    %1356 = vmatprep.subr.bf16.mxu0 0
    %1357 = vmatpush2.bf16.msra.mxu0 0
    %1358 = vmatprep.subr.bf16.mxu0 0
    %1359 = vmatpush2.bf16.msra.mxu0 0
    %1360 = vmatprep.subr.bf16.mxu0 0
    %1361 = vmatpush2.bf16.msra.mxu0 0
    %1362 = vmatprep.subr.bf16.mxu0 0
    %1363 = vmatpush2.bf16.msra.mxu0 0
    %1364 = vmatprep.subr.bf16.mxu0 0
    %1365 = vmatpush2.bf16.msra.mxu0 0
    %1366 = vmatprep.mubr.bf16.mxu0 0
    %1367 = vmatmul.mubr.bf16.gmra.mxu0 %v1333
    %v1368 = vpop.f32.mrf.mxu0
    %v1369 = vadd.f32 0.0, %v1368
    %v1370 = vpop.f32.mrf.mxu0
    %v1371 = vadd.f32 0.0, %v1370
    %v1372 = vpop.f32.mrf.mxu0
    %v1373 = vpop.f32.mrf.mxu0
    %1374 = vdwg.mxu0
    %1375 = vmatprep.subr.bf16.mxu0 %v489
    %1376 = vmatpush1.bf16.msra.mxu0 %v488
    %1377 = vmatprep.subr.bf16.mxu0 %v485
    %1378 = vmatpush1.bf16.msra.mxu0 %v484
    %1379 = vmatprep.subr.bf16.mxu0 %v481
    %1380 = vmatpush1.bf16.msra.mxu0 %v480
    %1381 = vmatprep.subr.bf16.mxu0 %v477
    %1382 = vmatpush1.bf16.msra.mxu0 %v476
    %1383 = vmatprep.subr.bf16.mxu0 %v473
    %1384 = vmatpush1.bf16.msra.mxu0 %v472
    %1385 = vmatprep.subr.bf16.mxu0 %v469
    %1386 = vmatpush1.bf16.msra.mxu0 %v468
    %1387 = vmatprep.subr.bf16.mxu0 %v465
    %1388 = vmatpush1.bf16.msra.mxu0 %v464
    %1389 = vmatprep.subr.bf16.mxu0 %v461
    %1390 = vmatpush1.bf16.msra.mxu0 %v460
    %1391 = vmatprep.subr.bf16.mxu0 0
    %1392 = vmatpush2.bf16.msra.mxu0 0
    %1393 = vmatprep.subr.bf16.mxu0 0
    %1394 = vmatpush2.bf16.msra.mxu0 0
    %1395 = vmatprep.subr.bf16.mxu0 0
    %1396 = vmatpush2.bf16.msra.mxu0 0
    %1397 = vmatprep.subr.bf16.mxu0 0
    %1398 = vmatpush2.bf16.msra.mxu0 0
    %1399 = vmatprep.subr.bf16.mxu0 0
    %1400 = vmatpush2.bf16.msra.mxu0 0
    %1401 = vmatprep.subr.bf16.mxu0 0
    %1402 = vmatpush2.bf16.msra.mxu0 0
    %1403 = vmatprep.subr.bf16.mxu0 0
    %1404 = vmatpush2.bf16.msra.mxu0 0
    %1405 = vmatprep.subr.bf16.mxu0 0
    %1406 = vmatpush2.bf16.msra.mxu0 0
    %1407 = vmatprep.mubr.bf16.mxu0 0
    %1408 = vmatmul.mubr.bf16.gmra.mxu0 %v1333
    %v1409 = vpop.f32.mrf.mxu0
    %v1410 = vadd.f32 0.0, %v1409
    %v1411 = vpop.f32.mrf.mxu0
    %v1412 = vadd.f32 0.0, %v1411
    %v1413 = vpop.f32.mrf.mxu0
    %v1414 = vpop.f32.mrf.mxu0
    %1415 = vdwg.mxu0
    %v1416 = vadd.f32 %v1329, %v1369
    %v1417 = vadd.f32 %v1330, %v1371
    %v1418 = vadd.f32 %v1331, %v1410
    %v1419 = vadd.f32 %v1332, %v1412
    %v1420 = vxor.u32 %v1416, 2147483648
    %v1421 = vmul.f32 %v1420, 1.442695
    %v1422 = vpow.pop %v1421
    %v1423 = vadd.f32 %v1422, 1.0
    %v1424 = vrcp.pop %v1423
    %v1425 = vmul.f32 1.0, %v1424
    %v1426 = vxor.u32 %v1417, 2147483648
    %v1427 = vmul.f32 %v1426, 1.442695
    %v1428 = vpow.pop %v1427
    %v1429 = vadd.f32 %v1428, 1.0
    %v1430 = vrcp.pop %v1429
    %v1431 = vmul.f32 1.0, %v1430
    %v1432 = vtanh.pop %v1418
    %v1433 = vxor.u32 %v1419, 2147483648
    %v1434 = vmul.f32 %v1433, 1.442695
    %v1435 = vpow.pop %v1434
    %v1436 = vadd.f32 %v1435, 1.0
    %v1437 = vrcp.pop %v1436
    %v1438 = vmul.f32 1.0, %v1437
    %v1439 = vmul.f32 %v1431, %v1325
    %v1440 = vmul.f32 %v1425, %v1432
    %v1441 = vadd.f32 %v1439, %v1440
    %v1442 = vtanh.pop %v1441
    %v1443 = vmul.f32 %v1438, %v1442
    %1444 = vst [vmem:[#allocation3 + $0x38] sm:$0xff] %v1443
    %v1445 = vld [vmem:[#allocation3] sm:$0xff]
    %v1446 = vld [vmem:[#allocation3 + $0x8] sm:$0xff]
    %v1447 = vld [vmem:[#allocation3 + $0x10] sm:$0xff]
    %v1448 = vld [vmem:[#allocation3 + $0x18] sm:$0xff]
    %v1449 = vld [vmem:[#allocation3 + $0x20] sm:$0xff]
    %v1450 = vld [vmem:[#allocation3 + $0x28] sm:$0xff]
    %v1451 = vld [vmem:[#allocation3 + $0x30] sm:$0xff]
    %v1452 = vld [vmem:[#allocation3 + $0x38] sm:$0xff]
    %v1453 = vpack.c.bf16 %v1446, %v1445
    %v1454 = vpack.c.bf16 %v1448, %v1447
    %v1455 = vpack.c.bf16 %v1450, %v1449
    %v1456 = vpack.c.bf16 %v1452, %v1451
    %v1457 = vld [vmem:[#allocation7] sm:$0xff]
    %v1458 = vld [vmem:[#allocation7 + $0x8] sm:$0xff]
    %v1459 = vld [vmem:[#allocation7 + $0x10] sm:$0xff]
    %v1460 = vld [vmem:[#allocation7 + $0x18] sm:$0xff]
    %v1461 = vld [vmem:[#allocation7 + $0x20] sm:$0xff]
    %v1462 = vld [vmem:[#allocation7 + $0x28] sm:$0xff]
    %v1463 = vld [vmem:[#allocation7 + $0x30] sm:$0xff]
    %v1464 = vld [vmem:[#allocation7 + $0x38] sm:$0xff]
    %v1465 = vld [vmem:[#allocation7 + $0x40] sm:$0xff]
    %v1466 = vld [vmem:[#allocation7 + $0x48] sm:$0xff]
    %v1467 = vld [vmem:[#allocation7 + $0x50] sm:$0xff]
    %v1468 = vld [vmem:[#allocation7 + $0x58] sm:$0xff]
    %v1469 = vld [vmem:[#allocation7 + $0x60] sm:$0xff]
    %v1470 = vld [vmem:[#allocation7 + $0x68] sm:$0xff]
    %v1471 = vld [vmem:[#allocation7 + $0x70] sm:$0xff]
    %v1472 = vld [vmem:[#allocation7 + $0x78] sm:$0xff]
    %v1473 = vld [vmem:[#allocation7 + $0x80] sm:$0xff]
    %v1474 = vld [vmem:[#allocation7 + $0x88] sm:$0xff]
    %v1475 = vld [vmem:[#allocation7 + $0x90] sm:$0xff]
    %v1476 = vld [vmem:[#allocation7 + $0x98] sm:$0xff]
    %v1477 = vld [vmem:[#allocation7 + $0xa0] sm:$0xff]
    %v1478 = vld [vmem:[#allocation7 + $0xa8] sm:$0xff]
    %v1479 = vld [vmem:[#allocation7 + $0xb0] sm:$0xff]
    %v1480 = vld [vmem:[#allocation7 + $0xb8] sm:$0xff]
    %v1481 = vld [vmem:[#allocation7 + $0xc0] sm:$0xff]
    %v1482 = vld [vmem:[#allocation7 + $0xc8] sm:$0xff]
    %v1483 = vld [vmem:[#allocation7 + $0xd0] sm:$0xff]
    %v1484 = vld [vmem:[#allocation7 + $0xd8] sm:$0xff]
    %v1485 = vld [vmem:[#allocation7 + $0xe0] sm:$0xff]
    %v1486 = vld [vmem:[#allocation7 + $0xe8] sm:$0xff]
    %v1487 = vld [vmem:[#allocation7 + $0xf0] sm:$0xff]
    %v1488 = vld [vmem:[#allocation7 + $0xf8] sm:$0xff]
    %v1489 = vld [vmem:[%s6] sm:$0xf]
    %v1491 = vlaneseq
    %v1492 = vshrl.u32 %v1491, 7
    %v1493 = vsub.s32 0, %v1492
    %v1494 = vrot.slane %v1489, %v1493
    %v1495 = vlaneseq
    %v1496 = vshrl.u32 %v1495, 7
    %v1497 = vsub.s32 1, %v1496
    %v1498 = vrot.slane %v1489, %v1497
    %v1499 = vlaneseq
    %v1500 = vshrl.u32 %v1499, 7
    %v1501 = vsub.s32 2, %v1500
    %v1502 = vrot.slane %v1489, %v1501
    %v1503 = vlaneseq
    %v1504 = vshrl.u32 %v1503, 7
    %v1505 = vsub.s32 3, %v1504
    %v1506 = vrot.slane %v1489, %v1505
    %v1543 = vunpack.c.l.b16 %v1457
    %v1544 = vunpack.c.h.b16 %v1457
    %v1545 = vunpack.c.l.b16 %v1458
    %v1546 = vunpack.c.h.b16 %v1458
    %v1547 = vunpack.c.l.b16 %v1459
    %v1548 = vunpack.c.h.b16 %v1459
    %v1549 = vunpack.c.l.b16 %v1460
    %v1550 = vunpack.c.h.b16 %v1460
    %v1551 = vunpack.c.l.b16 %v1461
    %v1552 = vunpack.c.h.b16 %v1461
    %v1553 = vunpack.c.l.b16 %v1462
    %v1554 = vunpack.c.h.b16 %v1462
    %v1555 = vunpack.c.l.b16 %v1463
    %v1556 = vunpack.c.h.b16 %v1463
    %v1557 = vunpack.c.l.b16 %v1464
    %v1558 = vunpack.c.h.b16 %v1464
    %v1559 = vunpack.c.l.b16 %v1465
    %v1560 = vunpack.c.h.b16 %v1465
    %v1561 = vunpack.c.l.b16 %v1466
    %v1562 = vunpack.c.h.b16 %v1466
    %v1563 = vunpack.c.l.b16 %v1467
    %v1564 = vunpack.c.h.b16 %v1467
    %v1565 = vunpack.c.l.b16 %v1468
    %v1566 = vunpack.c.h.b16 %v1468
    %v1567 = vunpack.c.l.b16 %v1469
    %v1568 = vunpack.c.h.b16 %v1469
    %v1569 = vunpack.c.l.b16 %v1470
    %v1570 = vunpack.c.h.b16 %v1470
    %v1571 = vunpack.c.l.b16 %v1471
    %v1572 = vunpack.c.h.b16 %v1471
    %v1573 = vunpack.c.l.b16 %v1472
    %v1574 = vunpack.c.h.b16 %v1472
    %v1575 = vunpack.c.l.b16 %v1473
    %v1576 = vunpack.c.h.b16 %v1473
    %v1577 = vunpack.c.l.b16 %v1474
    %v1578 = vunpack.c.h.b16 %v1474
    %v1579 = vunpack.c.l.b16 %v1475
    %v1580 = vunpack.c.h.b16 %v1475
    %v1581 = vunpack.c.l.b16 %v1476
    %v1582 = vunpack.c.h.b16 %v1476
    %v1583 = vunpack.c.l.b16 %v1477
    %v1584 = vunpack.c.h.b16 %v1477
    %v1585 = vunpack.c.l.b16 %v1478
    %v1586 = vunpack.c.h.b16 %v1478
    %v1587 = vunpack.c.l.b16 %v1479
    %v1588 = vunpack.c.h.b16 %v1479
    %v1589 = vunpack.c.l.b16 %v1480
    %v1590 = vunpack.c.h.b16 %v1480
    %v1591 = vunpack.c.l.b16 %v1481
    %v1592 = vunpack.c.h.b16 %v1481
    %v1593 = vunpack.c.l.b16 %v1482
    %v1594 = vunpack.c.h.b16 %v1482
    %v1595 = vunpack.c.l.b16 %v1483
    %v1596 = vunpack.c.h.b16 %v1483
    %v1597 = vunpack.c.l.b16 %v1484
    %v1598 = vunpack.c.h.b16 %v1484
    %v1599 = vunpack.c.l.b16 %v1485
    %v1600 = vunpack.c.h.b16 %v1485
    %v1601 = vunpack.c.l.b16 %v1486
    %v1602 = vunpack.c.h.b16 %v1486
    %v1603 = vunpack.c.l.b16 %v1487
    %v1604 = vunpack.c.h.b16 %v1487
    %v1605 = vunpack.c.l.b16 %v1488
    %v1606 = vunpack.c.h.b16 %v1488
    %v1607 = vpack.c.b16 %v1547, %v1543
    %v1608 = vpack.c.b16 %v1548, %v1544
    %v1609 = vpack.c.b16 %v1549, %v1545
    %v1610 = vpack.c.b16 %v1550, %v1546
    %v1611 = vpack.c.b16 %v1555, %v1551
    %v1612 = vpack.c.b16 %v1556, %v1552
    %v1613 = vpack.c.b16 %v1557, %v1553
    %v1614 = vpack.c.b16 %v1558, %v1554
    %v1615 = vpack.c.b16 %v1563, %v1559
    %v1616 = vpack.c.b16 %v1564, %v1560
    %v1617 = vpack.c.b16 %v1565, %v1561
    %v1618 = vpack.c.b16 %v1566, %v1562
    %v1619 = vpack.c.b16 %v1571, %v1567
    %v1620 = vpack.c.b16 %v1572, %v1568
    %v1621 = vpack.c.b16 %v1573, %v1569
    %v1622 = vpack.c.b16 %v1574, %v1570
    %v1623 = vpack.c.b16 %v1579, %v1575
    %v1624 = vpack.c.b16 %v1580, %v1576
    %v1625 = vpack.c.b16 %v1581, %v1577
    %v1626 = vpack.c.b16 %v1582, %v1578
    %v1627 = vpack.c.b16 %v1587, %v1583
    %v1628 = vpack.c.b16 %v1588, %v1584
    %v1629 = vpack.c.b16 %v1589, %v1585
    %v1630 = vpack.c.b16 %v1590, %v1586
    %v1631 = vpack.c.b16 %v1595, %v1591
    %v1632 = vpack.c.b16 %v1596, %v1592
    %v1633 = vpack.c.b16 %v1597, %v1593
    %v1634 = vpack.c.b16 %v1598, %v1594
    %v1635 = vpack.c.b16 %v1603, %v1599
    %v1636 = vpack.c.b16 %v1604, %v1600
    %v1637 = vpack.c.b16 %v1605, %v1601
    %v1638 = vpack.c.b16 %v1606, %v1602
    %1671 = vmatprep.subr.bf16.mxu0 %v1636
    %1672 = vmatpush1.bf16.msra.mxu0 %v1635
    %1673 = vmatprep.subr.bf16.mxu0 %v1632
    %1674 = vmatpush1.bf16.msra.mxu0 %v1631
    %1675 = vmatprep.subr.bf16.mxu0 %v1628
    %1676 = vmatpush1.bf16.msra.mxu0 %v1627
    %1677 = vmatprep.subr.bf16.mxu0 %v1624
    %1678 = vmatpush1.bf16.msra.mxu0 %v1623
    %1679 = vmatprep.subr.bf16.mxu0 %v1620
    %1680 = vmatpush1.bf16.msra.mxu0 %v1619
    %1681 = vmatprep.subr.bf16.mxu0 %v1616
    %1682 = vmatpush1.bf16.msra.mxu0 %v1615
    %1683 = vmatprep.subr.bf16.mxu0 %v1612
    %1684 = vmatpush1.bf16.msra.mxu0 %v1611
    %1685 = vmatprep.subr.bf16.mxu0 %v1608
    %1686 = vmatpush1.bf16.msra.mxu0 %v1607
    %1687 = vmatprep.subr.bf16.mxu0 0
    %1688 = vmatpush2.bf16.msra.mxu0 0
    %1689 = vmatprep.subr.bf16.mxu0 0
    %1690 = vmatpush2.bf16.msra.mxu0 0
    %1691 = vmatprep.subr.bf16.mxu0 0
    %1692 = vmatpush2.bf16.msra.mxu0 0
    %1693 = vmatprep.subr.bf16.mxu0 0
    %1694 = vmatpush2.bf16.msra.mxu0 0
    %1695 = vmatprep.subr.bf16.mxu0 0
    %1696 = vmatpush2.bf16.msra.mxu0 0
    %1697 = vmatprep.subr.bf16.mxu0 0
    %1698 = vmatpush2.bf16.msra.mxu0 0
    %1699 = vmatprep.subr.bf16.mxu0 0
    %1700 = vmatpush2.bf16.msra.mxu0 0
    %1701 = vmatprep.subr.bf16.mxu0 0
    %1702 = vmatpush2.bf16.msra.mxu0 0
    %1703 = vmatprep.mubr.bf16.mxu0 0
    %1704 = vmatmul.mubr.bf16.gmra.mxu0 %v1453
    %v1705 = vpop.f32.mrf.mxu0
    %v1706 = vadd.f32 %v1494, %v1705
    %v1707 = vpop.f32.mrf.mxu0
    %v1708 = vadd.f32 %v1498, %v1707
    %v1709 = vpop.f32.mrf.mxu0
    %v1710 = vadd.f32 %v1494, %v1709
    %v1711 = vpop.f32.mrf.mxu0
    %v1712 = vadd.f32 %v1498, %v1711
    %1713 = vmatprep.mubr.bf16.mxu0 0
    %1714 = vmatmul.mubr.bf16.gmra.mxu0 %v1454
    %v1715 = vpop.f32.mrf.mxu0
    %v1716 = vadd.f32 %v1494, %v1715
    %v1717 = vpop.f32.mrf.mxu0
    %v1718 = vadd.f32 %v1498, %v1717
    %v1719 = vpop.f32.mrf.mxu0
    %v1720 = vadd.f32 %v1494, %v1719
    %v1721 = vpop.f32.mrf.mxu0
    %v1722 = vadd.f32 %v1498, %v1721
    %1723 = vmatprep.mubr.bf16.mxu0 0
    %1724 = vmatmul.mubr.bf16.gmra.mxu0 %v1455
    %v1725 = vpop.f32.mrf.mxu0
    %v1726 = vadd.f32 %v1494, %v1725
    %v1727 = vpop.f32.mrf.mxu0
    %v1728 = vadd.f32 %v1498, %v1727
    %v1729 = vpop.f32.mrf.mxu0
    %v1730 = vadd.f32 %v1494, %v1729
    %v1731 = vpop.f32.mrf.mxu0
    %v1732 = vadd.f32 %v1498, %v1731
    %1733 = vmatprep.mubr.bf16.mxu0 0
    %1734 = vmatmul.mubr.bf16.gmra.mxu0 %v1456
    %v1735 = vpop.f32.mrf.mxu0
    %v1736 = vadd.f32 %v1494, %v1735
    %v1737 = vpop.f32.mrf.mxu0
    %v1738 = vadd.f32 %v1498, %v1737
    %v1739 = vpop.f32.mrf.mxu0
    %v1740 = vadd.f32 %v1494, %v1739
    %v1741 = vpop.f32.mrf.mxu0
    %v1742 = vadd.f32 %v1498, %v1741
    %1743 = vdwg.mxu0
    %1744 = vmatprep.subr.bf16.mxu0 %v1638
    %1745 = vmatpush1.bf16.msra.mxu0 %v1637
    %1746 = vmatprep.subr.bf16.mxu0 %v1634
    %1747 = vmatpush1.bf16.msra.mxu0 %v1633
    %1748 = vmatprep.subr.bf16.mxu0 %v1630
    %1749 = vmatpush1.bf16.msra.mxu0 %v1629
    %1750 = vmatprep.subr.bf16.mxu0 %v1626
    %1751 = vmatpush1.bf16.msra.mxu0 %v1625
    %1752 = vmatprep.subr.bf16.mxu0 %v1622
    %1753 = vmatpush1.bf16.msra.mxu0 %v1621
    %1754 = vmatprep.subr.bf16.mxu0 %v1618
    %1755 = vmatpush1.bf16.msra.mxu0 %v1617
    %1756 = vmatprep.subr.bf16.mxu0 %v1614
    %1757 = vmatpush1.bf16.msra.mxu0 %v1613
    %1758 = vmatprep.subr.bf16.mxu0 %v1610
    %1759 = vmatpush1.bf16.msra.mxu0 %v1609
    %1760 = vmatprep.subr.bf16.mxu0 0
    %1761 = vmatpush2.bf16.msra.mxu0 0
    %1762 = vmatprep.subr.bf16.mxu0 0
    %1763 = vmatpush2.bf16.msra.mxu0 0
    %1764 = vmatprep.subr.bf16.mxu0 0
    %1765 = vmatpush2.bf16.msra.mxu0 0
    %1766 = vmatprep.subr.bf16.mxu0 0
    %1767 = vmatpush2.bf16.msra.mxu0 0
    %1768 = vmatprep.subr.bf16.mxu0 0
    %1769 = vmatpush2.bf16.msra.mxu0 0
    %1770 = vmatprep.subr.bf16.mxu0 0
    %1771 = vmatpush2.bf16.msra.mxu0 0
    %1772 = vmatprep.subr.bf16.mxu0 0
    %1773 = vmatpush2.bf16.msra.mxu0 0
    %1774 = vmatprep.subr.bf16.mxu0 0
    %1775 = vmatpush2.bf16.msra.mxu0 0
    %1776 = vmatprep.mubr.bf16.mxu0 0
    %1777 = vmatmul.mubr.bf16.gmra.mxu0 %v1453
    %v1778 = vpop.f32.mrf.mxu0
    %v1779 = vadd.f32 %v1502, %v1778
    %v1780 = vpop.f32.mrf.mxu0
    %v1781 = vadd.f32 %v1506, %v1780
    %v1782 = vpop.f32.mrf.mxu0
    %v1783 = vadd.f32 %v1502, %v1782
    %v1784 = vpop.f32.mrf.mxu0
    %v1785 = vadd.f32 %v1506, %v1784
    %1786 = vmatprep.mubr.bf16.mxu0 0
    %1787 = vmatmul.mubr.bf16.gmra.mxu0 %v1454
    %v1788 = vpop.f32.mrf.mxu0
    %v1789 = vadd.f32 %v1502, %v1788
    %v1790 = vpop.f32.mrf.mxu0
    %v1791 = vadd.f32 %v1506, %v1790
    %v1792 = vpop.f32.mrf.mxu0
    %v1793 = vadd.f32 %v1502, %v1792
    %v1794 = vpop.f32.mrf.mxu0
    %v1795 = vadd.f32 %v1506, %v1794
    %1796 = vmatprep.mubr.bf16.mxu0 0
    %1797 = vmatmul.mubr.bf16.gmra.mxu0 %v1455
    %v1798 = vpop.f32.mrf.mxu0
    %v1799 = vadd.f32 %v1502, %v1798
    %v1800 = vpop.f32.mrf.mxu0
    %v1801 = vadd.f32 %v1506, %v1800
    %v1802 = vpop.f32.mrf.mxu0
    %v1803 = vadd.f32 %v1502, %v1802
    %v1804 = vpop.f32.mrf.mxu0
    %v1805 = vadd.f32 %v1506, %v1804
    %1806 = vmatprep.mubr.bf16.mxu0 0
    %1807 = vmatmul.mubr.bf16.gmra.mxu0 %v1456
    %v1808 = vpop.f32.mrf.mxu0
    %v1809 = vadd.f32 %v1502, %v1808
    %v1810 = vpop.f32.mrf.mxu0
    %v1811 = vadd.f32 %v1506, %v1810
    %v1812 = vpop.f32.mrf.mxu0
    %v1813 = vadd.f32 %v1502, %v1812
    %v1814 = vpop.f32.mrf.mxu0
    %v1815 = vadd.f32 %v1506, %v1814
    %1816 = vdwg.mxu0
    %1817 = vst [vmem:[#allocation2] sm:$0xff] %v1706
    %1818 = vst [vmem:[#allocation2 + $0x8] sm:$0xff] %v1708
    %1819 = vst [vmem:[#allocation2 + $0x10] sm:$0xff] %v1779
    %1820 = vst [vmem:[#allocation2 + $0x18] sm:$0xff] %v1781
    %1821 = vst [vmem:[#allocation2 + $0x20] sm:$0xff] %v1710
    %1822 = vst [vmem:[#allocation2 + $0x28] sm:$0xff] %v1712
    %1823 = vst [vmem:[#allocation2 + $0x30] sm:$0xff] %v1783
    %1824 = vst [vmem:[#allocation2 + $0x38] sm:$0xff] %v1785
    %1825 = vst [vmem:[#allocation2 + $0x40] sm:$0xff] %v1716
    %1826 = vst [vmem:[#allocation2 + $0x48] sm:$0xff] %v1718
    %1827 = vst [vmem:[#allocation2 + $0x50] sm:$0xff] %v1789
    %1828 = vst [vmem:[#allocation2 + $0x58] sm:$0xff] %v1791
    %1829 = vst [vmem:[#allocation2 + $0x60] sm:$0xff] %v1720
    %1830 = vst [vmem:[#allocation2 + $0x68] sm:$0xff] %v1722
    %1831 = vst [vmem:[#allocation2 + $0x70] sm:$0xff] %v1793
    %1832 = vst [vmem:[#allocation2 + $0x78] sm:$0xff] %v1795
    %1833 = vst [vmem:[#allocation2 + $0x80] sm:$0xff] %v1726
    %1834 = vst [vmem:[#allocation2 + $0x88] sm:$0xff] %v1728
    %1835 = vst [vmem:[#allocation2 + $0x90] sm:$0xff] %v1799
    %1836 = vst [vmem:[#allocation2 + $0x98] sm:$0xff] %v1801
    %1837 = vst [vmem:[#allocation2 + $0xa0] sm:$0xff] %v1730
    %1838 = vst [vmem:[#allocation2 + $0xa8] sm:$0xff] %v1732
    %1839 = vst [vmem:[#allocation2 + $0xb0] sm:$0xff] %v1803
    %1840 = vst [vmem:[#allocation2 + $0xb8] sm:$0xff] %v1805
    %1841 = vst [vmem:[#allocation2 + $0xc0] sm:$0xff] %v1736
    %1842 = vst [vmem:[#allocation2 + $0xc8] sm:$0xff] %v1738
    %1843 = vst [vmem:[#allocation2 + $0xd0] sm:$0xff] %v1809
    %1844 = vst [vmem:[#allocation2 + $0xd8] sm:$0xff] %v1811
    %1845 = vst [vmem:[#allocation2 + $0xe0] sm:$0xff] %v1740
    %1846 = vst [vmem:[#allocation2 + $0xe8] sm:$0xff] %v1742
    %1847 = vst [vmem:[#allocation2 + $0xf0] sm:$0xff] %v1813
    %1848 = vst [vmem:[#allocation2 + $0xf8] sm:$0xff] %v1815
    %v1849 = vld [vmem:[#allocation9] sm:$0xff]
    %v1850 = vld [vmem:[#allocation9 + $0x8] sm:$0xff]
    %v1851 = vld [vmem:[#allocation9 + $0x10] sm:$0xff]
    %v1852 = vld [vmem:[#allocation9 + $0x18] sm:$0xff]
    %v1853 = vld [vmem:[#allocation9 + $0x20] sm:$0xff]
    %v1854 = vld [vmem:[#allocation9 + $0x28] sm:$0xff]
    %v1855 = vld [vmem:[#allocation9 + $0x30] sm:$0xff]
    %v1856 = vld [vmem:[#allocation9 + $0x38] sm:$0xff]
    %v1857 = vld [vmem:[#allocation9 + $0x40] sm:$0xff]
    %v1858 = vld [vmem:[#allocation9 + $0x48] sm:$0xff]
    %v1859 = vld [vmem:[#allocation9 + $0x50] sm:$0xff]
    %v1860 = vld [vmem:[#allocation9 + $0x58] sm:$0xff]
    %v1861 = vld [vmem:[#allocation9 + $0x60] sm:$0xff]
    %v1862 = vld [vmem:[#allocation9 + $0x68] sm:$0xff]
    %v1863 = vld [vmem:[#allocation9 + $0x70] sm:$0xff]
    %v1864 = vld [vmem:[#allocation9 + $0x78] sm:$0xff]
    %v1865 = vld [vmem:[#allocation9 + $0x80] sm:$0xff]
    %v1866 = vld [vmem:[#allocation9 + $0x88] sm:$0xff]
    %v1867 = vld [vmem:[#allocation9 + $0x90] sm:$0xff]
    %v1868 = vld [vmem:[#allocation9 + $0x98] sm:$0xff]
    %v1869 = vld [vmem:[#allocation9 + $0xa0] sm:$0xff]
    %v1870 = vld [vmem:[#allocation9 + $0xa8] sm:$0xff]
    %v1871 = vld [vmem:[#allocation9 + $0xb0] sm:$0xff]
    %v1872 = vld [vmem:[#allocation9 + $0xb8] sm:$0xff]
    %v1873 = vld [vmem:[#allocation9 + $0xc0] sm:$0xff]
    %v1874 = vld [vmem:[#allocation9 + $0xc8] sm:$0xff]
    %v1875 = vld [vmem:[#allocation9 + $0xd0] sm:$0xff]
    %v1876 = vld [vmem:[#allocation9 + $0xd8] sm:$0xff]
    %v1877 = vld [vmem:[#allocation9 + $0xe0] sm:$0xff]
    %v1878 = vld [vmem:[#allocation9 + $0xe8] sm:$0xff]
    %v1879 = vld [vmem:[#allocation9 + $0xf0] sm:$0xff]
    %v1880 = vld [vmem:[#allocation9 + $0xf8] sm:$0xff]
    %v1881 = vld [vmem:[#allocation2] sm:$0xff]
    %v1882 = vld [vmem:[#allocation2 + $0x8] sm:$0xff]
    %v1883 = vld [vmem:[#allocation2 + $0x10] sm:$0xff]
    %v1884 = vld [vmem:[#allocation2 + $0x18] sm:$0xff]
    %v1917 = vunpack.c.l.b16 %v1849
    %v1918 = vunpack.c.h.b16 %v1849
    %v1919 = vunpack.c.l.b16 %v1850
    %v1920 = vunpack.c.h.b16 %v1850
    %v1921 = vunpack.c.l.b16 %v1851
    %v1922 = vunpack.c.h.b16 %v1851
    %v1923 = vunpack.c.l.b16 %v1852
    %v1924 = vunpack.c.h.b16 %v1852
    %v1925 = vunpack.c.l.b16 %v1853
    %v1926 = vunpack.c.h.b16 %v1853
    %v1927 = vunpack.c.l.b16 %v1854
    %v1928 = vunpack.c.h.b16 %v1854
    %v1929 = vunpack.c.l.b16 %v1855
    %v1930 = vunpack.c.h.b16 %v1855
    %v1931 = vunpack.c.l.b16 %v1856
    %v1932 = vunpack.c.h.b16 %v1856
    %v1933 = vunpack.c.l.b16 %v1857
    %v1934 = vunpack.c.h.b16 %v1857
    %v1935 = vunpack.c.l.b16 %v1858
    %v1936 = vunpack.c.h.b16 %v1858
    %v1937 = vunpack.c.l.b16 %v1859
    %v1938 = vunpack.c.h.b16 %v1859
    %v1939 = vunpack.c.l.b16 %v1860
    %v1940 = vunpack.c.h.b16 %v1860
    %v1941 = vunpack.c.l.b16 %v1861
    %v1942 = vunpack.c.h.b16 %v1861
    %v1943 = vunpack.c.l.b16 %v1862
    %v1944 = vunpack.c.h.b16 %v1862
    %v1945 = vunpack.c.l.b16 %v1863
    %v1946 = vunpack.c.h.b16 %v1863
    %v1947 = vunpack.c.l.b16 %v1864
    %v1948 = vunpack.c.h.b16 %v1864
    %v1949 = vunpack.c.l.b16 %v1865
    %v1950 = vunpack.c.h.b16 %v1865
    %v1951 = vunpack.c.l.b16 %v1866
    %v1952 = vunpack.c.h.b16 %v1866
    %v1953 = vunpack.c.l.b16 %v1867
    %v1954 = vunpack.c.h.b16 %v1867
    %v1955 = vunpack.c.l.b16 %v1868
    %v1956 = vunpack.c.h.b16 %v1868
    %v1957 = vunpack.c.l.b16 %v1869
    %v1958 = vunpack.c.h.b16 %v1869
    %v1959 = vunpack.c.l.b16 %v1870
    %v1960 = vunpack.c.h.b16 %v1870
    %v1961 = vunpack.c.l.b16 %v1871
    %v1962 = vunpack.c.h.b16 %v1871
    %v1963 = vunpack.c.l.b16 %v1872
    %v1964 = vunpack.c.h.b16 %v1872
    %v1965 = vunpack.c.l.b16 %v1873
    %v1966 = vunpack.c.h.b16 %v1873
    %v1967 = vunpack.c.l.b16 %v1874
    %v1968 = vunpack.c.h.b16 %v1874
    %v1969 = vunpack.c.l.b16 %v1875
    %v1970 = vunpack.c.h.b16 %v1875
    %v1971 = vunpack.c.l.b16 %v1876
    %v1972 = vunpack.c.h.b16 %v1876
    %v1973 = vunpack.c.l.b16 %v1877
    %v1974 = vunpack.c.h.b16 %v1877
    %v1975 = vunpack.c.l.b16 %v1878
    %v1976 = vunpack.c.h.b16 %v1878
    %v1977 = vunpack.c.l.b16 %v1879
    %v1978 = vunpack.c.h.b16 %v1879
    %v1979 = vunpack.c.l.b16 %v1880
    %v1980 = vunpack.c.h.b16 %v1880
    %v1981 = vpack.c.b16 %v1921, %v1917
    %v1982 = vpack.c.b16 %v1922, %v1918
    %v1983 = vpack.c.b16 %v1923, %v1919
    %v1984 = vpack.c.b16 %v1924, %v1920
    %v1985 = vpack.c.b16 %v1929, %v1925
    %v1986 = vpack.c.b16 %v1930, %v1926
    %v1987 = vpack.c.b16 %v1931, %v1927
    %v1988 = vpack.c.b16 %v1932, %v1928
    %v1989 = vpack.c.b16 %v1937, %v1933
    %v1990 = vpack.c.b16 %v1938, %v1934
    %v1991 = vpack.c.b16 %v1939, %v1935
    %v1992 = vpack.c.b16 %v1940, %v1936
    %v1993 = vpack.c.b16 %v1945, %v1941
    %v1994 = vpack.c.b16 %v1946, %v1942
    %v1995 = vpack.c.b16 %v1947, %v1943
    %v1996 = vpack.c.b16 %v1948, %v1944
    %v1997 = vpack.c.b16 %v1953, %v1949
    %v1998 = vpack.c.b16 %v1954, %v1950
    %v1999 = vpack.c.b16 %v1955, %v1951
    %v2000 = vpack.c.b16 %v1956, %v1952
    %v2001 = vpack.c.b16 %v1961, %v1957
    %v2002 = vpack.c.b16 %v1962, %v1958
    %v2003 = vpack.c.b16 %v1963, %v1959
    %v2004 = vpack.c.b16 %v1964, %v1960
    %v2005 = vpack.c.b16 %v1969, %v1965
    %v2006 = vpack.c.b16 %v1970, %v1966
    %v2007 = vpack.c.b16 %v1971, %v1967
    %v2008 = vpack.c.b16 %v1972, %v1968
    %v2009 = vpack.c.b16 %v1977, %v1973
    %v2010 = vpack.c.b16 %v1978, %v1974
    %v2011 = vpack.c.b16 %v1979, %v1975
    %v2012 = vpack.c.b16 %v1980, %v1976
    %2045 = vmatprep.subr.bf16.mxu0 %v2010
    %2046 = vmatpush1.bf16.msra.mxu0 %v2009
    %2047 = vmatprep.subr.bf16.mxu0 %v2006
    %2048 = vmatpush1.bf16.msra.mxu0 %v2005
    %2049 = vmatprep.subr.bf16.mxu0 %v2002
    %2050 = vmatpush1.bf16.msra.mxu0 %v2001
    %2051 = vmatprep.subr.bf16.mxu0 %v1998
    %2052 = vmatpush1.bf16.msra.mxu0 %v1997
    %2053 = vmatprep.subr.bf16.mxu0 %v1994
    %2054 = vmatpush1.bf16.msra.mxu0 %v1993
    %2055 = vmatprep.subr.bf16.mxu0 %v1990
    %2056 = vmatpush1.bf16.msra.mxu0 %v1989
    %2057 = vmatprep.subr.bf16.mxu0 %v1986
    %2058 = vmatpush1.bf16.msra.mxu0 %v1985
    %2059 = vmatprep.subr.bf16.mxu0 %v1982
    %2060 = vmatpush1.bf16.msra.mxu0 %v1981
    %2061 = vmatprep.subr.bf16.mxu0 0
    %2062 = vmatpush2.bf16.msra.mxu0 0
    %2063 = vmatprep.subr.bf16.mxu0 0
    %2064 = vmatpush2.bf16.msra.mxu0 0
    %2065 = vmatprep.subr.bf16.mxu0 0
    %2066 = vmatpush2.bf16.msra.mxu0 0
    %2067 = vmatprep.subr.bf16.mxu0 0
    %2068 = vmatpush2.bf16.msra.mxu0 0
    %2069 = vmatprep.subr.bf16.mxu0 0
    %2070 = vmatpush2.bf16.msra.mxu0 0
    %2071 = vmatprep.subr.bf16.mxu0 0
    %2072 = vmatpush2.bf16.msra.mxu0 0
    %2073 = vmatprep.subr.bf16.mxu0 0
    %2074 = vmatpush2.bf16.msra.mxu0 0
    %2075 = vmatprep.subr.bf16.mxu0 0
    %2076 = vmatpush2.bf16.msra.mxu0 0
    %2077 = vmatprep.mubr.bf16.mxu0 0
    %2078 = vmatmul.mubr.bf16.gmra.mxu0 0
    %v2079 = vpop.f32.mrf.mxu0
    %v2080 = vadd.f32 0.0, %v2079
    %v2081 = vpop.f32.mrf.mxu0
    %v2082 = vadd.f32 0.0, %v2081
    %v2083 = vpop.f32.mrf.mxu0
    %v2084 = vpop.f32.mrf.mxu0
    %2085 = vdwg.mxu0
    %2086 = vmatprep.subr.bf16.mxu0 %v2012
    %2087 = vmatpush1.bf16.msra.mxu0 %v2011
    %2088 = vmatprep.subr.bf16.mxu0 %v2008
    %2089 = vmatpush1.bf16.msra.mxu0 %v2007
    %2090 = vmatprep.subr.bf16.mxu0 %v2004
    %2091 = vmatpush1.bf16.msra.mxu0 %v2003
    %2092 = vmatprep.subr.bf16.mxu0 %v2000
    %2093 = vmatpush1.bf16.msra.mxu0 %v1999
    %2094 = vmatprep.subr.bf16.mxu0 %v1996
    %2095 = vmatpush1.bf16.msra.mxu0 %v1995
    %2096 = vmatprep.subr.bf16.mxu0 %v1992
    %2097 = vmatpush1.bf16.msra.mxu0 %v1991
    %2098 = vmatprep.subr.bf16.mxu0 %v1988
    %2099 = vmatpush1.bf16.msra.mxu0 %v1987
    %2100 = vmatprep.subr.bf16.mxu0 %v1984
    %2101 = vmatpush1.bf16.msra.mxu0 %v1983
    %2102 = vmatprep.subr.bf16.mxu0 0
    %2103 = vmatpush2.bf16.msra.mxu0 0
    %2104 = vmatprep.subr.bf16.mxu0 0
    %2105 = vmatpush2.bf16.msra.mxu0 0
    %2106 = vmatprep.subr.bf16.mxu0 0
    %2107 = vmatpush2.bf16.msra.mxu0 0
    %2108 = vmatprep.subr.bf16.mxu0 0
    %2109 = vmatpush2.bf16.msra.mxu0 0
    %2110 = vmatprep.subr.bf16.mxu0 0
    %2111 = vmatpush2.bf16.msra.mxu0 0
    %2112 = vmatprep.subr.bf16.mxu0 0
    %2113 = vmatpush2.bf16.msra.mxu0 0
    %2114 = vmatprep.subr.bf16.mxu0 0
    %2115 = vmatpush2.bf16.msra.mxu0 0
    %2116 = vmatprep.subr.bf16.mxu0 0
    %2117 = vmatpush2.bf16.msra.mxu0 0
    %2118 = vmatprep.mubr.bf16.mxu0 0
    %2119 = vmatmul.mubr.bf16.gmra.mxu0 0
    %v2120 = vpop.f32.mrf.mxu0
    %v2121 = vadd.f32 0.0, %v2120
    %v2122 = vpop.f32.mrf.mxu0
    %v2123 = vadd.f32 0.0, %v2122
    %v2124 = vpop.f32.mrf.mxu0
    %v2125 = vpop.f32.mrf.mxu0
    %2126 = vdwg.mxu0
    %v2127 = vadd.f32 %v1881, %v2080
    %v2128 = vadd.f32 %v1882, %v2082
    %v2129 = vadd.f32 %v1883, %v2121
    %v2130 = vadd.f32 %v1884, %v2123
    %v2131 = vxor.u32 %v2127, 2147483648
    %v2132 = vmul.f32 %v2131, 1.442695
    %v2133 = vpow.pop %v2132
    %v2134 = vadd.f32 %v2133, 1.0
    %v2135 = vrcp.pop %v2134
    %v2136 = vmul.f32 1.0, %v2135
    %v2137 = vxor.u32 %v2128, 2147483648
    %v2138 = vmul.f32 %v2137, 1.442695
    %v2139 = vpow.pop %v2138
    %v2140 = vadd.f32 %v2139, 1.0
    %v2141 = vrcp.pop %v2140
    %v2142 = vmul.f32 1.0, %v2141
    %v2143 = vtanh.pop %v2129
    %v2144 = vxor.u32 %v2130, 2147483648
    %v2145 = vmul.f32 %v2144, 1.442695
    %v2146 = vpow.pop %v2145
    %v2147 = vadd.f32 %v2146, 1.0
    %v2148 = vrcp.pop %v2147
    %v2149 = vmul.f32 1.0, %v2148
    %v2150 = vmul.f32 %v2142, 0.0
    %v2151 = vmul.f32 %v2136, %v2143
    %v2152 = vadd.f32 %v2150, %v2151
    %v2153 = vtanh.pop %v2152
    %v2154 = vmul.f32 %v2149, %v2153
    %v2155 = vld [vmem:[#allocation2 + $0x20] sm:$0xff]
    %v2156 = vld [vmem:[#allocation2 + $0x28] sm:$0xff]
    %v2157 = vld [vmem:[#allocation2 + $0x30] sm:$0xff]
    %v2158 = vld [vmem:[#allocation2 + $0x38] sm:$0xff]
    %v2159 = vpack.c.bf16 %v2154, %v2154
    %2160 = vmatprep.subr.bf16.mxu0 %v2010
    %2161 = vmatpush1.bf16.msra.mxu0 %v2009
    %2162 = vmatprep.subr.bf16.mxu0 %v2006
    %2163 = vmatpush1.bf16.msra.mxu0 %v2005
    %2164 = vmatprep.subr.bf16.mxu0 %v2002
    %2165 = vmatpush1.bf16.msra.mxu0 %v2001
    %2166 = vmatprep.subr.bf16.mxu0 %v1998
    %2167 = vmatpush1.bf16.msra.mxu0 %v1997
    %2168 = vmatprep.subr.bf16.mxu0 %v1994
    %2169 = vmatpush1.bf16.msra.mxu0 %v1993
    %2170 = vmatprep.subr.bf16.mxu0 %v1990
    %2171 = vmatpush1.bf16.msra.mxu0 %v1989
    %2172 = vmatprep.subr.bf16.mxu0 %v1986
    %2173 = vmatpush1.bf16.msra.mxu0 %v1985
    %2174 = vmatprep.subr.bf16.mxu0 %v1982
    %2175 = vmatpush1.bf16.msra.mxu0 %v1981
    %2176 = vmatprep.subr.bf16.mxu0 0
    %2177 = vmatpush2.bf16.msra.mxu0 0
    %2178 = vmatprep.subr.bf16.mxu0 0
    %2179 = vmatpush2.bf16.msra.mxu0 0
    %2180 = vmatprep.subr.bf16.mxu0 0
    %2181 = vmatpush2.bf16.msra.mxu0 0
    %2182 = vmatprep.subr.bf16.mxu0 0
    %2183 = vmatpush2.bf16.msra.mxu0 0
    %2184 = vmatprep.subr.bf16.mxu0 0
    %2185 = vmatpush2.bf16.msra.mxu0 0
    %2186 = vmatprep.subr.bf16.mxu0 0
    %2187 = vmatpush2.bf16.msra.mxu0 0
    %2188 = vmatprep.subr.bf16.mxu0 0
    %2189 = vmatpush2.bf16.msra.mxu0 0
    %2190 = vmatprep.subr.bf16.mxu0 0
    %2191 = vmatpush2.bf16.msra.mxu0 0
    %2192 = vmatprep.mubr.bf16.mxu0 0
    %2193 = vmatmul.mubr.bf16.gmra.mxu0 %v2159
    %v2194 = vpop.f32.mrf.mxu0
    %v2195 = vadd.f32 0.0, %v2194
    %v2196 = vpop.f32.mrf.mxu0
    %v2197 = vadd.f32 0.0, %v2196
    %v2198 = vpop.f32.mrf.mxu0
    %v2199 = vpop.f32.mrf.mxu0
    %2200 = vdwg.mxu0
    %2201 = vmatprep.subr.bf16.mxu0 %v2012
    %2202 = vmatpush1.bf16.msra.mxu0 %v2011
    %2203 = vmatprep.subr.bf16.mxu0 %v2008
    %2204 = vmatpush1.bf16.msra.mxu0 %v2007
    %2205 = vmatprep.subr.bf16.mxu0 %v2004
    %2206 = vmatpush1.bf16.msra.mxu0 %v2003
    %2207 = vmatprep.subr.bf16.mxu0 %v2000
    %2208 = vmatpush1.bf16.msra.mxu0 %v1999
    %2209 = vmatprep.subr.bf16.mxu0 %v1996
    %2210 = vmatpush1.bf16.msra.mxu0 %v1995
    %2211 = vmatprep.subr.bf16.mxu0 %v1992
    %2212 = vmatpush1.bf16.msra.mxu0 %v1991
    %2213 = vmatprep.subr.bf16.mxu0 %v1988
    %2214 = vmatpush1.bf16.msra.mxu0 %v1987
    %2215 = vmatprep.subr.bf16.mxu0 %v1984
    %2216 = vmatpush1.bf16.msra.mxu0 %v1983
    %2217 = vmatprep.subr.bf16.mxu0 0
    %2218 = vmatpush2.bf16.msra.mxu0 0
    %2219 = vmatprep.subr.bf16.mxu0 0
    %2220 = vmatpush2.bf16.msra.mxu0 0
    %2221 = vmatprep.subr.bf16.mxu0 0
    %2222 = vmatpush2.bf16.msra.mxu0 0
    %2223 = vmatprep.subr.bf16.mxu0 0
    %2224 = vmatpush2.bf16.msra.mxu0 0
    %2225 = vmatprep.subr.bf16.mxu0 0
    %2226 = vmatpush2.bf16.msra.mxu0 0
    %2227 = vmatprep.subr.bf16.mxu0 0
    %2228 = vmatpush2.bf16.msra.mxu0 0
    %2229 = vmatprep.subr.bf16.mxu0 0
    %2230 = vmatpush2.bf16.msra.mxu0 0
    %2231 = vmatprep.subr.bf16.mxu0 0
    %2232 = vmatpush2.bf16.msra.mxu0 0
    %2233 = vmatprep.mubr.bf16.mxu0 0
    %2234 = vmatmul.mubr.bf16.gmra.mxu0 %v2159
    %v2235 = vpop.f32.mrf.mxu0
    %v2236 = vadd.f32 0.0, %v2235
    %v2237 = vpop.f32.mrf.mxu0
    %v2238 = vadd.f32 0.0, %v2237
    %v2239 = vpop.f32.mrf.mxu0
    %v2240 = vpop.f32.mrf.mxu0
    %2241 = vdwg.mxu0
    %v2242 = vadd.f32 %v2155, %v2195
    %v2243 = vadd.f32 %v2156, %v2197
    %v2244 = vadd.f32 %v2157, %v2236
    %v2245 = vadd.f32 %v2158, %v2238
    %v2246 = vxor.u32 %v2242, 2147483648
    %v2247 = vmul.f32 %v2246, 1.442695
    %v2248 = vpow.pop %v2247
    %v2249 = vadd.f32 %v2248, 1.0
    %v2250 = vrcp.pop %v2249
    %v2251 = vmul.f32 1.0, %v2250
    %v2252 = vxor.u32 %v2243, 2147483648
    %v2253 = vmul.f32 %v2252, 1.442695
    %v2254 = vpow.pop %v2253
    %v2255 = vadd.f32 %v2254, 1.0
    %v2256 = vrcp.pop %v2255
    %v2257 = vmul.f32 1.0, %v2256
    %v2258 = vtanh.pop %v2244
    %v2259 = vxor.u32 %v2245, 2147483648
    %v2260 = vmul.f32 %v2259, 1.442695
    %v2261 = vpow.pop %v2260
    %v2262 = vadd.f32 %v2261, 1.0
    %v2263 = vrcp.pop %v2262
    %v2264 = vmul.f32 1.0, %v2263
    %v2265 = vmul.f32 %v2257, %v2152
    %v2266 = vmul.f32 %v2251, %v2258
    %v2267 = vadd.f32 %v2265, %v2266
    %v2268 = vtanh.pop %v2267
    %v2269 = vmul.f32 %v2264, %v2268
    %v2270 = vld [vmem:[#allocation2 + $0x40] sm:$0xff]
    %v2271 = vld [vmem:[#allocation2 + $0x48] sm:$0xff]
    %v2272 = vld [vmem:[#allocation2 + $0x50] sm:$0xff]
    %v2273 = vld [vmem:[#allocation2 + $0x58] sm:$0xff]
    %v2274 = vpack.c.bf16 %v2269, %v2269
    %2275 = vmatprep.subr.bf16.mxu0 %v2010
    %2276 = vmatpush1.bf16.msra.mxu0 %v2009
    %2277 = vmatprep.subr.bf16.mxu0 %v2006
    %2278 = vmatpush1.bf16.msra.mxu0 %v2005
    %2279 = vmatprep.subr.bf16.mxu0 %v2002
    %2280 = vmatpush1.bf16.msra.mxu0 %v2001
    %2281 = vmatprep.subr.bf16.mxu0 %v1998
    %2282 = vmatpush1.bf16.msra.mxu0 %v1997
    %2283 = vmatprep.subr.bf16.mxu0 %v1994
    %2284 = vmatpush1.bf16.msra.mxu0 %v1993
    %2285 = vmatprep.subr.bf16.mxu0 %v1990
    %2286 = vmatpush1.bf16.msra.mxu0 %v1989
    %2287 = vmatprep.subr.bf16.mxu0 %v1986
    %2288 = vmatpush1.bf16.msra.mxu0 %v1985
    %2289 = vmatprep.subr.bf16.mxu0 %v1982
    %2290 = vmatpush1.bf16.msra.mxu0 %v1981
    %2291 = vmatprep.subr.bf16.mxu0 0
    %2292 = vmatpush2.bf16.msra.mxu0 0
    %2293 = vmatprep.subr.bf16.mxu0 0
    %2294 = vmatpush2.bf16.msra.mxu0 0
    %2295 = vmatprep.subr.bf16.mxu0 0
    %2296 = vmatpush2.bf16.msra.mxu0 0
    %2297 = vmatprep.subr.bf16.mxu0 0
    %2298 = vmatpush2.bf16.msra.mxu0 0
    %2299 = vmatprep.subr.bf16.mxu0 0
    %2300 = vmatpush2.bf16.msra.mxu0 0
    %2301 = vmatprep.subr.bf16.mxu0 0
    %2302 = vmatpush2.bf16.msra.mxu0 0
    %2303 = vmatprep.subr.bf16.mxu0 0
    %2304 = vmatpush2.bf16.msra.mxu0 0
    %2305 = vmatprep.subr.bf16.mxu0 0
    %2306 = vmatpush2.bf16.msra.mxu0 0
    %2307 = vmatprep.mubr.bf16.mxu0 0
    %2308 = vmatmul.mubr.bf16.gmra.mxu0 %v2274
    %v2309 = vpop.f32.mrf.mxu0
    %v2310 = vadd.f32 0.0, %v2309
    %v2311 = vpop.f32.mrf.mxu0
    %v2312 = vadd.f32 0.0, %v2311
    %v2313 = vpop.f32.mrf.mxu0
    %v2314 = vpop.f32.mrf.mxu0
    %2315 = vdwg.mxu0
    %2316 = vmatprep.subr.bf16.mxu0 %v2012
    %2317 = vmatpush1.bf16.msra.mxu0 %v2011
    %2318 = vmatprep.subr.bf16.mxu0 %v2008
    %2319 = vmatpush1.bf16.msra.mxu0 %v2007
    %2320 = vmatprep.subr.bf16.mxu0 %v2004
    %2321 = vmatpush1.bf16.msra.mxu0 %v2003
    %2322 = vmatprep.subr.bf16.mxu0 %v2000
    %2323 = vmatpush1.bf16.msra.mxu0 %v1999
    %2324 = vmatprep.subr.bf16.mxu0 %v1996
    %2325 = vmatpush1.bf16.msra.mxu0 %v1995
    %2326 = vmatprep.subr.bf16.mxu0 %v1992
    %2327 = vmatpush1.bf16.msra.mxu0 %v1991
    %2328 = vmatprep.subr.bf16.mxu0 %v1988
    %2329 = vmatpush1.bf16.msra.mxu0 %v1987
    %2330 = vmatprep.subr.bf16.mxu0 %v1984
    %2331 = vmatpush1.bf16.msra.mxu0 %v1983
    %2332 = vmatprep.subr.bf16.mxu0 0
    %2333 = vmatpush2.bf16.msra.mxu0 0
    %2334 = vmatprep.subr.bf16.mxu0 0
    %2335 = vmatpush2.bf16.msra.mxu0 0
    %2336 = vmatprep.subr.bf16.mxu0 0
    %2337 = vmatpush2.bf16.msra.mxu0 0
    %2338 = vmatprep.subr.bf16.mxu0 0
    %2339 = vmatpush2.bf16.msra.mxu0 0
    %2340 = vmatprep.subr.bf16.mxu0 0
    %2341 = vmatpush2.bf16.msra.mxu0 0
    %2342 = vmatprep.subr.bf16.mxu0 0
    %2343 = vmatpush2.bf16.msra.mxu0 0
    %2344 = vmatprep.subr.bf16.mxu0 0
    %2345 = vmatpush2.bf16.msra.mxu0 0
    %2346 = vmatprep.subr.bf16.mxu0 0
    %2347 = vmatpush2.bf16.msra.mxu0 0
    %2348 = vmatprep.mubr.bf16.mxu0 0
    %2349 = vmatmul.mubr.bf16.gmra.mxu0 %v2274
    %v2350 = vpop.f32.mrf.mxu0
    %v2351 = vadd.f32 0.0, %v2350
    %v2352 = vpop.f32.mrf.mxu0
    %v2353 = vadd.f32 0.0, %v2352
    %v2354 = vpop.f32.mrf.mxu0
    %v2355 = vpop.f32.mrf.mxu0
    %2356 = vdwg.mxu0
    %v2357 = vadd.f32 %v2270, %v2310
    %v2358 = vadd.f32 %v2271, %v2312
    %v2359 = vadd.f32 %v2272, %v2351
    %v2360 = vadd.f32 %v2273, %v2353
    %v2361 = vxor.u32 %v2357, 2147483648
    %v2362 = vmul.f32 %v2361, 1.442695
    %v2363 = vpow.pop %v2362
    %v2364 = vadd.f32 %v2363, 1.0
    %v2365 = vrcp.pop %v2364
    %v2366 = vmul.f32 1.0, %v2365
    %v2367 = vxor.u32 %v2358, 2147483648
    %v2368 = vmul.f32 %v2367, 1.442695
    %v2369 = vpow.pop %v2368
    %v2370 = vadd.f32 %v2369, 1.0
    %v2371 = vrcp.pop %v2370
    %v2372 = vmul.f32 1.0, %v2371
    %v2373 = vtanh.pop %v2359
    %v2374 = vxor.u32 %v2360, 2147483648
    %v2375 = vmul.f32 %v2374, 1.442695
    %v2376 = vpow.pop %v2375
    %v2377 = vadd.f32 %v2376, 1.0
    %v2378 = vrcp.pop %v2377
    %v2379 = vmul.f32 1.0, %v2378
    %v2380 = vmul.f32 %v2372, %v2267
    %v2381 = vmul.f32 %v2366, %v2373
    %v2382 = vadd.f32 %v2380, %v2381
    %v2383 = vtanh.pop %v2382
    %v2384 = vmul.f32 %v2379, %v2383
    %v2385 = vld [vmem:[#allocation2 + $0x60] sm:$0xff]
    %v2386 = vld [vmem:[#allocation2 + $0x68] sm:$0xff]
    %v2387 = vld [vmem:[#allocation2 + $0x70] sm:$0xff]
    %v2388 = vld [vmem:[#allocation2 + $0x78] sm:$0xff]
    %v2389 = vpack.c.bf16 %v2384, %v2384
    %2390 = vmatprep.subr.bf16.mxu0 %v2010
    %2391 = vmatpush1.bf16.msra.mxu0 %v2009
    %2392 = vmatprep.subr.bf16.mxu0 %v2006
    %2393 = vmatpush1.bf16.msra.mxu0 %v2005
    %2394 = vmatprep.subr.bf16.mxu0 %v2002
    %2395 = vmatpush1.bf16.msra.mxu0 %v2001
    %2396 = vmatprep.subr.bf16.mxu0 %v1998
    %2397 = vmatpush1.bf16.msra.mxu0 %v1997
    %2398 = vmatprep.subr.bf16.mxu0 %v1994
    %2399 = vmatpush1.bf16.msra.mxu0 %v1993
    %2400 = vmatprep.subr.bf16.mxu0 %v1990
    %2401 = vmatpush1.bf16.msra.mxu0 %v1989
    %2402 = vmatprep.subr.bf16.mxu0 %v1986
    %2403 = vmatpush1.bf16.msra.mxu0 %v1985
    %2404 = vmatprep.subr.bf16.mxu0 %v1982
    %2405 = vmatpush1.bf16.msra.mxu0 %v1981
    %2406 = vmatprep.subr.bf16.mxu0 0
    %2407 = vmatpush2.bf16.msra.mxu0 0
    %2408 = vmatprep.subr.bf16.mxu0 0
    %2409 = vmatpush2.bf16.msra.mxu0 0
    %2410 = vmatprep.subr.bf16.mxu0 0
    %2411 = vmatpush2.bf16.msra.mxu0 0
    %2412 = vmatprep.subr.bf16.mxu0 0
    %2413 = vmatpush2.bf16.msra.mxu0 0
    %2414 = vmatprep.subr.bf16.mxu0 0
    %2415 = vmatpush2.bf16.msra.mxu0 0
    %2416 = vmatprep.subr.bf16.mxu0 0
    %2417 = vmatpush2.bf16.msra.mxu0 0
    %2418 = vmatprep.subr.bf16.mxu0 0
    %2419 = vmatpush2.bf16.msra.mxu0 0
    %2420 = vmatprep.subr.bf16.mxu0 0
    %2421 = vmatpush2.bf16.msra.mxu0 0
    %2422 = vmatprep.mubr.bf16.mxu0 0
    %2423 = vmatmul.mubr.bf16.gmra.mxu0 %v2389
    %v2424 = vpop.f32.mrf.mxu0
    %v2425 = vadd.f32 0.0, %v2424
    %v2426 = vpop.f32.mrf.mxu0
    %v2427 = vadd.f32 0.0, %v2426
    %v2428 = vpop.f32.mrf.mxu0
    %v2429 = vpop.f32.mrf.mxu0
    %2430 = vdwg.mxu0
    %2431 = vmatprep.subr.bf16.mxu0 %v2012
    %2432 = vmatpush1.bf16.msra.mxu0 %v2011
    %2433 = vmatprep.subr.bf16.mxu0 %v2008
    %2434 = vmatpush1.bf16.msra.mxu0 %v2007
    %2435 = vmatprep.subr.bf16.mxu0 %v2004
    %2436 = vmatpush1.bf16.msra.mxu0 %v2003
    %2437 = vmatprep.subr.bf16.mxu0 %v2000
    %2438 = vmatpush1.bf16.msra.mxu0 %v1999
    %2439 = vmatprep.subr.bf16.mxu0 %v1996
    %2440 = vmatpush1.bf16.msra.mxu0 %v1995
    %2441 = vmatprep.subr.bf16.mxu0 %v1992
    %2442 = vmatpush1.bf16.msra.mxu0 %v1991
    %2443 = vmatprep.subr.bf16.mxu0 %v1988
    %2444 = vmatpush1.bf16.msra.mxu0 %v1987
    %2445 = vmatprep.subr.bf16.mxu0 %v1984
    %2446 = vmatpush1.bf16.msra.mxu0 %v1983
    %2447 = vmatprep.subr.bf16.mxu0 0
    %2448 = vmatpush2.bf16.msra.mxu0 0
    %2449 = vmatprep.subr.bf16.mxu0 0
    %2450 = vmatpush2.bf16.msra.mxu0 0
    %2451 = vmatprep.subr.bf16.mxu0 0
    %2452 = vmatpush2.bf16.msra.mxu0 0
    %2453 = vmatprep.subr.bf16.mxu0 0
    %2454 = vmatpush2.bf16.msra.mxu0 0
    %2455 = vmatprep.subr.bf16.mxu0 0
    %2456 = vmatpush2.bf16.msra.mxu0 0
    %2457 = vmatprep.subr.bf16.mxu0 0
    %2458 = vmatpush2.bf16.msra.mxu0 0
    %2459 = vmatprep.subr.bf16.mxu0 0
    %2460 = vmatpush2.bf16.msra.mxu0 0
    %2461 = vmatprep.subr.bf16.mxu0 0
    %2462 = vmatpush2.bf16.msra.mxu0 0
    %2463 = vmatprep.mubr.bf16.mxu0 0
    %2464 = vmatmul.mubr.bf16.gmra.mxu0 %v2389
    %v2465 = vpop.f32.mrf.mxu0
    %v2466 = vadd.f32 0.0, %v2465
    %v2467 = vpop.f32.mrf.mxu0
    %v2468 = vadd.f32 0.0, %v2467
    %v2469 = vpop.f32.mrf.mxu0
    %v2470 = vpop.f32.mrf.mxu0
    %2471 = vdwg.mxu0
    %v2472 = vadd.f32 %v2385, %v2425
    %v2473 = vadd.f32 %v2386, %v2427
    %v2474 = vadd.f32 %v2387, %v2466
    %v2475 = vadd.f32 %v2388, %v2468
    %v2476 = vxor.u32 %v2472, 2147483648
    %v2477 = vmul.f32 %v2476, 1.442695
    %v2478 = vpow.pop %v2477
    %v2479 = vadd.f32 %v2478, 1.0
    %v2480 = vrcp.pop %v2479
    %v2481 = vmul.f32 1.0, %v2480
    %v2482 = vxor.u32 %v2473, 2147483648
    %v2483 = vmul.f32 %v2482, 1.442695
    %v2484 = vpow.pop %v2483
    %v2485 = vadd.f32 %v2484, 1.0
    %v2486 = vrcp.pop %v2485
    %v2487 = vmul.f32 1.0, %v2486
    %v2488 = vtanh.pop %v2474
    %v2489 = vxor.u32 %v2475, 2147483648
    %v2490 = vmul.f32 %v2489, 1.442695
    %v2491 = vpow.pop %v2490
    %v2492 = vadd.f32 %v2491, 1.0
    %v2493 = vrcp.pop %v2492
    %v2494 = vmul.f32 1.0, %v2493
    %v2495 = vmul.f32 %v2487, %v2382
    %v2496 = vmul.f32 %v2481, %v2488
    %v2497 = vadd.f32 %v2495, %v2496
    %v2498 = vtanh.pop %v2497
    %v2499 = vmul.f32 %v2494, %v2498
    %v2500 = vld [vmem:[#allocation2 + $0x80] sm:$0xff]
    %v2501 = vld [vmem:[#allocation2 + $0x88] sm:$0xff]
    %v2502 = vld [vmem:[#allocation2 + $0x90] sm:$0xff]
    %v2503 = vld [vmem:[#allocation2 + $0x98] sm:$0xff]
    %v2504 = vpack.c.bf16 %v2499, %v2499
    %2505 = vmatprep.subr.bf16.mxu0 %v2010
    %2506 = vmatpush1.bf16.msra.mxu0 %v2009
    %2507 = vmatprep.subr.bf16.mxu0 %v2006
    %2508 = vmatpush1.bf16.msra.mxu0 %v2005
    %2509 = vmatprep.subr.bf16.mxu0 %v2002
    %2510 = vmatpush1.bf16.msra.mxu0 %v2001
    %2511 = vmatprep.subr.bf16.mxu0 %v1998
    %2512 = vmatpush1.bf16.msra.mxu0 %v1997
    %2513 = vmatprep.subr.bf16.mxu0 %v1994
    %2514 = vmatpush1.bf16.msra.mxu0 %v1993
    %2515 = vmatprep.subr.bf16.mxu0 %v1990
    %2516 = vmatpush1.bf16.msra.mxu0 %v1989
    %2517 = vmatprep.subr.bf16.mxu0 %v1986
    %2518 = vmatpush1.bf16.msra.mxu0 %v1985
    %2519 = vmatprep.subr.bf16.mxu0 %v1982
    %2520 = vmatpush1.bf16.msra.mxu0 %v1981
    %2521 = vmatprep.subr.bf16.mxu0 0
    %2522 = vmatpush2.bf16.msra.mxu0 0
    %2523 = vmatprep.subr.bf16.mxu0 0
    %2524 = vmatpush2.bf16.msra.mxu0 0
    %2525 = vmatprep.subr.bf16.mxu0 0
    %2526 = vmatpush2.bf16.msra.mxu0 0
    %2527 = vmatprep.subr.bf16.mxu0 0
    %2528 = vmatpush2.bf16.msra.mxu0 0
    %2529 = vmatprep.subr.bf16.mxu0 0
    %2530 = vmatpush2.bf16.msra.mxu0 0
    %2531 = vmatprep.subr.bf16.mxu0 0
    %2532 = vmatpush2.bf16.msra.mxu0 0
    %2533 = vmatprep.subr.bf16.mxu0 0
    %2534 = vmatpush2.bf16.msra.mxu0 0
    %2535 = vmatprep.subr.bf16.mxu0 0
    %2536 = vmatpush2.bf16.msra.mxu0 0
    %2537 = vmatprep.mubr.bf16.mxu0 0
    %2538 = vmatmul.mubr.bf16.gmra.mxu0 %v2504
    %v2539 = vpop.f32.mrf.mxu0
    %v2540 = vadd.f32 0.0, %v2539
    %v2541 = vpop.f32.mrf.mxu0
    %v2542 = vadd.f32 0.0, %v2541
    %v2543 = vpop.f32.mrf.mxu0
    %v2544 = vpop.f32.mrf.mxu0
    %2545 = vdwg.mxu0
    %2546 = vmatprep.subr.bf16.mxu0 %v2012
    %2547 = vmatpush1.bf16.msra.mxu0 %v2011
    %2548 = vmatprep.subr.bf16.mxu0 %v2008
    %2549 = vmatpush1.bf16.msra.mxu0 %v2007
    %2550 = vmatprep.subr.bf16.mxu0 %v2004
    %2551 = vmatpush1.bf16.msra.mxu0 %v2003
    %2552 = vmatprep.subr.bf16.mxu0 %v2000
    %2553 = vmatpush1.bf16.msra.mxu0 %v1999
    %2554 = vmatprep.subr.bf16.mxu0 %v1996
    %2555 = vmatpush1.bf16.msra.mxu0 %v1995
    %2556 = vmatprep.subr.bf16.mxu0 %v1992
    %2557 = vmatpush1.bf16.msra.mxu0 %v1991
    %2558 = vmatprep.subr.bf16.mxu0 %v1988
    %2559 = vmatpush1.bf16.msra.mxu0 %v1987
    %2560 = vmatprep.subr.bf16.mxu0 %v1984
    %2561 = vmatpush1.bf16.msra.mxu0 %v1983
    %2562 = vmatprep.subr.bf16.mxu0 0
    %2563 = vmatpush2.bf16.msra.mxu0 0
    %2564 = vmatprep.subr.bf16.mxu0 0
    %2565 = vmatpush2.bf16.msra.mxu0 0
    %2566 = vmatprep.subr.bf16.mxu0 0
    %2567 = vmatpush2.bf16.msra.mxu0 0
    %2568 = vmatprep.subr.bf16.mxu0 0
    %2569 = vmatpush2.bf16.msra.mxu0 0
    %2570 = vmatprep.subr.bf16.mxu0 0
    %2571 = vmatpush2.bf16.msra.mxu0 0
    %2572 = vmatprep.subr.bf16.mxu0 0
    %2573 = vmatpush2.bf16.msra.mxu0 0
    %2574 = vmatprep.subr.bf16.mxu0 0
    %2575 = vmatpush2.bf16.msra.mxu0 0
    %2576 = vmatprep.subr.bf16.mxu0 0
    %2577 = vmatpush2.bf16.msra.mxu0 0
    %2578 = vmatprep.mubr.bf16.mxu0 0
    %2579 = vmatmul.mubr.bf16.gmra.mxu0 %v2504
    %v2580 = vpop.f32.mrf.mxu0
    %v2581 = vadd.f32 0.0, %v2580
    %v2582 = vpop.f32.mrf.mxu0
    %v2583 = vadd.f32 0.0, %v2582
    %v2584 = vpop.f32.mrf.mxu0
    %v2585 = vpop.f32.mrf.mxu0
    %2586 = vdwg.mxu0
    %v2587 = vadd.f32 %v2500, %v2540
    %v2588 = vadd.f32 %v2501, %v2542
    %v2589 = vadd.f32 %v2502, %v2581
    %v2590 = vadd.f32 %v2503, %v2583
    %v2591 = vxor.u32 %v2587, 2147483648
    %v2592 = vmul.f32 %v2591, 1.442695
    %v2593 = vpow.pop %v2592
    %v2594 = vadd.f32 %v2593, 1.0
    %v2595 = vrcp.pop %v2594
    %v2596 = vmul.f32 1.0, %v2595
    %v2597 = vxor.u32 %v2588, 2147483648
    %v2598 = vmul.f32 %v2597, 1.442695
    %v2599 = vpow.pop %v2598
    %v2600 = vadd.f32 %v2599, 1.0
    %v2601 = vrcp.pop %v2600
    %v2602 = vmul.f32 1.0, %v2601
    %v2603 = vtanh.pop %v2589
    %v2604 = vxor.u32 %v2590, 2147483648
    %v2605 = vmul.f32 %v2604, 1.442695
    %v2606 = vpow.pop %v2605
    %v2607 = vadd.f32 %v2606, 1.0
    %v2608 = vrcp.pop %v2607
    %v2609 = vmul.f32 1.0, %v2608
    %v2610 = vmul.f32 %v2602, %v2497
    %v2611 = vmul.f32 %v2596, %v2603
    %v2612 = vadd.f32 %v2610, %v2611
    %v2613 = vtanh.pop %v2612
    %v2614 = vmul.f32 %v2609, %v2613
    %v2615 = vld [vmem:[#allocation2 + $0xa0] sm:$0xff]
    %v2616 = vld [vmem:[#allocation2 + $0xa8] sm:$0xff]
    %v2617 = vld [vmem:[#allocation2 + $0xb0] sm:$0xff]
    %v2618 = vld [vmem:[#allocation2 + $0xb8] sm:$0xff]
    %v2619 = vpack.c.bf16 %v2614, %v2614
    %2620 = vmatprep.subr.bf16.mxu0 %v2010
    %2621 = vmatpush1.bf16.msra.mxu0 %v2009
    %2622 = vmatprep.subr.bf16.mxu0 %v2006
    %2623 = vmatpush1.bf16.msra.mxu0 %v2005
    %2624 = vmatprep.subr.bf16.mxu0 %v2002
    %2625 = vmatpush1.bf16.msra.mxu0 %v2001
    %2626 = vmatprep.subr.bf16.mxu0 %v1998
    %2627 = vmatpush1.bf16.msra.mxu0 %v1997
    %2628 = vmatprep.subr.bf16.mxu0 %v1994
    %2629 = vmatpush1.bf16.msra.mxu0 %v1993
    %2630 = vmatprep.subr.bf16.mxu0 %v1990
    %2631 = vmatpush1.bf16.msra.mxu0 %v1989
    %2632 = vmatprep.subr.bf16.mxu0 %v1986
    %2633 = vmatpush1.bf16.msra.mxu0 %v1985
    %2634 = vmatprep.subr.bf16.mxu0 %v1982
    %2635 = vmatpush1.bf16.msra.mxu0 %v1981
    %2636 = vmatprep.subr.bf16.mxu0 0
    %2637 = vmatpush2.bf16.msra.mxu0 0
    %2638 = vmatprep.subr.bf16.mxu0 0
    %2639 = vmatpush2.bf16.msra.mxu0 0
    %2640 = vmatprep.subr.bf16.mxu0 0
    %2641 = vmatpush2.bf16.msra.mxu0 0
    %2642 = vmatprep.subr.bf16.mxu0 0
    %2643 = vmatpush2.bf16.msra.mxu0 0
    %2644 = vmatprep.subr.bf16.mxu0 0
    %2645 = vmatpush2.bf16.msra.mxu0 0
    %2646 = vmatprep.subr.bf16.mxu0 0
    %2647 = vmatpush2.bf16.msra.mxu0 0
    %2648 = vmatprep.subr.bf16.mxu0 0
    %2649 = vmatpush2.bf16.msra.mxu0 0
    %2650 = vmatprep.subr.bf16.mxu0 0
    %2651 = vmatpush2.bf16.msra.mxu0 0
    %2652 = vmatprep.mubr.bf16.mxu0 0
    %2653 = vmatmul.mubr.bf16.gmra.mxu0 %v2619
    %v2654 = vpop.f32.mrf.mxu0
    %v2655 = vadd.f32 0.0, %v2654
    %v2656 = vpop.f32.mrf.mxu0
    %v2657 = vadd.f32 0.0, %v2656
    %v2658 = vpop.f32.mrf.mxu0
    %v2659 = vpop.f32.mrf.mxu0
    %2660 = vdwg.mxu0
    %2661 = vmatprep.subr.bf16.mxu0 %v2012
    %2662 = vmatpush1.bf16.msra.mxu0 %v2011
    %2663 = vmatprep.subr.bf16.mxu0 %v2008
    %2664 = vmatpush1.bf16.msra.mxu0 %v2007
    %2665 = vmatprep.subr.bf16.mxu0 %v2004
    %2666 = vmatpush1.bf16.msra.mxu0 %v2003
    %2667 = vmatprep.subr.bf16.mxu0 %v2000
    %2668 = vmatpush1.bf16.msra.mxu0 %v1999
    %2669 = vmatprep.subr.bf16.mxu0 %v1996
    %2670 = vmatpush1.bf16.msra.mxu0 %v1995
    %2671 = vmatprep.subr.bf16.mxu0 %v1992
    %2672 = vmatpush1.bf16.msra.mxu0 %v1991
    %2673 = vmatprep.subr.bf16.mxu0 %v1988
    %2674 = vmatpush1.bf16.msra.mxu0 %v1987
    %2675 = vmatprep.subr.bf16.mxu0 %v1984
    %2676 = vmatpush1.bf16.msra.mxu0 %v1983
    %2677 = vmatprep.subr.bf16.mxu0 0
    %2678 = vmatpush2.bf16.msra.mxu0 0
    %2679 = vmatprep.subr.bf16.mxu0 0
    %2680 = vmatpush2.bf16.msra.mxu0 0
    %2681 = vmatprep.subr.bf16.mxu0 0
    %2682 = vmatpush2.bf16.msra.mxu0 0
    %2683 = vmatprep.subr.bf16.mxu0 0
    %2684 = vmatpush2.bf16.msra.mxu0 0
    %2685 = vmatprep.subr.bf16.mxu0 0
    %2686 = vmatpush2.bf16.msra.mxu0 0
    %2687 = vmatprep.subr.bf16.mxu0 0
    %2688 = vmatpush2.bf16.msra.mxu0 0
    %2689 = vmatprep.subr.bf16.mxu0 0
    %2690 = vmatpush2.bf16.msra.mxu0 0
    %2691 = vmatprep.subr.bf16.mxu0 0
    %2692 = vmatpush2.bf16.msra.mxu0 0
    %2693 = vmatprep.mubr.bf16.mxu0 0
    %2694 = vmatmul.mubr.bf16.gmra.mxu0 %v2619
    %v2695 = vpop.f32.mrf.mxu0
    %v2696 = vadd.f32 0.0, %v2695
    %v2697 = vpop.f32.mrf.mxu0
    %v2698 = vadd.f32 0.0, %v2697
    %v2699 = vpop.f32.mrf.mxu0
    %v2700 = vpop.f32.mrf.mxu0
    %2701 = vdwg.mxu0
    %v2702 = vadd.f32 %v2615, %v2655
    %v2703 = vadd.f32 %v2616, %v2657
    %v2704 = vadd.f32 %v2617, %v2696
    %v2705 = vadd.f32 %v2618, %v2698
    %v2706 = vxor.u32 %v2702, 2147483648
    %v2707 = vmul.f32 %v2706, 1.442695
    %v2708 = vpow.pop %v2707
    %v2709 = vadd.f32 %v2708, 1.0
    %v2710 = vrcp.pop %v2709
    %v2711 = vmul.f32 1.0, %v2710
    %v2712 = vxor.u32 %v2703, 2147483648
    %v2713 = vmul.f32 %v2712, 1.442695
    %v2714 = vpow.pop %v2713
    %v2715 = vadd.f32 %v2714, 1.0
    %v2716 = vrcp.pop %v2715
    %v2717 = vmul.f32 1.0, %v2716
    %v2718 = vtanh.pop %v2704
    %v2719 = vxor.u32 %v2705, 2147483648
    %v2720 = vmul.f32 %v2719, 1.442695
    %v2721 = vpow.pop %v2720
    %v2722 = vadd.f32 %v2721, 1.0
    %v2723 = vrcp.pop %v2722
    %v2724 = vmul.f32 1.0, %v2723
    %v2725 = vmul.f32 %v2717, %v2612
    %v2726 = vmul.f32 %v2711, %v2718
    %v2727 = vadd.f32 %v2725, %v2726
    %v2728 = vtanh.pop %v2727
    %v2729 = vmul.f32 %v2724, %v2728
    %v2730 = vld [vmem:[#allocation2 + $0xc0] sm:$0xff]
    %v2731 = vld [vmem:[#allocation2 + $0xc8] sm:$0xff]
    %v2732 = vld [vmem:[#allocation2 + $0xd0] sm:$0xff]
    %v2733 = vld [vmem:[#allocation2 + $0xd8] sm:$0xff]
    %v2734 = vpack.c.bf16 %v2729, %v2729
    %2735 = vmatprep.subr.bf16.mxu0 %v2010
    %2736 = vmatpush1.bf16.msra.mxu0 %v2009
    %2737 = vmatprep.subr.bf16.mxu0 %v2006
    %2738 = vmatpush1.bf16.msra.mxu0 %v2005
    %2739 = vmatprep.subr.bf16.mxu0 %v2002
    %2740 = vmatpush1.bf16.msra.mxu0 %v2001
    %2741 = vmatprep.subr.bf16.mxu0 %v1998
    %2742 = vmatpush1.bf16.msra.mxu0 %v1997
    %2743 = vmatprep.subr.bf16.mxu0 %v1994
    %2744 = vmatpush1.bf16.msra.mxu0 %v1993
    %2745 = vmatprep.subr.bf16.mxu0 %v1990
    %2746 = vmatpush1.bf16.msra.mxu0 %v1989
    %2747 = vmatprep.subr.bf16.mxu0 %v1986
    %2748 = vmatpush1.bf16.msra.mxu0 %v1985
    %2749 = vmatprep.subr.bf16.mxu0 %v1982
    %2750 = vmatpush1.bf16.msra.mxu0 %v1981
    %2751 = vmatprep.subr.bf16.mxu0 0
    %2752 = vmatpush2.bf16.msra.mxu0 0
    %2753 = vmatprep.subr.bf16.mxu0 0
    %2754 = vmatpush2.bf16.msra.mxu0 0
    %2755 = vmatprep.subr.bf16.mxu0 0
    %2756 = vmatpush2.bf16.msra.mxu0 0
    %2757 = vmatprep.subr.bf16.mxu0 0
    %2758 = vmatpush2.bf16.msra.mxu0 0
    %2759 = vmatprep.subr.bf16.mxu0 0
    %2760 = vmatpush2.bf16.msra.mxu0 0
    %2761 = vmatprep.subr.bf16.mxu0 0
    %2762 = vmatpush2.bf16.msra.mxu0 0
    %2763 = vmatprep.subr.bf16.mxu0 0
    %2764 = vmatpush2.bf16.msra.mxu0 0
    %2765 = vmatprep.subr.bf16.mxu0 0
    %2766 = vmatpush2.bf16.msra.mxu0 0
    %2767 = vmatprep.mubr.bf16.mxu0 0
    %2768 = vmatmul.mubr.bf16.gmra.mxu0 %v2734
    %v2769 = vpop.f32.mrf.mxu0
    %v2770 = vadd.f32 0.0, %v2769
    %v2771 = vpop.f32.mrf.mxu0
    %v2772 = vadd.f32 0.0, %v2771
    %v2773 = vpop.f32.mrf.mxu0
    %v2774 = vpop.f32.mrf.mxu0
    %2775 = vdwg.mxu0
    %2776 = vmatprep.subr.bf16.mxu0 %v2012
    %2777 = vmatpush1.bf16.msra.mxu0 %v2011
    %2778 = vmatprep.subr.bf16.mxu0 %v2008
    %2779 = vmatpush1.bf16.msra.mxu0 %v2007
    %2780 = vmatprep.subr.bf16.mxu0 %v2004
    %2781 = vmatpush1.bf16.msra.mxu0 %v2003
    %2782 = vmatprep.subr.bf16.mxu0 %v2000
    %2783 = vmatpush1.bf16.msra.mxu0 %v1999
    %2784 = vmatprep.subr.bf16.mxu0 %v1996
    %2785 = vmatpush1.bf16.msra.mxu0 %v1995
    %2786 = vmatprep.subr.bf16.mxu0 %v1992
    %2787 = vmatpush1.bf16.msra.mxu0 %v1991
    %2788 = vmatprep.subr.bf16.mxu0 %v1988
    %2789 = vmatpush1.bf16.msra.mxu0 %v1987
    %2790 = vmatprep.subr.bf16.mxu0 %v1984
    %2791 = vmatpush1.bf16.msra.mxu0 %v1983
    %2792 = vmatprep.subr.bf16.mxu0 0
    %2793 = vmatpush2.bf16.msra.mxu0 0
    %2794 = vmatprep.subr.bf16.mxu0 0
    %2795 = vmatpush2.bf16.msra.mxu0 0
    %2796 = vmatprep.subr.bf16.mxu0 0
    %2797 = vmatpush2.bf16.msra.mxu0 0
    %2798 = vmatprep.subr.bf16.mxu0 0
    %2799 = vmatpush2.bf16.msra.mxu0 0
    %2800 = vmatprep.subr.bf16.mxu0 0
    %2801 = vmatpush2.bf16.msra.mxu0 0
    %2802 = vmatprep.subr.bf16.mxu0 0
    %2803 = vmatpush2.bf16.msra.mxu0 0
    %2804 = vmatprep.subr.bf16.mxu0 0
    %2805 = vmatpush2.bf16.msra.mxu0 0
    %2806 = vmatprep.subr.bf16.mxu0 0
    %2807 = vmatpush2.bf16.msra.mxu0 0
    %2808 = vmatprep.mubr.bf16.mxu0 0
    %2809 = vmatmul.mubr.bf16.gmra.mxu0 %v2734
    %v2810 = vpop.f32.mrf.mxu0
    %v2811 = vadd.f32 0.0, %v2810
    %v2812 = vpop.f32.mrf.mxu0
    %v2813 = vadd.f32 0.0, %v2812
    %v2814 = vpop.f32.mrf.mxu0
    %v2815 = vpop.f32.mrf.mxu0
    %2816 = vdwg.mxu0
    %v2817 = vadd.f32 %v2730, %v2770
    %v2818 = vadd.f32 %v2731, %v2772
    %v2819 = vadd.f32 %v2732, %v2811
    %v2820 = vadd.f32 %v2733, %v2813
    %v2821 = vxor.u32 %v2817, 2147483648
    %v2822 = vmul.f32 %v2821, 1.442695
    %v2823 = vpow.pop %v2822
    %v2824 = vadd.f32 %v2823, 1.0
    %v2825 = vrcp.pop %v2824
    %v2826 = vmul.f32 1.0, %v2825
    %v2827 = vxor.u32 %v2818, 2147483648
    %v2828 = vmul.f32 %v2827, 1.442695
    %v2829 = vpow.pop %v2828
    %v2830 = vadd.f32 %v2829, 1.0
    %v2831 = vrcp.pop %v2830
    %v2832 = vmul.f32 1.0, %v2831
    %v2833 = vtanh.pop %v2819
    %v2834 = vxor.u32 %v2820, 2147483648
    %v2835 = vmul.f32 %v2834, 1.442695
    %v2836 = vpow.pop %v2835
    %v2837 = vadd.f32 %v2836, 1.0
    %v2838 = vrcp.pop %v2837
    %v2839 = vmul.f32 1.0, %v2838
    %v2840 = vmul.f32 %v2832, %v2727
    %v2841 = vmul.f32 %v2826, %v2833
    %v2842 = vadd.f32 %v2840, %v2841
    %v2843 = vtanh.pop %v2842
    %v2844 = vmul.f32 %v2839, %v2843
    %v2845 = vld [vmem:[#allocation2 + $0xe0] sm:$0xff]
    %v2846 = vld [vmem:[#allocation2 + $0xe8] sm:$0xff]
    %v2847 = vld [vmem:[#allocation2 + $0xf0] sm:$0xff]
    %v2848 = vld [vmem:[#allocation2 + $0xf8] sm:$0xff]
    %v2849 = vpack.c.bf16 %v2844, %v2844
    %2850 = vmatprep.subr.bf16.mxu0 %v2010
    %2851 = vmatpush1.bf16.msra.mxu0 %v2009
    %2852 = vmatprep.subr.bf16.mxu0 %v2006
    %2853 = vmatpush1.bf16.msra.mxu0 %v2005
    %2854 = vmatprep.subr.bf16.mxu0 %v2002
    %2855 = vmatpush1.bf16.msra.mxu0 %v2001
    %2856 = vmatprep.subr.bf16.mxu0 %v1998
    %2857 = vmatpush1.bf16.msra.mxu0 %v1997
    %2858 = vmatprep.subr.bf16.mxu0 %v1994
    %2859 = vmatpush1.bf16.msra.mxu0 %v1993
    %2860 = vmatprep.subr.bf16.mxu0 %v1990
    %2861 = vmatpush1.bf16.msra.mxu0 %v1989
    %2862 = vmatprep.subr.bf16.mxu0 %v1986
    %2863 = vmatpush1.bf16.msra.mxu0 %v1985
    %2864 = vmatprep.subr.bf16.mxu0 %v1982
    %2865 = vmatpush1.bf16.msra.mxu0 %v1981
    %2866 = vmatprep.subr.bf16.mxu0 0
    %2867 = vmatpush2.bf16.msra.mxu0 0
    %2868 = vmatprep.subr.bf16.mxu0 0
    %2869 = vmatpush2.bf16.msra.mxu0 0
    %2870 = vmatprep.subr.bf16.mxu0 0
    %2871 = vmatpush2.bf16.msra.mxu0 0
    %2872 = vmatprep.subr.bf16.mxu0 0
    %2873 = vmatpush2.bf16.msra.mxu0 0
    %2874 = vmatprep.subr.bf16.mxu0 0
    %2875 = vmatpush2.bf16.msra.mxu0 0
    %2876 = vmatprep.subr.bf16.mxu0 0
    %2877 = vmatpush2.bf16.msra.mxu0 0
    %2878 = vmatprep.subr.bf16.mxu0 0
    %2879 = vmatpush2.bf16.msra.mxu0 0
    %2880 = vmatprep.subr.bf16.mxu0 0
    %2881 = vmatpush2.bf16.msra.mxu0 0
    %2882 = vmatprep.mubr.bf16.mxu0 0
    %2883 = vmatmul.mubr.bf16.gmra.mxu0 %v2849
    %v2884 = vpop.f32.mrf.mxu0
    %v2885 = vadd.f32 0.0, %v2884
    %v2886 = vpop.f32.mrf.mxu0
    %v2887 = vadd.f32 0.0, %v2886
    %v2888 = vpop.f32.mrf.mxu0
    %v2889 = vpop.f32.mrf.mxu0
    %2890 = vdwg.mxu0
    %2891 = vmatprep.subr.bf16.mxu0 %v2012
    %2892 = vmatpush1.bf16.msra.mxu0 %v2011
    %2893 = vmatprep.subr.bf16.mxu0 %v2008
    %2894 = vmatpush1.bf16.msra.mxu0 %v2007
    %2895 = vmatprep.subr.bf16.mxu0 %v2004
    %2896 = vmatpush1.bf16.msra.mxu0 %v2003
    %2897 = vmatprep.subr.bf16.mxu0 %v2000
    %2898 = vmatpush1.bf16.msra.mxu0 %v1999
    %2899 = vmatprep.subr.bf16.mxu0 %v1996
    %2900 = vmatpush1.bf16.msra.mxu0 %v1995
    %2901 = vmatprep.subr.bf16.mxu0 %v1992
    %2902 = vmatpush1.bf16.msra.mxu0 %v1991
    %2903 = vmatprep.subr.bf16.mxu0 %v1988
    %2904 = vmatpush1.bf16.msra.mxu0 %v1987
    %2905 = vmatprep.subr.bf16.mxu0 %v1984
    %2906 = vmatpush1.bf16.msra.mxu0 %v1983
    %2907 = vmatprep.subr.bf16.mxu0 0
    %2908 = vmatpush2.bf16.msra.mxu0 0
    %2909 = vmatprep.subr.bf16.mxu0 0
    %2910 = vmatpush2.bf16.msra.mxu0 0
    %2911 = vmatprep.subr.bf16.mxu0 0
    %2912 = vmatpush2.bf16.msra.mxu0 0
    %2913 = vmatprep.subr.bf16.mxu0 0
    %2914 = vmatpush2.bf16.msra.mxu0 0
    %2915 = vmatprep.subr.bf16.mxu0 0
    %2916 = vmatpush2.bf16.msra.mxu0 0
    %2917 = vmatprep.subr.bf16.mxu0 0
    %2918 = vmatpush2.bf16.msra.mxu0 0
    %2919 = vmatprep.subr.bf16.mxu0 0
    %2920 = vmatpush2.bf16.msra.mxu0 0
    %2921 = vmatprep.subr.bf16.mxu0 0
    %2922 = vmatpush2.bf16.msra.mxu0 0
    %2923 = vmatprep.mubr.bf16.mxu0 0
    %2924 = vmatmul.mubr.bf16.gmra.mxu0 %v2849
    %v2925 = vpop.f32.mrf.mxu0
    %v2926 = vadd.f32 0.0, %v2925
    %v2927 = vpop.f32.mrf.mxu0
    %v2928 = vadd.f32 0.0, %v2927
    %v2929 = vpop.f32.mrf.mxu0
    %v2930 = vpop.f32.mrf.mxu0
    %2931 = vdwg.mxu0
    %v2932 = vadd.f32 %v2845, %v2885
    %v2933 = vadd.f32 %v2846, %v2887
    %v2934 = vadd.f32 %v2847, %v2926
    %v2935 = vadd.f32 %v2848, %v2928
    %v2936 = vxor.u32 %v2932, 2147483648
    %v2937 = vmul.f32 %v2936, 1.442695
    %v2938 = vpow.pop %v2937
    %v2939 = vadd.f32 %v2938, 1.0
    %v2940 = vrcp.pop %v2939
    %v2941 = vmul.f32 1.0, %v2940
    %v2942 = vxor.u32 %v2933, 2147483648
    %v2943 = vmul.f32 %v2942, 1.442695
    %v2944 = vpow.pop %v2943
    %v2945 = vadd.f32 %v2944, 1.0
    %v2946 = vrcp.pop %v2945
    %v2947 = vmul.f32 1.0, %v2946
    %v2948 = vtanh.pop %v2934
    %v2949 = vxor.u32 %v2935, 2147483648
    %v2950 = vmul.f32 %v2949, 1.442695
    %v2951 = vpow.pop %v2950
    %v2952 = vadd.f32 %v2951, 1.0
    %v2953 = vrcp.pop %v2952
    %v2954 = vmul.f32 1.0, %v2953
    %v2955 = vmul.f32 %v2947, %v2842
    %v2956 = vmul.f32 %v2941, %v2948
    %v2957 = vadd.f32 %v2955, %v2956
    %v2958 = vtanh.pop %v2957
    %v2959 = vmul.f32 %v2954, %v2958
    %v2960 = vld [vmem:[%s7] sm:$0xff]
    %v2961 = vld [vmem:[%s7 + $0x8] sm:$0xff]
    %v2962 = vld [vmem:[%s7 + $0x10] sm:$0xff]
    %v2963 = vld [vmem:[%s7 + $0x18] sm:$0xff]
    %v2964 = vld [vmem:[%s7 + $0x20] sm:$0xff]
    %v2965 = vld [vmem:[%s7 + $0x28] sm:$0xff]
    %v2966 = vld [vmem:[%s7 + $0x30] sm:$0xff]
    %v2967 = vld [vmem:[%s7 + $0x38] sm:$0xff]
    %v2968 = vld [vmem:[%s7 + $0x40] sm:$0xff]
    %v2969 = vld [vmem:[%s7 + $0x48] sm:$0xff]
    %v2970 = vld [vmem:[%s7 + $0x50] sm:$0xff]
    %v2971 = vld [vmem:[%s7 + $0x58] sm:$0xff]
    %v2972 = vld [vmem:[%s7 + $0x60] sm:$0xff]
    %v2973 = vld [vmem:[%s7 + $0x68] sm:$0xff]
    %v2974 = vld [vmem:[%s7 + $0x70] sm:$0xff]
    %v2975 = vld [vmem:[%s7 + $0x78] sm:$0xff]
    %v2976 = vld [vmem:[#allocation4] sm:$0x1]
    %v2978 = vlaneseq
    %v2979 = vshrl.u32 %v2978, 7
    %v2980 = vsub.s32 0, %v2979
    %v2981 = vrot.slane %v2976, %v2980
    %2983 = vmatprep.subr.mxu0 0.0
    %2984 = vmatpush1.msra.mxu0 %v2975
    %2985 = vmatprep.subr.mxu0 0.0
    %2986 = vmatpush1.msra.mxu0 %v2974
    %2987 = vmatprep.subr.mxu0 0.0
    %2988 = vmatpush1.msra.mxu0 %v2973
    %2989 = vmatprep.subr.mxu0 0.0
    %2990 = vmatpush1.msra.mxu0 %v2972
    %2991 = vmatprep.subr.mxu0 0.0
    %2992 = vmatpush1.msra.mxu0 %v2971
    %2993 = vmatprep.subr.mxu0 0.0
    %2994 = vmatpush1.msra.mxu0 %v2970
    %2995 = vmatprep.subr.mxu0 0.0
    %2996 = vmatpush1.msra.mxu0 %v2969
    %2997 = vmatprep.subr.mxu0 0.0
    %2998 = vmatpush1.msra.mxu0 %v2968
    %2999 = vmatprep.subr.mxu0 0.0
    %3000 = vmatpush1.msra.mxu0 %v2967
    %3001 = vmatprep.subr.mxu0 0.0
    %3002 = vmatpush1.msra.mxu0 %v2966
    %3003 = vmatprep.subr.mxu0 0.0
    %3004 = vmatpush1.msra.mxu0 %v2965
    %3005 = vmatprep.subr.mxu0 0.0
    %3006 = vmatpush1.msra.mxu0 %v2964
    %3007 = vmatprep.subr.mxu0 0.0
    %3008 = vmatpush1.msra.mxu0 %v2963
    %3009 = vmatprep.subr.mxu0 0.0
    %3010 = vmatpush1.msra.mxu0 %v2962
    %3011 = vmatprep.subr.mxu0 0.0
    %3012 = vmatpush1.msra.mxu0 %v2961
    %3013 = vmatprep.subr.mxu0 0.0
    %3014 = vmatpush1.msra.mxu0 %v2960
    %3015 = vmatprep.subr.mxu0 0.0
    %3016 = vmatpush2.msra.mxu0 0.0
    %3017 = vmatprep.subr.mxu0 0.0
    %3018 = vmatpush2.msra.mxu0 0.0
    %3019 = vmatprep.subr.mxu0 0.0
    %3020 = vmatpush2.msra.mxu0 0.0
    %3021 = vmatprep.subr.mxu0 0.0
    %3022 = vmatpush2.msra.mxu0 0.0
    %3023 = vmatprep.subr.mxu0 0.0
    %3024 = vmatpush2.msra.mxu0 0.0
    %3025 = vmatprep.subr.mxu0 0.0
    %3026 = vmatpush2.msra.mxu0 0.0
    %3027 = vmatprep.subr.mxu0 0.0
    %3028 = vmatpush2.msra.mxu0 0.0
    %3029 = vmatprep.subr.mxu0 0.0
    %3030 = vmatpush2.msra.mxu0 0.0
    %3031 = vmatprep.subr.mxu0 0.0
    %3032 = vmatpush2.msra.mxu0 0.0
    %3033 = vmatprep.subr.mxu0 0.0
    %3034 = vmatpush2.msra.mxu0 0.0
    %3035 = vmatprep.subr.mxu0 0.0
    %3036 = vmatpush2.msra.mxu0 0.0
    %3037 = vmatprep.subr.mxu0 0.0
    %3038 = vmatpush2.msra.mxu0 0.0
    %3039 = vmatprep.subr.mxu0 0.0
    %3040 = vmatpush2.msra.mxu0 0.0
    %3041 = vmatprep.subr.mxu0 0.0
    %3042 = vmatpush2.msra.mxu0 0.0
    %3043 = vmatprep.subr.mxu0 0.0
    %3044 = vmatpush2.msra.mxu0 0.0
    %3045 = vmatprep.subr.mxu0 0.0
    %3046 = vmatpush2.msra.mxu0 0.0
    %3047 = vmatprep.mubr.f32.mxu0 0.0
    %3048 = vmatmul.mubr.f32.gmra.mxu0 %v2959
    %v3049 = vpop.f32.mrf.mxu0
    %v3050 = vadd.f32 %v2981, %v3049
    %v3051 = vpop.f32.mrf.mxu0
    %3052 = vdwg.mxu0
    %vm3053 = vcmask 7168
    %3054 = vst.msk [vmem:[%s9] sm:$0xff] %vm3053, %v3050
    // Predicated region
    $region50: #{lstm_forward.1} parent=1 // pred_check
      _
    $region51: #{lstm_forward.1} parent=1 // pred_check_branch
      %3056 = sbr.rel (0) target = $region53
    $region52: #{lstm_forward.1} parent=1 // pred_region
      _
    $region53: #{lstm_forward.1} parent=1 // pred_fallthru
      _
    // Predicated region
    $region54: #{lstm_forward.1} parent=1 // pred_check
      _
    $region55: #{lstm_forward.1} parent=1 // pred_check_branch
      %3058 = sbr.rel (0) target = $region57
    $region56: #{lstm_forward.1} parent=1 // pred_region
      _
    $region57: #{lstm_forward.1} parent=1 // pred_fallthru
      _
    %3059 = vsyncpa [#allocation6], 1
    %3060 = vsyncpa [#allocation8], 1

</llo_original>
